<compile_context>
chip_gen: v7x
topology: tpu7x:2x2x1
jax: 0.10.0
libtpu: 0.0.40
codegen_flags: <defaults>
</compile_context>

<pallas_src>
import jax
import jax.numpy as jnp
from jax import lax
from jax.experimental import pallas as pl
from jax.experimental.pallas import tpu as pltpu

# ----- hyperparameters (mirror args used by DR_CNN.__init__) -----
VOCAB = 50
EMBED = 100            # word_rep.feature_size (label_conv hard-codes in_channels=100)
SEQ = 16
BATCH = 2
Y_LABELS = 8           # Y
NUM_FILTER_MAPS = 32   # args.num_filter_maps
FILTER_SIZE = 3        # args.filter_size
LABEL_KERNEL = 10      # label_conv kernel_size
DESC_LEN = 12
LABELS_PER_INST = 2    # active labels / descriptions per instance (fixed; see TODO)
LMBDA = 0.5
FOCAL_ALPHA = 1.0
FOCAL_GAMMA = 2

# ----- derived layout constants -----
E_PAD = 128                                        # embed dim padded 100 -> 128 (zero cols)
DOC_PAD = FILTER_SIZE // 2                         # 1
SP = SEQ + 2 * DOC_PAD                             # 18 padded doc time steps / batch
LAB_PAD = LABEL_KERNEL // 2                        # 5
DP = DESC_LEN + 2 * LAB_PAD                        # 22 padded desc time steps / desc
L_OUT = DP - LABEL_KERNEL + 1                      # 13 conv output length per description
N_DESC = BATCH * LABELS_PER_INST                   # 4 descriptions total
R_COMP = (((N_DESC - 1) * DP + L_OUT + 7) // 8) * 8      # 80 conv rows actually computed
D_ROWS = ((R_COMP + LABEL_KERNEL - 1 + 7) // 8) * 8      # 96 padded desc embedding rows

# packed "smalls" buffer row offsets (F = 32 lanes)
OFF_FC1 = 0                                        # rows  0..31 : label_fc1.weight (F, F)
OFF_U = NUM_FILTER_MAPS                            # rows 32..39 : U.weight          (Y, F)
OFF_FW = NUM_FILTER_MAPS + Y_LABELS                # rows 40..47 : final.weight      (Y, F)
OFF_CB = NUM_FILTER_MAPS + 2 * Y_LABELS            # row  48     : conv.bias
OFF_LB = OFF_CB + 1                                # row  49     : label_conv.bias
OFF_F1B = OFF_CB + 2                               # row  50     : label_fc1.bias
OFF_FB = OFF_CB + 3                                # row  51     : final.bias (first Y lanes)
SMALL_ROWS = ((OFF_FB + 1 + 7) // 8) * 8           # 56


# -------------------- fused Pallas kernel --------------------

def _dr_cnn_kernel(x_ref, d_ref, wd_ref, wl_ref, sm_ref, t_ref, li_ref,
                   y_ref, loss_ref):
    """Whole DR_CNN forward (post embedding-gather) in one invocation.

    x_ref  : (B*SP, E_PAD)        padded doc embeddings, flattened over batch
    d_ref  : (D_ROWS, E_PAD)      padded description embeddings, flattened
    wd_ref : (K*E_PAD, F)         doc conv weights, per-tap blocks of E_PAD rows
    wl_ref : (Kc*E_PAD, F)        label conv weights, per-tap blocks
    sm_ref : (SMALL_ROWS, F)      packed [fc1_w; U; final_w; biases]
    t_ref  : (B, Y)               targets
    li_ref : (N_DESC,) SMEM int32 active label indices (flattened)
    y_ref  : (B, Y)               logits
    loss_ref : (1, 1) SMEM        focal loss + description regularizer
    """
    f32 = jnp.float32
    B, Y = y_ref.shape
    S = SEQ
    F = sm_ref.shape[1]

    conv_b = sm_ref[pl.ds(OFF_CB, 1), :]            # (1, F)
    lab_b = sm_ref[pl.ds(OFF_LB, 1), :]             # (1, F)
    fc1_b = sm_ref[pl.ds(OFF_F1B, 1), :]            # (1, F)
    fin_b = sm_ref[pl.ds(OFF_FB, 1), :]             # (1, F); first Y lanes valid
    uv = sm_ref[pl.ds(OFF_U, 2 * Y), :]             # (2Y, F) = [U; final_w]
    fc1_w = sm_ref[pl.ds(OFF_FC1, F), :]            # (F, F)
    fw = sm_ref[pl.ds(OFF_FW, Y), :]                # (Y, F) final.weight

    # ---- document path: in-kernel im2col (per-tap shifted matmuls) + tanh + attention ----
    y_rows = []
    for b in range(B):                              # B = 2, static unroll
        acc = jnp.dot(x_ref[pl.ds(b * SP, S), :], wd_ref[pl.ds(0, E_PAD), :],
                      preferred_element_type=f32)
        for k in range(1, FILTER_SIZE):
            acc += jnp.dot(x_ref[pl.ds(b * SP + k, S), :],
                           wd_ref[pl.ds(k * E_PAD, E_PAD), :],
                           preferred_element_type=f32)
        xt = jnp.tanh(acc + conv_b)                                  # (S, F)
        # merged attention matmul: one (S,F)@(F,2Y) instead of two
        ac = lax.dot_general(xt, uv, (((1,), (1,)), ((), ())),
                             preferred_element_type=f32)             # (S, 2Y)
        att = ac[:, :Y]                                              # U . x^T
        c = ac[:, Y:2 * Y]                                           # final_w . x^T
        att = att - jnp.max(att, axis=0, keepdims=True)              # softmax over S
        e = jnp.exp(att)
        alpha = e / jnp.sum(e, axis=0, keepdims=True)                # exact reciprocal
        y_rows.append(jnp.sum(alpha * c, axis=0, keepdims=True) + fin_b[:, :Y])
    y = jnp.concatenate(y_rows, axis=0)                              # (B, Y)
    y_ref[...] = y

    # ---- focal loss (stable BCE-with-logits) ----
    t = t_ref[...]
    bce = jnp.maximum(y, 0.0) - y * t + jnp.log1p(jnp.exp(-jnp.abs(y)))
    pt = jnp.exp(-bce)
    fl = FOCAL_ALPHA * (1.0 - pt) ** FOCAL_GAMMA * bce
    loss_focal = jnp.sum(fl) / float(B * Y)

    # ---- embed_descriptions: label conv (full conv over flat rows, per-tap matmuls) ----
    hacc = jnp.dot(d_ref[pl.ds(0, R_COMP), :], wl_ref[pl.ds(0, E_PAD), :],
                   preferred_element_type=f32)
    for k in range(1, LABEL_KERNEL):
        hacc += jnp.dot(d_ref[pl.ds(k, R_COMP), :],
                        wl_ref[pl.ds(k * E_PAD, E_PAD), :],
                        preferred_element_type=f32)
    hl = jnp.tanh(hacc + lab_b)                                      # (R_COMP, F)

    # per-description max-pool via iota mask (rows straddling descriptions are ignored)
    row_idx = lax.broadcasted_iota(jnp.int32, (R_COMP, F), 0)
    y_idx = lax.broadcasted_iota(jnp.int32, (Y, F), 0)
    neg = jnp.float32(-1e30)
    dmax_rows, zi_rows = [], []
    for n in range(N_DESC):                                          # N_DESC = 4, static
        in_n = (row_idx >= n * DP) & (row_idx < n * DP + L_OUT)
        dmax_rows.append(jnp.max(jnp.where(in_n, hl, neg), axis=0, keepdims=True))
        # zi row: one-hot select of final.weight row li_ref[n] (no dynamic indexing)
        sel = (y_idx == li_ref[n]).astype(f32)
        zi_rows.append(jnp.sum(sel * fw, axis=0, keepdims=True))
    dmax = jnp.concatenate(dmax_rows, axis=0)                        # (N, F)
    zi = jnp.concatenate(zi_rows, axis=0)                            # (N, F)
    b_inst = lax.dot_general(dmax, fc1_w, (((1,), (1,)), ((), ())),
                             preferred_element_type=f32) + fc1_b     # (N, F)
    # mean_i [ lmbda * mean_{Kl,F}((zi-bi)^2) * Kl ]  ==  lmbda * sum(sq) / (B*F)
    loss_reg = LMBDA * jnp.sum((zi - b_inst) ** 2) / float(B * F)

    loss_ref[0, 0] = loss_focal + loss_reg


# -------------------- one-time parameter preparation (hoisted constants) --------------------

def prepare_params(p):
    """Precompute all constant weight transforms ONCE (outside the per-step path)."""
    F, E, K = p["conv_w"].shape
    Kc = p["label_conv_w"].shape[2]
    Y = p["u_w"].shape[0]
    embed_pad = jnp.pad(p["embed_w"], ((0, 0), (0, E_PAD - E)))
    desc_embed_pad = jnp.pad(p["desc_embed_w"], ((0, 0), (0, E_PAD - E)))
    # per-tap im2col layout: rows [k*E_PAD : (k+1)*E_PAD] == W[:, :, k].T zero-padded
    w_doc = jnp.pad(jnp.transpose(p["conv_w"], (2, 1, 0)),
                    ((0, 0), (0, E_PAD - E), (0, 0))).reshape(K * E_PAD, F)
    w_lab = jnp.pad(jnp.transpose(p["label_conv_w"], (2, 1, 0)),
                    ((0, 0), (0, E_PAD - E), (0, 0))).reshape(Kc * E_PAD, F)
    smalls = jnp.zeros((SMALL_ROWS, F), jnp.float32)
    smalls = smalls.at[OFF_FC1:OFF_FC1 + F, :].set(p["fc1_w"])
    smalls = smalls.at[OFF_U:OFF_U + Y, :].set(p["u_w"])
    smalls = smalls.at[OFF_FW:OFF_FW + Y, :].set(p["final_w"])
    smalls = smalls.at[OFF_CB, :].set(p["conv_b"])
    smalls = smalls.at[OFF_LB, :].set(p["label_conv_b"])
    smalls = smalls.at[OFF_F1B, :].set(p["fc1_b"])
    smalls = smalls.at[OFF_FB, :Y].set(p["final_b"])
    return dict(embed_pad=embed_pad, desc_embed_pad=desc_embed_pad,
                w_doc=w_doc, w_lab=w_lab, smalls=smalls)


# -------------------- forward pass (thin glue + one fused Pallas call) --------------------

def dr_cnn_forward(prep, tokens, target, desc_tokens, label_inds):
    B, S = tokens.shape
    # WordRep: token-pad with id 0 (padding_idx=0 => zero embedding row), one gather.
    tok_pad = jnp.pad(tokens, ((0, 0), (DOC_PAD, DOC_PAD))).reshape(-1)     # (B*SP,)
    x_flat = jnp.take(prep["embed_pad"], tok_pad, axis=0)                   # (B*SP, E_PAD)

    # Descriptions: token-pad in time, flatten, pad rows to D_ROWS, one gather.
    # TODO(synk): torch.nonzero() gives variable-length label sets; here each instance
    # has a fixed LABELS_PER_INST active labels passed via label_inds.
    B2, Kl, L = desc_tokens.shape
    N = B2 * Kl
    dtok = jnp.pad(desc_tokens.reshape(N, L), ((0, 0), (LAB_PAD, LAB_PAD))).reshape(-1)
    dtok = jnp.pad(dtok, (0, D_ROWS - N * DP))                              # (D_ROWS,)
    d_flat = jnp.take(prep["desc_embed_pad"], dtok, axis=0)                 # (D_ROWS, E_PAD)

    li = label_inds.reshape(-1).astype(jnp.int32)                           # (N_DESC,)

    vmem = pl.BlockSpec(memory_space=pltpu.MemorySpace.VMEM)
    smem = pl.BlockSpec(memory_space=pltpu.MemorySpace.SMEM)
    y, loss = pl.pallas_call(
        _dr_cnn_kernel,
        out_shape=(jax.ShapeDtypeStruct((B, Y_LABELS), jnp.float32),
                   jax.ShapeDtypeStruct((1, 1), jnp.float32)),
        in_specs=[vmem, vmem, vmem, vmem, vmem, vmem, smem],
        out_specs=(vmem, smem),
        cost_estimate=pl.CostEstimate(flops=8_000_000, transcendentals=4_000,
                                      bytes_accessed=300_000),
    )(x_flat, d_flat, prep["w_doc"], prep["w_lab"], prep["smalls"], target, li)
    return y, loss[0, 0]


# -------------------- pure-JAX reference (for correctness check) --------------------

def reference_forward(params, tokens, target, desc_tokens, label_inds):
    x_emb = jnp.take(params["embed_w"], tokens, axis=0)
    pad = FILTER_SIZE // 2
    xc = lax.conv_general_dilated(jnp.transpose(x_emb, (0, 2, 1)), params["conv_w"],
                                  (1,), [(pad, pad)], dimension_numbers=("NCH", "OIH", "NCH"))
    xc = xc + params["conv_b"][None, :, None]
    xt = jnp.tanh(jnp.transpose(xc, (0, 2, 1)))
    att = jnp.einsum("yf,bsf->bys", params["u_w"], xt)
    alpha = jax.nn.softmax(att, axis=2)
    m = jnp.einsum("bys,bsf->byf", alpha, xt)
    y = jnp.sum(params["final_w"][None] * m, axis=2) + params["final_b"][None]
    bce = jnp.maximum(y, 0.0) - y * target + jnp.log1p(jnp.exp(-jnp.abs(y)))
    pt = jnp.exp(-bce)
    loss = jnp.mean(FOCAL_ALPHA * (1.0 - pt) ** FOCAL_GAMMA * bce)

    B, Kl, L = desc_tokens.shape
    d_emb = jnp.take(params["desc_embed_w"], desc_tokens.reshape(B * Kl, L), axis=0)
    lpad = LABEL_KERNEL // 2
    dc = lax.conv_general_dilated(jnp.transpose(d_emb, (0, 2, 1)), params["label_conv_w"],
                                  (1,), [(lpad, lpad)], dimension_numbers=("NCH", "OIH", "NCH"))
    dc = dc + params["label_conv_b"][None, :, None]
    dm = jnp.max(jnp.tanh(dc), axis=2)
    b_inst = dm @ params["fc1_w"].T + params["fc1_b"][None]
    b_inst = b_inst.reshape(B, Kl, -1)
    zi = jnp.take(params["final_w"], label_inds.reshape(-1), axis=0).reshape(B, Kl, -1)
    diffs = LMBDA * jnp.mean((zi - b_inst) ** 2, axis=(1, 2)) * Kl
    return y, loss + jnp.mean(diffs)


# -------------------- deterministic parameter init --------------------

def xavier_uniform(key, shape, fan_in, fan_out):
    a = (6.0 / (fan_in + fan_out)) ** 0.5
    return jax.random.uniform(key, shape, jnp.float32, -a, a)


def init_params(key):
    ks = jax.random.split(key, 10)
    embed_w = 0.1 * jax.random.normal(ks[0], (VOCAB, EMBED), jnp.float32)
    embed_w = embed_w.at[0].set(0.0)                   # padding_idx=0
    conv_w = xavier_uniform(ks[1], (NUM_FILTER_MAPS, EMBED, FILTER_SIZE),
                            EMBED * FILTER_SIZE, NUM_FILTER_MAPS * FILTER_SIZE)
    conv_b = jax.random.uniform(ks[2], (NUM_FILTER_MAPS,), jnp.float32,
                                -(EMBED * FILTER_SIZE) ** -0.5, (EMBED * FILTER_SIZE) ** -0.5)
    u_w = xavier_uniform(ks[3], (Y_LABELS, NUM_FILTER_MAPS), NUM_FILTER_MAPS, Y_LABELS)
    final_w = xavier_uniform(ks[4], (Y_LABELS, NUM_FILTER_MAPS), NUM_FILTER_MAPS, Y_LABELS)
    final_b = jax.random.uniform(ks[5], (Y_LABELS,), jnp.float32,
                                 -NUM_FILTER_MAPS ** -0.5, NUM_FILTER_MAPS ** -0.5)
    label_conv_w = xavier_uniform(ks[6], (NUM_FILTER_MAPS, 100, LABEL_KERNEL),
                                  100 * LABEL_KERNEL, NUM_FILTER_MAPS * LABEL_KERNEL)
    label_conv_b = jax.random.uniform(ks[7], (NUM_FILTER_MAPS,), jnp.float32,
                                      -(100 * LABEL_KERNEL) ** -0.5, (100 * LABEL_KERNEL) ** -0.5)
    fc1_w = xavier_uniform(ks[8], (NUM_FILTER_MAPS, NUM_FILTER_MAPS),
                           NUM_FILTER_MAPS, NUM_FILTER_MAPS)
    fc1_b = jax.random.uniform(ks[9], (NUM_FILTER_MAPS,), jnp.float32,
                               -NUM_FILTER_MAPS ** -0.5, NUM_FILTER_MAPS ** -0.5)
    return dict(embed_w=embed_w, desc_embed_w=embed_w,      # desc_embedding = W.clone()
                conv_w=conv_w, conv_b=conv_b, u_w=u_w,
                final_w=final_w, final_b=final_b,
                label_conv_w=label_conv_w, label_conv_b=label_conv_b,
                fc1_w=fc1_w, fc1_b=fc1_b)


if __name__ == "__main__":
    key = jax.random.PRNGKey(0)
    kp, kx, kd = jax.random.split(key, 3)
    params = init_params(kp)
    prep = prepare_params(params)                          # hoisted: computed exactly once
    jax.block_until_ready(prep)

    tokens = jax.random.randint(kx, (BATCH, SEQ), 1, VOCAB)                    # (B, S)
    label_inds = jnp.array([[1, 5], [2, 7]], dtype=jnp.int32)                  # active labels
    target = jnp.zeros((BATCH, Y_LABELS), jnp.float32)
    target = target.at[jnp.arange(BATCH)[:, None], label_inds].set(1.0)        # (B, Y)
    desc_tokens = jax.random.randint(kd, (BATCH, LABELS_PER_INST, DESC_LEN), 1, VOCAB)

    fwd = jax.jit(dr_cnn_forward)
    y, loss = fwd(prep, tokens, target, desc_tokens, label_inds)
    jax.block_until_ready((y, loss))

    y_ref, loss_ref = reference_forward(params, tokens, target, desc_tokens, label_inds)
    assert jnp.allclose(y, y_ref, atol=2e-3, rtol=2e-3), "logits mismatch"
    assert jnp.allclose(loss, loss_ref, atol=2e-3, rtol=2e-3), "loss mismatch"
    print("KERNEL_OK")
</pallas_src>

<mosaic_0001>
module attributes {stable_mosaic.version = 11 : i64} {
  func.func @_dr_cnn_kernel(%arg0: memref<36x128xf32, #tpu.memory_space<vmem>>, %arg1: memref<96x128xf32, #tpu.memory_space<vmem>>, %arg2: memref<384x32xf32, #tpu.memory_space<vmem>>, %arg3: memref<1280x32xf32, #tpu.memory_space<vmem>>, %arg4: memref<56x32xf32, #tpu.memory_space<vmem>>, %arg5: memref<2x8xf32, #tpu.memory_space<vmem>>, %arg6: memref<4xi32, #tpu.memory_space<smem>>, %arg7: memref<2x8xf32, #tpu.memory_space<vmem>>, %arg8: memref<1x1xf32, #tpu.memory_space<smem>>) attributes {dimension_semantics = [], scalar_prefetch = 0 : i64, scratch_operands = 0 : i64, tpu.core_type = #tpu.core_type<tc>} {
    %c48 = arith.constant 48 : index
    %c0 = arith.constant 0 : index
    %0 = vector.load %arg4[%c48, %c0] : memref<56x32xf32, #tpu.memory_space<vmem>>, vector<1x32xf32>
    %c49 = arith.constant 49 : index
    %c0_0 = arith.constant 0 : index
    %1 = vector.load %arg4[%c49, %c0_0] : memref<56x32xf32, #tpu.memory_space<vmem>>, vector<1x32xf32>
    %c50 = arith.constant 50 : index
    %c0_1 = arith.constant 0 : index
    %2 = vector.load %arg4[%c50, %c0_1] : memref<56x32xf32, #tpu.memory_space<vmem>>, vector<1x32xf32>
    %c51 = arith.constant 51 : index
    %c0_2 = arith.constant 0 : index
    %3 = vector.load %arg4[%c51, %c0_2] : memref<56x32xf32, #tpu.memory_space<vmem>>, vector<1x32xf32>
    %c32 = arith.constant 32 : index
    %c0_3 = arith.constant 0 : index
    %4 = vector.load %arg4[%c32, %c0_3] : memref<56x32xf32, #tpu.memory_space<vmem>>, vector<16x32xf32>
    %c0_4 = arith.constant 0 : index
    %c0_5 = arith.constant 0 : index
    %5 = vector.load %arg4[%c0_4, %c0_5] : memref<56x32xf32, #tpu.memory_space<vmem>>, vector<32x32xf32>
    %c40 = arith.constant 40 : index
    %c0_6 = arith.constant 0 : index
    %6 = vector.load %arg4[%c40, %c0_6] : memref<56x32xf32, #tpu.memory_space<vmem>>, vector<8x32xf32>
    %c0_7 = arith.constant 0 : index
    %c0_8 = arith.constant 0 : index
    %7 = vector.load %arg0[%c0_7, %c0_8] : memref<36x128xf32, #tpu.memory_space<vmem>>, vector<16x128xf32>
    %c0_9 = arith.constant 0 : index
    %c0_10 = arith.constant 0 : index
    %8 = vector.load %arg2[%c0_9, %c0_10] : memref<384x32xf32, #tpu.memory_space<vmem>>, vector<128x32xf32>
    %cst = arith.constant dense<0.000000e+00> : vector<16x32xf32>
    %9 = tpu.matmul %7, %8, %cst {dimension_numbers = #tpu.dot_dimension_numbers<[1], [0], [0], [1], [0, 0, 1, 1], [], []>} : vector<16x128xf32>, vector<128x32xf32>, vector<16x32xf32> -> vector<16x32xf32>
    %c1 = arith.constant 1 : index
    %c0_11 = arith.constant 0 : index
    %10 = vector.load %arg0[%c1, %c0_11] : memref<36x128xf32, #tpu.memory_space<vmem>>, vector<16x128xf32>
    %c128 = arith.constant 128 : index
    %c0_12 = arith.constant 0 : index
    %11 = vector.load %arg2[%c128, %c0_12] : memref<384x32xf32, #tpu.memory_space<vmem>>, vector<128x32xf32>
    %cst_13 = arith.constant dense<0.000000e+00> : vector<16x32xf32>
    %12 = tpu.matmul %10, %11, %cst_13 {dimension_numbers = #tpu.dot_dimension_numbers<[1], [0], [0], [1], [0, 0, 1, 1], [], []>} : vector<16x128xf32>, vector<128x32xf32>, vector<16x32xf32> -> vector<16x32xf32>
    %13 = arith.addf %9, %12 : vector<16x32xf32>
    %c2 = arith.constant 2 : index
    %c0_14 = arith.constant 0 : index
    %14 = vector.load %arg0[%c2, %c0_14] : memref<36x128xf32, #tpu.memory_space<vmem>>, vector<16x128xf32>
    %c256 = arith.constant 256 : index
    %c0_15 = arith.constant 0 : index
    %15 = vector.load %arg2[%c256, %c0_15] : memref<384x32xf32, #tpu.memory_space<vmem>>, vector<128x32xf32>
    %cst_16 = arith.constant dense<0.000000e+00> : vector<16x32xf32>
    %16 = tpu.matmul %14, %15, %cst_16 {dimension_numbers = #tpu.dot_dimension_numbers<[1], [0], [0], [1], [0, 0, 1, 1], [], []>} : vector<16x128xf32>, vector<128x32xf32>, vector<16x32xf32> -> vector<16x32xf32>
    %17 = arith.addf %13, %16 : vector<16x32xf32>
    %18 = vector.broadcast %0 : vector<1x32xf32> to vector<16x32xf32>
    %19 = arith.addf %17, %18 : vector<16x32xf32>
    %20 = math.tanh %19 : vector<16x32xf32>
    %cst_17 = arith.constant dense<0.000000e+00> : vector<16x16xf32>
    %21 = tpu.matmul %20, %4, %cst_17 {dimension_numbers = #tpu.dot_dimension_numbers<[1], [1], [0], [0], [0, 0, 1, 0], [], []>} : vector<16x32xf32>, vector<16x32xf32>, vector<16x16xf32> -> vector<16x16xf32>
    %22 = vector.extract_strided_slice %21 {offsets = [0, 0], sizes = [16, 8], strides = [1, 1]} : vector<16x16xf32> to vector<16x8xf32>
    %23 = vector.extract_strided_slice %21 {offsets = [0, 8], sizes = [16, 8], strides = [1, 1]} : vector<16x16xf32> to vector<16x8xf32>
    %cst_18 = arith.constant dense<0xFF800000> : vector<8xf32>
    %24 = vector.multi_reduction <maximumf>, %22, %cst_18 [0] : vector<16x8xf32> to vector<8xf32>
    %25 = vector.shape_cast %24 : vector<8xf32> to vector<1x8xf32>
    %26 = vector.broadcast %25 : vector<1x8xf32> to vector<16x8xf32>
    %27 = arith.subf %22, %26 : vector<16x8xf32>
    %28 = math.exp %27 : vector<16x8xf32>
    %cst_19 = arith.constant dense<0.000000e+00> : vector<8xf32>
    %29 = vector.multi_reduction <add>, %28, %cst_19 [0] : vector<16x8xf32> to vector<8xf32>
    %30 = vector.shape_cast %29 : vector<8xf32> to vector<1x8xf32>
    %31 = vector.broadcast %30 : vector<1x8xf32> to vector<16x8xf32>
    %32 = arith.divf %28, %31 : vector<16x8xf32>
    %33 = arith.mulf %32, %23 : vector<16x8xf32>
    %cst_20 = arith.constant dense<0.000000e+00> : vector<8xf32>
    %34 = vector.multi_reduction <add>, %33, %cst_20 [0] : vector<16x8xf32> to vector<8xf32>
    %35 = vector.shape_cast %34 : vector<8xf32> to vector<1x8xf32>
    %36 = vector.extract_strided_slice %3 {offsets = [0, 0], sizes = [1, 8], strides = [1, 1]} : vector<1x32xf32> to vector<1x8xf32>
    %37 = arith.addf %35, %36 : vector<1x8xf32>
    %c18 = arith.constant 18 : index
    %c0_21 = arith.constant 0 : index
    %38 = vector.load %arg0[%c18, %c0_21] : memref<36x128xf32, #tpu.memory_space<vmem>>, vector<16x128xf32>
    %c0_22 = arith.constant 0 : index
    %c0_23 = arith.constant 0 : index
    %39 = vector.load %arg2[%c0_22, %c0_23] : memref<384x32xf32, #tpu.memory_space<vmem>>, vector<128x32xf32>
    %cst_24 = arith.constant dense<0.000000e+00> : vector<16x32xf32>
    %40 = tpu.matmul %38, %39, %cst_24 {dimension_numbers = #tpu.dot_dimension_numbers<[1], [0], [0], [1], [0, 0, 1, 1], [], []>} : vector<16x128xf32>, vector<128x32xf32>, vector<16x32xf32> -> vector<16x32xf32>
    %c19 = arith.constant 19 : index
    %c0_25 = arith.constant 0 : index
    %41 = vector.load %arg0[%c19, %c0_25] : memref<36x128xf32, #tpu.memory_space<vmem>>, vector<16x128xf32>
    %c128_26 = arith.constant 128 : index
    %c0_27 = arith.constant 0 : index
    %42 = vector.load %arg2[%c128_26, %c0_27] : memref<384x32xf32, #tpu.memory_space<vmem>>, vector<128x32xf32>
    %cst_28 = arith.constant dense<0.000000e+00> : vector<16x32xf32>
    %43 = tpu.matmul %41, %42, %cst_28 {dimension_numbers = #tpu.dot_dimension_numbers<[1], [0], [0], [1], [0, 0, 1, 1], [], []>} : vector<16x128xf32>, vector<128x32xf32>, vector<16x32xf32> -> vector<16x32xf32>
    %44 = arith.addf %40, %43 : vector<16x32xf32>
    %c20 = arith.constant 20 : index
    %c0_29 = arith.constant 0 : index
    %45 = vector.load %arg0[%c20, %c0_29] : memref<36x128xf32, #tpu.memory_space<vmem>>, vector<16x128xf32>
    %c256_30 = arith.constant 256 : index
    %c0_31 = arith.constant 0 : index
    %46 = vector.load %arg2[%c256_30, %c0_31] : memref<384x32xf32, #tpu.memory_space<vmem>>, vector<128x32xf32>
    %cst_32 = arith.constant dense<0.000000e+00> : vector<16x32xf32>
    %47 = tpu.matmul %45, %46, %cst_32 {dimension_numbers = #tpu.dot_dimension_numbers<[1], [0], [0], [1], [0, 0, 1, 1], [], []>} : vector<16x128xf32>, vector<128x32xf32>, vector<16x32xf32> -> vector<16x32xf32>
    %48 = arith.addf %44, %47 : vector<16x32xf32>
    %49 = vector.broadcast %0 : vector<1x32xf32> to vector<16x32xf32>
    %50 = arith.addf %48, %49 : vector<16x32xf32>
    %51 = math.tanh %50 : vector<16x32xf32>
    %cst_33 = arith.constant dense<0.000000e+00> : vector<16x16xf32>
    %52 = tpu.matmul %51, %4, %cst_33 {dimension_numbers = #tpu.dot_dimension_numbers<[1], [1], [0], [0], [0, 0, 1, 0], [], []>} : vector<16x32xf32>, vector<16x32xf32>, vector<16x16xf32> -> vector<16x16xf32>
    %53 = vector.extract_strided_slice %52 {offsets = [0, 0], sizes = [16, 8], strides = [1, 1]} : vector<16x16xf32> to vector<16x8xf32>
    %54 = vector.extract_strided_slice %52 {offsets = [0, 8], sizes = [16, 8], strides = [1, 1]} : vector<16x16xf32> to vector<16x8xf32>
    %cst_34 = arith.constant dense<0xFF800000> : vector<8xf32>
    %55 = vector.multi_reduction <maximumf>, %53, %cst_34 [0] : vector<16x8xf32> to vector<8xf32>
    %56 = vector.shape_cast %55 : vector<8xf32> to vector<1x8xf32>
    %57 = vector.broadcast %56 : vector<1x8xf32> to vector<16x8xf32>
    %58 = arith.subf %53, %57 : vector<16x8xf32>
    %59 = math.exp %58 : vector<16x8xf32>
    %cst_35 = arith.constant dense<0.000000e+00> : vector<8xf32>
    %60 = vector.multi_reduction <add>, %59, %cst_35 [0] : vector<16x8xf32> to vector<8xf32>
    %61 = vector.shape_cast %60 : vector<8xf32> to vector<1x8xf32>
    %62 = vector.broadcast %61 : vector<1x8xf32> to vector<16x8xf32>
    %63 = arith.divf %59, %62 : vector<16x8xf32>
    %64 = arith.mulf %63, %54 : vector<16x8xf32>
    %cst_36 = arith.constant dense<0.000000e+00> : vector<8xf32>
    %65 = vector.multi_reduction <add>, %64, %cst_36 [0] : vector<16x8xf32> to vector<8xf32>
    %66 = vector.shape_cast %65 : vector<8xf32> to vector<1x8xf32>
    %67 = vector.extract_strided_slice %3 {offsets = [0, 0], sizes = [1, 8], strides = [1, 1]} : vector<1x32xf32> to vector<1x8xf32>
    %68 = arith.addf %66, %67 : vector<1x8xf32>
    %69 = tpu.concatenate %37, %68 in 0 : vector<1x8xf32>, vector<1x8xf32> -> vector<2x8xf32>
    %c0_37 = arith.constant 0 : index
    %c0_38 = arith.constant 0 : index
    %70 = vector.load %arg7[%c0_37, %c0_38] : memref<2x8xf32, #tpu.memory_space<vmem>>, vector<2x8xf32>
    tpu.vector_store %arg7[%c0_37, %c0_38], %69 {strides = array<i32>} : memref<2x8xf32, #tpu.memory_space<vmem>>, vector<2x8xf32>,
    %c0_39 = arith.constant 0 : index
    %c0_40 = arith.constant 0 : index
    %71 = vector.load %arg5[%c0_39, %c0_40] : memref<2x8xf32, #tpu.memory_space<vmem>>, vector<2x8xf32>
    %cst_41 = arith.constant 0.000000e+00 : f32
    %72 = vector.broadcast %cst_41 : f32 to vector<2x8xf32>
    %73 = arith.maximumf %69, %72 : vector<2x8xf32>
    %74 = arith.mulf %69, %71 : vector<2x8xf32>
    %75 = arith.subf %73, %74 : vector<2x8xf32>
    %76 = math.absf %69 : vector<2x8xf32>
    %cst_42 = arith.constant 0.000000e+00 : f32
    %77 = vector.broadcast %cst_42 : f32 to vector<2x8xf32>
    %78 = arith.subf %77, %76 : vector<2x8xf32>
    %79 = math.exp %78 : vector<2x8xf32>
    %80 = math.log1p %79 : vector<2x8xf32>
    %81 = arith.addf %75, %80 : vector<2x8xf32>
    %cst_43 = arith.constant 0.000000e+00 : f32
    %82 = vector.broadcast %cst_43 : f32 to vector<2x8xf32>
    %83 = arith.subf %82, %81 : vector<2x8xf32>
    %84 = math.exp %83 : vector<2x8xf32>
    %cst_44 = arith.constant 1.000000e+00 : f32
    %85 = vector.broadcast %cst_44 : f32 to vector<2x8xf32>
    %86 = arith.subf %85, %84 : vector<2x8xf32>
    %87 = arith.mulf %86, %86 : vector<2x8xf32>
    %cst_45 = arith.constant 1.000000e+00 : f32
    %88 = vector.broadcast %cst_45 : f32 to vector<2x8xf32>
    %89 = arith.mulf %88, %87 : vector<2x8xf32>
    %90 = arith.mulf %89, %81 : vector<2x8xf32>
    %91 = vector.shape_cast %90 : vector<2x8xf32> to vector<1x2x8xf32>
    %cst_46 = arith.constant dense<0.000000e+00> : vector<1xf32>
    %92 = vector.multi_reduction <add>, %91, %cst_46 [1, 2] : vector<1x2x8xf32> to vector<1xf32>
    %93 = vector.shape_cast %92 : vector<1xf32> to vector<1x1x1xf32>
    %94 = vector.extract %93[0, 0, 0] : f32 from vector<1x1x1xf32>
    %cst_47 = arith.constant 1.600000e+01 : f32
    %95 = arith.divf %94, %cst_47 : f32
    %c0_48 = arith.constant 0 : index
    %c0_49 = arith.constant 0 : index
    %96 = vector.load %arg1[%c0_48, %c0_49] : memref<96x128xf32, #tpu.memory_space<vmem>>, vector<80x128xf32>
    %c0_50 = arith.constant 0 : index
    %c0_51 = arith.constant 0 : index
    %97 = vector.load %arg3[%c0_50, %c0_51] : memref<1280x32xf32, #tpu.memory_space<vmem>>, vector<128x32xf32>
    %cst_52 = arith.constant dense<0.000000e+00> : vector<80x32xf32>
    %98 = tpu.matmul %96, %97, %cst_52 {dimension_numbers = #tpu.dot_dimension_numbers<[1], [0], [0], [1], [0, 0, 1, 1], [], []>} : vector<80x128xf32>, vector<128x32xf32>, vector<80x32xf32> -> vector<80x32xf32>
    %c1_53 = arith.constant 1 : index
    %c0_54 = arith.constant 0 : index
    %99 = vector.load %arg1[%c1_53, %c0_54] : memref<96x128xf32, #tpu.memory_space<vmem>>, vector<80x128xf32>
    %c128_55 = arith.constant 128 : index
    %c0_56 = arith.constant 0 : index
    %100 = vector.load %arg3[%c128_55, %c0_56] : memref<1280x32xf32, #tpu.memory_space<vmem>>, vector<128x32xf32>
    %cst_57 = arith.constant dense<0.000000e+00> : vector<80x32xf32>
    %101 = tpu.matmul %99, %100, %cst_57 {dimension_numbers = #tpu.dot_dimension_numbers<[1], [0], [0], [1], [0, 0, 1, 1], [], []>} : vector<80x128xf32>, vector<128x32xf32>, vector<80x32xf32> -> vector<80x32xf32>
    %102 = arith.addf %98, %101 : vector<80x32xf32>
    %c2_58 = arith.constant 2 : index
    %c0_59 = arith.constant 0 : index
    %103 = vector.load %arg1[%c2_58, %c0_59] : memref<96x128xf32, #tpu.memory_space<vmem>>, vector<80x128xf32>
    %c256_60 = arith.constant 256 : index
    %c0_61 = arith.constant 0 : index
    %104 = vector.load %arg3[%c256_60, %c0_61] : memref<1280x32xf32, #tpu.memory_space<vmem>>, vector<128x32xf32>
    %cst_62 = arith.constant dense<0.000000e+00> : vector<80x32xf32>
    %105 = tpu.matmul %103, %104, %cst_62 {dimension_numbers = #tpu.dot_dimension_numbers<[1], [0], [0], [1], [0, 0, 1, 1], [], []>} : vector<80x128xf32>, vector<128x32xf32>, vector<80x32xf32> -> vector<80x32xf32>
    %106 = arith.addf %102, %105 : vector<80x32xf32>
    %c3 = arith.constant 3 : index
    %c0_63 = arith.constant 0 : index
    %107 = vector.load %arg1[%c3, %c0_63] : memref<96x128xf32, #tpu.memory_space<vmem>>, vector<80x128xf32>
    %c384 = arith.constant 384 : index
    %c0_64 = arith.constant 0 : index
    %108 = vector.load %arg3[%c384, %c0_64] : memref<1280x32xf32, #tpu.memory_space<vmem>>, vector<128x32xf32>
    %cst_65 = arith.constant dense<0.000000e+00> : vector<80x32xf32>
    %109 = tpu.matmul %107, %108, %cst_65 {dimension_numbers = #tpu.dot_dimension_numbers<[1], [0], [0], [1], [0, 0, 1, 1], [], []>} : vector<80x128xf32>, vector<128x32xf32>, vector<80x32xf32> -> vector<80x32xf32>
    %110 = arith.addf %106, %109 : vector<80x32xf32>
    %c4 = arith.constant 4 : index
    %c0_66 = arith.constant 0 : index
    %111 = vector.load %arg1[%c4, %c0_66] : memref<96x128xf32, #tpu.memory_space<vmem>>, vector<80x128xf32>
    %c512 = arith.constant 512 : index
    %c0_67 = arith.constant 0 : index
    %112 = vector.load %arg3[%c512, %c0_67] : memref<1280x32xf32, #tpu.memory_space<vmem>>, vector<128x32xf32>
    %cst_68 = arith.constant dense<0.000000e+00> : vector<80x32xf32>
    %113 = tpu.matmul %111, %112, %cst_68 {dimension_numbers = #tpu.dot_dimension_numbers<[1], [0], [0], [1], [0, 0, 1, 1], [], []>} : vector<80x128xf32>, vector<128x32xf32>, vector<80x32xf32> -> vector<80x32xf32>
    %114 = arith.addf %110, %113 : vector<80x32xf32>
    %c5 = arith.constant 5 : index
    %c0_69 = arith.constant 0 : index
    %115 = vector.load %arg1[%c5, %c0_69] : memref<96x128xf32, #tpu.memory_space<vmem>>, vector<80x128xf32>
    %c640 = arith.constant 640 : index
    %c0_70 = arith.constant 0 : index
    %116 = vector.load %arg3[%c640, %c0_70] : memref<1280x32xf32, #tpu.memory_space<vmem>>, vector<128x32xf32>
    %cst_71 = arith.constant dense<0.000000e+00> : vector<80x32xf32>
    %117 = tpu.matmul %115, %116, %cst_71 {dimension_numbers = #tpu.dot_dimension_numbers<[1], [0], [0], [1], [0, 0, 1, 1], [], []>} : vector<80x128xf32>, vector<128x32xf32>, vector<80x32xf32> -> vector<80x32xf32>
    %118 = arith.addf %114, %117 : vector<80x32xf32>
    %c6 = arith.constant 6 : index
    %c0_72 = arith.constant 0 : index
    %119 = vector.load %arg1[%c6, %c0_72] : memref<96x128xf32, #tpu.memory_space<vmem>>, vector<80x128xf32>
    %c768 = arith.constant 768 : index
    %c0_73 = arith.constant 0 : index
    %120 = vector.load %arg3[%c768, %c0_73] : memref<1280x32xf32, #tpu.memory_space<vmem>>, vector<128x32xf32>
    %cst_74 = arith.constant dense<0.000000e+00> : vector<80x32xf32>
    %121 = tpu.matmul %119, %120, %cst_74 {dimension_numbers = #tpu.dot_dimension_numbers<[1], [0], [0], [1], [0, 0, 1, 1], [], []>} : vector<80x128xf32>, vector<128x32xf32>, vector<80x32xf32> -> vector<80x32xf32>
    %122 = arith.addf %118, %121 : vector<80x32xf32>
    %c7 = arith.constant 7 : index
    %c0_75 = arith.constant 0 : index
    %123 = vector.load %arg1[%c7, %c0_75] : memref<96x128xf32, #tpu.memory_space<vmem>>, vector<80x128xf32>
    %c896 = arith.constant 896 : index
    %c0_76 = arith.constant 0 : index
    %124 = vector.load %arg3[%c896, %c0_76] : memref<1280x32xf32, #tpu.memory_space<vmem>>, vector<128x32xf32>
    %cst_77 = arith.constant dense<0.000000e+00> : vector<80x32xf32>
    %125 = tpu.matmul %123, %124, %cst_77 {dimension_numbers = #tpu.dot_dimension_numbers<[1], [0], [0], [1], [0, 0, 1, 1], [], []>} : vector<80x128xf32>, vector<128x32xf32>, vector<80x32xf32> -> vector<80x32xf32>
    %126 = arith.addf %122, %125 : vector<80x32xf32>
    %c8 = arith.constant 8 : index
    %c0_78 = arith.constant 0 : index
    %127 = vector.load %arg1[%c8, %c0_78] : memref<96x128xf32, #tpu.memory_space<vmem>>, vector<80x128xf32>
    %c1024 = arith.constant 1024 : index
    %c0_79 = arith.constant 0 : index
    %128 = vector.load %arg3[%c1024, %c0_79] : memref<1280x32xf32, #tpu.memory_space<vmem>>, vector<128x32xf32>
    %cst_80 = arith.constant dense<0.000000e+00> : vector<80x32xf32>
    %129 = tpu.matmul %127, %128, %cst_80 {dimension_numbers = #tpu.dot_dimension_numbers<[1], [0], [0], [1], [0, 0, 1, 1], [], []>} : vector<80x128xf32>, vector<128x32xf32>, vector<80x32xf32> -> vector<80x32xf32>
    %130 = arith.addf %126, %129 : vector<80x32xf32>
    %c9 = arith.constant 9 : index
    %c0_81 = arith.constant 0 : index
    %131 = vector.load %arg1[%c9, %c0_81] : memref<96x128xf32, #tpu.memory_space<vmem>>, vector<80x128xf32>
    %c1152 = arith.constant 1152 : index
    %c0_82 = arith.constant 0 : index
    %132 = vector.load %arg3[%c1152, %c0_82] : memref<1280x32xf32, #tpu.memory_space<vmem>>, vector<128x32xf32>
    %cst_83 = arith.constant dense<0.000000e+00> : vector<80x32xf32>
    %133 = tpu.matmul %131, %132, %cst_83 {dimension_numbers = #tpu.dot_dimension_numbers<[1], [0], [0], [1], [0, 0, 1, 1], [], []>} : vector<80x128xf32>, vector<128x32xf32>, vector<80x32xf32> -> vector<80x32xf32>
    %134 = arith.addf %130, %133 : vector<80x32xf32>
    %135 = vector.broadcast %1 : vector<1x32xf32> to vector<80x32xf32>
    %136 = arith.addf %134, %135 : vector<80x32xf32>
    %137 = math.tanh %136 : vector<80x32xf32>
    %138 = tpu.iota {dimensions = array<i32: 0>} : vector<80x32xi32>
    %139 = tpu.iota {dimensions = array<i32: 0>} : vector<8x32xi32>
    %c0_i32 = arith.constant 0 : i32
    %140 = vector.broadcast %c0_i32 : i32 to vector<80x32xi32>
    %141 = arith.cmpi sge, %138, %140 : vector<80x32xi32>
    %c13_i32 = arith.constant 13 : i32
    %142 = vector.broadcast %c13_i32 : i32 to vector<80x32xi32>
    %143 = arith.cmpi slt, %138, %142 : vector<80x32xi32>
    %144 = arith.andi %141, %143 : vector<80x32xi1>
    %cst_84 = arith.constant -1.000000e+30 : f32
    %145 = vector.broadcast %cst_84 : f32 to vector<80x32xf32>
    %146 = arith.select %144, %137, %145 : vector<80x32xi1>, vector<80x32xf32>
    %cst_85 = arith.constant dense<0xFF800000> : vector<32xf32>
    %147 = vector.multi_reduction <maximumf>, %146, %cst_85 [0] : vector<80x32xf32> to vector<32xf32>
    %148 = vector.shape_cast %147 : vector<32xf32> to vector<1x32xf32>
    %c0_86 = arith.constant 0 : index
    %149 = memref.load %arg6[%c0_86] : memref<4xi32, #tpu.memory_space<smem>>
    %150 = vector.broadcast %149 : i32 to vector<8x32xi32>
    %151 = arith.cmpi eq, %139, %150 : vector<8x32xi32>
    %152 = arith.extui %151 : vector<8x32xi1> to vector<8x32xi32>
    %153 = arith.sitofp %152 : vector<8x32xi32> to vector<8x32xf32>
    %154 = arith.mulf %153, %6 : vector<8x32xf32>
    %cst_87 = arith.constant dense<0.000000e+00> : vector<32xf32>
    %155 = vector.multi_reduction <add>, %154, %cst_87 [0] : vector<8x32xf32> to vector<32xf32>
    %156 = vector.shape_cast %155 : vector<32xf32> to vector<1x32xf32>
    %c22_i32 = arith.constant 22 : i32
    %157 = vector.broadcast %c22_i32 : i32 to vector<80x32xi32>
    %158 = arith.cmpi sge, %138, %157 : vector<80x32xi32>
    %c35_i32 = arith.constant 35 : i32
    %159 = vector.broadcast %c35_i32 : i32 to vector<80x32xi32>
    %160 = arith.cmpi slt, %138, %159 : vector<80x32xi32>
    %161 = arith.andi %158, %160 : vector<80x32xi1>
    %cst_88 = arith.constant -1.000000e+30 : f32
    %162 = vector.broadcast %cst_88 : f32 to vector<80x32xf32>
    %163 = arith.select %161, %137, %162 : vector<80x32xi1>, vector<80x32xf32>
    %cst_89 = arith.constant dense<0xFF800000> : vector<32xf32>
    %164 = vector.multi_reduction <maximumf>, %163, %cst_89 [0] : vector<80x32xf32> to vector<32xf32>
    %165 = vector.shape_cast %164 : vector<32xf32> to vector<1x32xf32>
    %c1_90 = arith.constant 1 : index
    %166 = memref.load %arg6[%c1_90] : memref<4xi32, #tpu.memory_space<smem>>
    %167 = vector.broadcast %166 : i32 to vector<8x32xi32>
    %168 = arith.cmpi eq, %139, %167 : vector<8x32xi32>
    %169 = arith.extui %168 : vector<8x32xi1> to vector<8x32xi32>
    %170 = arith.sitofp %169 : vector<8x32xi32> to vector<8x32xf32>
    %171 = arith.mulf %170, %6 : vector<8x32xf32>
    %cst_91 = arith.constant dense<0.000000e+00> : vector<32xf32>
    %172 = vector.multi_reduction <add>, %171, %cst_91 [0] : vector<8x32xf32> to vector<32xf32>
    %173 = vector.shape_cast %172 : vector<32xf32> to vector<1x32xf32>
    %c44_i32 = arith.constant 44 : i32
    %174 = vector.broadcast %c44_i32 : i32 to vector<80x32xi32>
    %175 = arith.cmpi sge, %138, %174 : vector<80x32xi32>
    %c57_i32 = arith.constant 57 : i32
    %176 = vector.broadcast %c57_i32 : i32 to vector<80x32xi32>
    %177 = arith.cmpi slt, %138, %176 : vector<80x32xi32>
    %178 = arith.andi %175, %177 : vector<80x32xi1>
    %cst_92 = arith.constant -1.000000e+30 : f32
    %179 = vector.broadcast %cst_92 : f32 to vector<80x32xf32>
    %180 = arith.select %178, %137, %179 : vector<80x32xi1>, vector<80x32xf32>
    %cst_93 = arith.constant dense<0xFF800000> : vector<32xf32>
    %181 = vector.multi_reduction <maximumf>, %180, %cst_93 [0] : vector<80x32xf32> to vector<32xf32>
    %182 = vector.shape_cast %181 : vector<32xf32> to vector<1x32xf32>
    %c2_94 = arith.constant 2 : index
    %183 = memref.load %arg6[%c2_94] : memref<4xi32, #tpu.memory_space<smem>>
    %184 = vector.broadcast %183 : i32 to vector<8x32xi32>
    %185 = arith.cmpi eq, %139, %184 : vector<8x32xi32>
    %186 = arith.extui %185 : vector<8x32xi1> to vector<8x32xi32>
    %187 = arith.sitofp %186 : vector<8x32xi32> to vector<8x32xf32>
    %188 = arith.mulf %187, %6 : vector<8x32xf32>
    %cst_95 = arith.constant dense<0.000000e+00> : vector<32xf32>
    %189 = vector.multi_reduction <add>, %188, %cst_95 [0] : vector<8x32xf32> to vector<32xf32>
    %190 = vector.shape_cast %189 : vector<32xf32> to vector<1x32xf32>
    %c66_i32 = arith.constant 66 : i32
    %191 = vector.broadcast %c66_i32 : i32 to vector<80x32xi32>
    %192 = arith.cmpi sge, %138, %191 : vector<80x32xi32>
    %c79_i32 = arith.constant 79 : i32
    %193 = vector.broadcast %c79_i32 : i32 to vector<80x32xi32>
    %194 = arith.cmpi slt, %138, %193 : vector<80x32xi32>
    %195 = arith.andi %192, %194 : vector<80x32xi1>
    %cst_96 = arith.constant -1.000000e+30 : f32
    %196 = vector.broadcast %cst_96 : f32 to vector<80x32xf32>
    %197 = arith.select %195, %137, %196 : vector<80x32xi1>, vector<80x32xf32>
    %cst_97 = arith.constant dense<0xFF800000> : vector<32xf32>
    %198 = vector.multi_reduction <maximumf>, %197, %cst_97 [0] : vector<80x32xf32> to vector<32xf32>
    %199 = vector.shape_cast %198 : vector<32xf32> to vector<1x32xf32>
    %c3_98 = arith.constant 3 : index
    %200 = memref.load %arg6[%c3_98] : memref<4xi32, #tpu.memory_space<smem>>
    %201 = vector.broadcast %200 : i32 to vector<8x32xi32>
    %202 = arith.cmpi eq, %139, %201 : vector<8x32xi32>
    %203 = arith.extui %202 : vector<8x32xi1> to vector<8x32xi32>
    %204 = arith.sitofp %203 : vector<8x32xi32> to vector<8x32xf32>
    %205 = arith.mulf %204, %6 : vector<8x32xf32>
    %cst_99 = arith.constant dense<0.000000e+00> : vector<32xf32>
    %206 = vector.multi_reduction <add>, %205, %cst_99 [0] : vector<8x32xf32> to vector<32xf32>
    %207 = vector.shape_cast %206 : vector<32xf32> to vector<1x32xf32>
    %208 = tpu.concatenate %148, %165, %182, %199 in 0 : vector<1x32xf32>, vector<1x32xf32>, vector<1x32xf32>, vector<1x32xf32> -> vector<4x32xf32>
    %209 = tpu.concatenate %156, %173, %190, %207 in 0 : vector<1x32xf32>, vector<1x32xf32>, vector<1x32xf32>, vector<1x32xf32> -> vector<4x32xf32>
    %cst_100 = arith.constant dense<0.000000e+00> : vector<4x32xf32>
    %210 = tpu.matmul %208, %5, %cst_100 {dimension_numbers = #tpu.dot_dimension_numbers<[1], [1], [0], [0], [0, 0, 1, 0], [], []>} : vector<4x32xf32>, vector<32x32xf32>, vector<4x32xf32> -> vector<4x32xf32>
    %211 = vector.broadcast %2 : vector<1x32xf32> to vector<4x32xf32>
    %212 = arith.addf %210, %211 : vector<4x32xf32>
    %213 = arith.subf %209, %212 : vector<4x32xf32>
    %214 = arith.mulf %213, %213 : vector<4x32xf32>
    %215 = vector.shape_cast %214 : vector<4x32xf32> to vector<1x4x32xf32>
    %cst_101 = arith.constant dense<0.000000e+00> : vector<1xf32>
    %216 = vector.multi_reduction <add>, %215, %cst_101 [1, 2] : vector<1x4x32xf32> to vector<1xf32>
    %217 = vector.shape_cast %216 : vector<1xf32> to vector<1x1x1xf32>
    %218 = vector.extract %217[0, 0, 0] : f32 from vector<1x1x1xf32>
    %cst_102 = arith.constant 5.000000e-01 : f32
    %219 = arith.mulf %cst_102, %218 : f32
    %cst_103 = arith.constant 6.400000e+01 : f32
    %220 = arith.divf %219, %cst_103 : f32
    %221 = arith.addf %95, %220 : f32
    %c0_104 = arith.constant 0 : index
    %c0_105 = arith.constant 0 : index
    %222 = memref.load %arg8[%c0_104, %c0_105] : memref<1x1xf32, #tpu.memory_space<smem>>
    memref.store %221, %arg8[%c0_104, %c0_105] : memref<1x1xf32, #tpu.memory_space<smem>>
    return
  }
}

</mosaic_0001>

<llo_original>
// kernel: dr_cnn_forward.1
$region0: #{dr_cnn_forward.1}
  #allocation0 [shape = 'u32[]', space=smem, size = 0x4, offset = 0x4, fixed_abs, tag = 'smem constant byte address 0x4 - core index']
  #allocation1 [shape = 'u32[144,128]{1,0:T(1,128)}', space=vmem, size = 0x12000, scoped, tag = 'internal scratch']
  %s0 = inlined_call_operand.vmem [shape: f32[36,128], index: 0, kind: input, shape index: {}]
  %s1 = inlined_call_operand.vmem [shape: f32[96,128], index: 1, kind: input, shape index: {}]
  %s2 = inlined_call_operand.vmem [shape: f32[384,32], index: 2, kind: input, shape index: {}]
  %s3 = inlined_call_operand.vmem [shape: f32[1280,32], index: 3, kind: input, shape index: {}]
  %s4 = inlined_call_operand.vmem [shape: f32[56,32], index: 4, kind: input, shape index: {}]
  %s5 = inlined_call_operand.vmem [shape: f32[2,8], index: 5, kind: input, shape index: {}]
  %s6 = inlined_call_operand.vmem [shape: s32[4], index: 6, kind: input, shape index: {}]
  %s7 = inlined_call_operand.hbm [shape: f32[2,8], index: 7, kind: output, shape index: {0}]
  %s8 = inlined_call_operand.hbm [shape: f32[1,1], index: 8, kind: output, shape index: {1}]
  %9 = xla_tuple %s7, %s8
  %s10 = sld [smem:[#allocation0]]
  $region50: #{dr_cnn_forward.1} parent=0
    _
  %s12 = ssub.s32 1, %s10
  %s13 = scalar_select 0, %s12, %s10
  $region1: #{dr_cnn_forward.1} parent=0
    #allocation2 [shape = 'u8[512]{0}', space=smem, size = 0x200, scoped, tag = 'input window, operand 6, single buffered']
    #allocation3 [shape = 's32[1]{0}', space=sflag, size = 0x4, scoped, tag = 'scoped memory for dr_cnn_forward.1']
    #allocation4 [shape = 's32[1]{0}', space=sflag, size = 0x4, scoped, tag = 'scoped memory for dr_cnn_forward.1']
    #allocation5 [shape = 's32[1]{0}', space=sflag, size = 0x4, scoped, tag = 'scoped memory for dr_cnn_forward.1']
    #allocation6 [shape = 'u8[1024]{0}', space=vmem, size = 0x400, scoped, tag = 'output window, operand 0, single buffered']
    #allocation7 [shape = 'u8[512]{0}', space=smem, size = 0x200, scoped, tag = 'output window, operand 1, single buffered']
    %14 = vsyncpa [#allocation5], 0
    %15 = vsyncpa [#allocation3], 0
    %16 = vsyncpa [#allocation4], 0
    // Predicated region
    $region2: #{dr_cnn_forward.1} parent=1 // pred_check
      _
    $region3: #{dr_cnn_forward.1} parent=1 // pred_check_branch
      %18 = sbr.rel (0) target = $region5
    $region4: #{dr_cnn_forward.1} parent=1 // pred_region
      _
    $region5: #{dr_cnn_forward.1} parent=1 // pred_fallthru
      _
    // Predicated region
    $region6: #{dr_cnn_forward.1} parent=1 // pred_check
      _
    $region7: #{dr_cnn_forward.1} parent=1 // pred_check_branch
      %20 = sbr.rel (0) target = $region9
    $region8: #{dr_cnn_forward.1} parent=1 // pred_region
      _
    $region9: #{dr_cnn_forward.1} parent=1 // pred_fallthru
      _
    // Predicated region
    $region10: #{dr_cnn_forward.1} parent=1 // pred_check
      _
    $region11: #{dr_cnn_forward.1} parent=1 // pred_check_branch
      %22 = sbr.rel (0) target = $region13
    $region12: #{dr_cnn_forward.1} parent=1 // pred_region
      _
    $region13: #{dr_cnn_forward.1} parent=1 // pred_fallthru
      _
    // Predicated region
    $region14: #{dr_cnn_forward.1} parent=1 // pred_check
      _
    $region15: #{dr_cnn_forward.1} parent=1 // pred_check_branch
      %24 = sbr.rel (0) target = $region17
    $region16: #{dr_cnn_forward.1} parent=1 // pred_region
      _
    $region17: #{dr_cnn_forward.1} parent=1 // pred_fallthru
      _
    // Predicated region
    $region18: #{dr_cnn_forward.1} parent=1 // pred_check
      _
    $region19: #{dr_cnn_forward.1} parent=1 // pred_check_branch
      %26 = sbr.rel (0) target = $region21
    $region20: #{dr_cnn_forward.1} parent=1 // pred_region
      _
    $region21: #{dr_cnn_forward.1} parent=1 // pred_fallthru
      _
    // Predicated region
    $region22: #{dr_cnn_forward.1} parent=1 // pred_check
      _
    $region23: #{dr_cnn_forward.1} parent=1 // pred_check_branch
      %28 = sbr.rel (0) target = $region25
    $region24: #{dr_cnn_forward.1} parent=1 // pred_region
      _
    $region25: #{dr_cnn_forward.1} parent=1 // pred_fallthru
      _
    // Predicated region
    $region26: #{dr_cnn_forward.1} parent=1 // pred_check
      _
    $region27: #{dr_cnn_forward.1} parent=1 // pred_check_branch
      %30 = sbr.rel (0) target = $region29
    $region28: #{dr_cnn_forward.1} parent=1 // pred_region
      %s32 = ssub.s32 16, 16
      %33 = vsyncadd [#allocation5], %s32
      %s35 = sshll.u32 %s6, 4
      %s36 = int_to_ptr.vmem [resolvable:$true] %s35
      %38 = dma.vmem_to_smem %s36, 16, [#allocation2], [#allocation5]
    $region29: #{dr_cnn_forward.1} parent=1 // pred_fallthru
      _
    // Predicated region
    $region30: #{dr_cnn_forward.1} parent=1 // pred_check
      _
    $region31: #{dr_cnn_forward.1} parent=1 // pred_check_branch
      %40 = sbr.rel (0) target = $region33
    $region32: #{dr_cnn_forward.1} parent=1 // pred_region
      %41 = dma.done [#allocation5], 16
    $region33: #{dr_cnn_forward.1} parent=1 // pred_fallthru
      _
    %42 = sfence
    %v43 = vld [vmem:[%s4 + $0x30] sm:$0x1]
    %v44 = vld [vmem:[%s4 + $0x31] sm:$0x1]
    %v45 = vld [vmem:[%s4 + $0x32] sm:$0x1]
    %v46 = vld [vmem:[%s4 + $0x33] sm:$0x1]
    %v47 = vld [vmem:[%s4 + $0x20] sm:$0xff]
    %v48 = vld [vmem:[%s4 + $0x28] sm:$0xff]
    %v49 = vld [vmem:[%s4] sm:$0xff]
    %v50 = vld [vmem:[%s4 + $0x8] sm:$0xff]
    %v51 = vld [vmem:[%s4 + $0x10] sm:$0xff]
    %v52 = vld [vmem:[%s4 + $0x18] sm:$0xff]
    %v53 = vld [vmem:[%s0] sm:$0xff]
    %v54 = vld [vmem:[%s0 + $0x8] sm:$0xff]
    %v55 = vld [vmem:[%s2] sm:$0xff]
    %v56 = vld [vmem:[%s2 + $0x8] sm:$0xff]
    %v57 = vld [vmem:[%s2 + $0x10] sm:$0xff]
    %v58 = vld [vmem:[%s2 + $0x18] sm:$0xff]
    %v59 = vld [vmem:[%s2 + $0x20] sm:$0xff]
    %v60 = vld [vmem:[%s2 + $0x28] sm:$0xff]
    %v61 = vld [vmem:[%s2 + $0x30] sm:$0xff]
    %v62 = vld [vmem:[%s2 + $0x38] sm:$0xff]
    %v63 = vld [vmem:[%s2 + $0x40] sm:$0xff]
    %v64 = vld [vmem:[%s2 + $0x48] sm:$0xff]
    %v65 = vld [vmem:[%s2 + $0x50] sm:$0xff]
    %v66 = vld [vmem:[%s2 + $0x58] sm:$0xff]
    %v67 = vld [vmem:[%s2 + $0x60] sm:$0xff]
    %v68 = vld [vmem:[%s2 + $0x68] sm:$0xff]
    %v69 = vld [vmem:[%s2 + $0x70] sm:$0xff]
    %v70 = vld [vmem:[%s2 + $0x78] sm:$0xff]
    %v71 = vld [vmem:[%s0 + $0x1] sm:$0xff]
    %v72 = vld [vmem:[%s0 + $0x9] sm:$0xff]
    %v73 = vld [vmem:[%s2 + $0x80] sm:$0xff]
    %v74 = vld [vmem:[%s2 + $0x88] sm:$0xff]
    %v75 = vld [vmem:[%s2 + $0x90] sm:$0xff]
    %v76 = vld [vmem:[%s2 + $0x98] sm:$0xff]
    %v77 = vld [vmem:[%s2 + $0xa0] sm:$0xff]
    %v78 = vld [vmem:[%s2 + $0xa8] sm:$0xff]
    %v79 = vld [vmem:[%s2 + $0xb0] sm:$0xff]
    %v80 = vld [vmem:[%s2 + $0xb8] sm:$0xff]
    %v81 = vld [vmem:[%s2 + $0xc0] sm:$0xff]
    %v82 = vld [vmem:[%s2 + $0xc8] sm:$0xff]
    %v83 = vld [vmem:[%s2 + $0xd0] sm:$0xff]
    %v84 = vld [vmem:[%s2 + $0xd8] sm:$0xff]
    %v85 = vld [vmem:[%s2 + $0xe0] sm:$0xff]
    %v86 = vld [vmem:[%s2 + $0xe8] sm:$0xff]
    %v87 = vld [vmem:[%s2 + $0xf0] sm:$0xff]
    %v88 = vld [vmem:[%s2 + $0xf8] sm:$0xff]
    %89 = vmatprep.subr.mxu0 0.0
    %90 = vmatpush1.msra.mxu0 %v73
    %91 = vmatprep.subr.mxu0 0.0
    %92 = vmatpush1.msra.mxu0 %v74
    %93 = vmatprep.subr.mxu0 0.0
    %94 = vmatpush1.msra.mxu0 %v75
    %95 = vmatprep.subr.mxu0 0.0
    %96 = vmatpush1.msra.mxu0 %v76
    %97 = vmatprep.subr.mxu0 0.0
    %98 = vmatpush1.msra.mxu0 %v77
    %99 = vmatprep.subr.mxu0 0.0
    %100 = vmatpush1.msra.mxu0 %v78
    %101 = vmatprep.subr.mxu0 0.0
    %102 = vmatpush1.msra.mxu0 %v79
    %103 = vmatprep.subr.mxu0 0.0
    %104 = vmatpush1.msra.mxu0 %v80
    %105 = vmatprep.subr.mxu0 0.0
    %106 = vmatpush1.msra.mxu0 %v81
    %107 = vmatprep.subr.mxu0 0.0
    %108 = vmatpush1.msra.mxu0 %v82
    %109 = vmatprep.subr.mxu0 0.0
    %110 = vmatpush1.msra.mxu0 %v83
    %111 = vmatprep.subr.mxu0 0.0
    %112 = vmatpush1.msra.mxu0 %v84
    %113 = vmatprep.subr.mxu0 0.0
    %114 = vmatpush1.msra.mxu0 %v85
    %115 = vmatprep.subr.mxu0 0.0
    %116 = vmatpush1.msra.mxu0 %v86
    %117 = vmatprep.subr.mxu0 0.0
    %118 = vmatpush1.msra.mxu0 %v87
    %119 = vmatprep.subr.mxu0 0.0
    %120 = vmatpush1.msra.mxu0 %v88
    %121 = vmatprep.subr.mxu0 0.0
    %122 = vmatpush1.msra.mxu0 0.0
    %123 = vmatprep.subr.mxu0 0.0
    %124 = vmatpush1.msra.mxu0 0.0
    %125 = vmatprep.subr.mxu0 0.0
    %126 = vmatpush1.msra.mxu0 0.0
    %127 = vmatprep.subr.mxu0 0.0
    %128 = vmatpush1.msra.mxu0 0.0
    %129 = vmatprep.subr.mxu0 0.0
    %130 = vmatpush1.msra.mxu0 0.0
    %131 = vmatprep.subr.mxu0 0.0
    %132 = vmatpush1.msra.mxu0 0.0
    %133 = vmatprep.subr.mxu0 0.0
    %134 = vmatpush1.msra.mxu0 0.0
    %135 = vmatprep.subr.mxu0 0.0
    %136 = vmatpush1.msra.mxu0 0.0
    %137 = vmatprep.subr.mxu0 0.0
    %138 = vmatpush1.msra.mxu0 0.0
    %139 = vmatprep.subr.mxu0 0.0
    %140 = vmatpush1.msra.mxu0 0.0
    %141 = vmatprep.subr.mxu0 0.0
    %142 = vmatpush1.msra.mxu0 0.0
    %143 = vmatprep.subr.mxu0 0.0
    %144 = vmatpush1.msra.mxu0 0.0
    %145 = vmatprep.subr.mxu0 0.0
    %146 = vmatpush1.msra.mxu0 0.0
    %147 = vmatprep.subr.mxu0 0.0
    %148 = vmatpush1.msra.mxu0 0.0
    %149 = vmatprep.subr.mxu0 0.0
    %150 = vmatpush1.msra.mxu0 0.0
    %151 = vmatprep.subr.mxu0 0.0
    %152 = vmatpush1.msra.mxu0 0.0
    %153 = vmatprep.mubr.f32.mxu0 0.0
    %154 = vmatmul.mubr.f32.gmra.mrb[0].mxu0 %v71
    %v155 = vpop.f32.mrb[0].mxu0
    %v156 = vadd.f32 0.0, %v155
    %v157 = vpop.f32.mrb[0].mxu0
    %158 = vmatprep.mubr.f32.mxu0 0.0
    %159 = vmatmul.mubr.f32.gmra.mrb[0].mxu0 %v72
    %v160 = vpop.f32.mrb[0].mxu0
    %v161 = vadd.f32 0.0, %v160
    %v162 = vpop.f32.mrb[0].mxu0
    %163 = vdwg.mxu0
    %164 = vmatprep.subr.mxu0 0.0
    %165 = vmatpush1.msra.mxu0 %v55
    %166 = vmatprep.subr.mxu0 0.0
    %167 = vmatpush1.msra.mxu0 %v56
    %168 = vmatprep.subr.mxu0 0.0
    %169 = vmatpush1.msra.mxu0 %v57
    %170 = vmatprep.subr.mxu0 0.0
    %171 = vmatpush1.msra.mxu0 %v58
    %172 = vmatprep.subr.mxu0 0.0
    %173 = vmatpush1.msra.mxu0 %v59
    %174 = vmatprep.subr.mxu0 0.0
    %175 = vmatpush1.msra.mxu0 %v60
    %176 = vmatprep.subr.mxu0 0.0
    %177 = vmatpush1.msra.mxu0 %v61
    %178 = vmatprep.subr.mxu0 0.0
    %179 = vmatpush1.msra.mxu0 %v62
    %180 = vmatprep.subr.mxu0 0.0
    %181 = vmatpush1.msra.mxu0 %v63
    %182 = vmatprep.subr.mxu0 0.0
    %183 = vmatpush1.msra.mxu0 %v64
    %184 = vmatprep.subr.mxu0 0.0
    %185 = vmatpush1.msra.mxu0 %v65
    %186 = vmatprep.subr.mxu0 0.0
    %187 = vmatpush1.msra.mxu0 %v66
    %188 = vmatprep.subr.mxu0 0.0
    %189 = vmatpush1.msra.mxu0 %v67
    %190 = vmatprep.subr.mxu0 0.0
    %191 = vmatpush1.msra.mxu0 %v68
    %192 = vmatprep.subr.mxu0 0.0
    %193 = vmatpush1.msra.mxu0 %v69
    %194 = vmatprep.subr.mxu0 0.0
    %195 = vmatpush1.msra.mxu0 %v70
    %196 = vmatprep.subr.mxu0 0.0
    %197 = vmatpush1.msra.mxu0 0.0
    %198 = vmatprep.subr.mxu0 0.0
    %199 = vmatpush1.msra.mxu0 0.0
    %200 = vmatprep.subr.mxu0 0.0
    %201 = vmatpush1.msra.mxu0 0.0
    %202 = vmatprep.subr.mxu0 0.0
    %203 = vmatpush1.msra.mxu0 0.0
    %204 = vmatprep.subr.mxu0 0.0
    %205 = vmatpush1.msra.mxu0 0.0
    %206 = vmatprep.subr.mxu0 0.0
    %207 = vmatpush1.msra.mxu0 0.0
    %208 = vmatprep.subr.mxu0 0.0
    %209 = vmatpush1.msra.mxu0 0.0
    %210 = vmatprep.subr.mxu0 0.0
    %211 = vmatpush1.msra.mxu0 0.0
    %212 = vmatprep.subr.mxu0 0.0
    %213 = vmatpush1.msra.mxu0 0.0
    %214 = vmatprep.subr.mxu0 0.0
    %215 = vmatpush1.msra.mxu0 0.0
    %216 = vmatprep.subr.mxu0 0.0
    %217 = vmatpush1.msra.mxu0 0.0
    %218 = vmatprep.subr.mxu0 0.0
    %219 = vmatpush1.msra.mxu0 0.0
    %220 = vmatprep.subr.mxu0 0.0
    %221 = vmatpush1.msra.mxu0 0.0
    %222 = vmatprep.subr.mxu0 0.0
    %223 = vmatpush1.msra.mxu0 0.0
    %224 = vmatprep.subr.mxu0 0.0
    %225 = vmatpush1.msra.mxu0 0.0
    %226 = vmatprep.subr.mxu0 0.0
    %227 = vmatpush1.msra.mxu0 0.0
    %228 = vmatprep.mubr.f32.mxu0 0.0
    %229 = vmatmul.mubr.f32.gmra.mrb[0].mxu0 %v53
    %v230 = vpop.f32.mrb[0].mxu0
    %v231 = vadd.f32 %v156, %v230
    %v232 = vpop.f32.mrb[0].mxu0
    %233 = vmatprep.mubr.f32.mxu0 0.0
    %234 = vmatmul.mubr.f32.gmra.mrb[0].mxu0 %v54
    %v235 = vpop.f32.mrb[0].mxu0
    %v236 = vadd.f32 %v161, %v235
    %v237 = vpop.f32.mrb[0].mxu0
    %238 = vdwg.mxu0
    %v239 = vld [vmem:[%s0 + $0x2] sm:$0xff]
    %v240 = vld [vmem:[%s0 + $0xa] sm:$0xff]
    %v241 = vld [vmem:[%s2 + $0x100] sm:$0xff]
    %v242 = vld [vmem:[%s2 + $0x108] sm:$0xff]
    %v243 = vld [vmem:[%s2 + $0x110] sm:$0xff]
    %v244 = vld [vmem:[%s2 + $0x118] sm:$0xff]
    %v245 = vld [vmem:[%s2 + $0x120] sm:$0xff]
    %v246 = vld [vmem:[%s2 + $0x128] sm:$0xff]
    %v247 = vld [vmem:[%s2 + $0x130] sm:$0xff]
    %v248 = vld [vmem:[%s2 + $0x138] sm:$0xff]
    %v249 = vld [vmem:[%s2 + $0x140] sm:$0xff]
    %v250 = vld [vmem:[%s2 + $0x148] sm:$0xff]
    %v251 = vld [vmem:[%s2 + $0x150] sm:$0xff]
    %v252 = vld [vmem:[%s2 + $0x158] sm:$0xff]
    %v253 = vld [vmem:[%s2 + $0x160] sm:$0xff]
    %v254 = vld [vmem:[%s2 + $0x168] sm:$0xff]
    %v255 = vld [vmem:[%s2 + $0x170] sm:$0xff]
    %v256 = vld [vmem:[%s2 + $0x178] sm:$0xff]
    %257 = vmatprep.subr.mxu0 0.0
    %258 = vmatpush1.msra.mxu0 %v241
    %259 = vmatprep.subr.mxu0 0.0
    %260 = vmatpush1.msra.mxu0 %v242
    %261 = vmatprep.subr.mxu0 0.0
    %262 = vmatpush1.msra.mxu0 %v243
    %263 = vmatprep.subr.mxu0 0.0
    %264 = vmatpush1.msra.mxu0 %v244
    %265 = vmatprep.subr.mxu0 0.0
    %266 = vmatpush1.msra.mxu0 %v245
    %267 = vmatprep.subr.mxu0 0.0
    %268 = vmatpush1.msra.mxu0 %v246
    %269 = vmatprep.subr.mxu0 0.0
    %270 = vmatpush1.msra.mxu0 %v247
    %271 = vmatprep.subr.mxu0 0.0
    %272 = vmatpush1.msra.mxu0 %v248
    %273 = vmatprep.subr.mxu0 0.0
    %274 = vmatpush1.msra.mxu0 %v249
    %275 = vmatprep.subr.mxu0 0.0
    %276 = vmatpush1.msra.mxu0 %v250
    %277 = vmatprep.subr.mxu0 0.0
    %278 = vmatpush1.msra.mxu0 %v251
    %279 = vmatprep.subr.mxu0 0.0
    %280 = vmatpush1.msra.mxu0 %v252
    %281 = vmatprep.subr.mxu0 0.0
    %282 = vmatpush1.msra.mxu0 %v253
    %283 = vmatprep.subr.mxu0 0.0
    %284 = vmatpush1.msra.mxu0 %v254
    %285 = vmatprep.subr.mxu0 0.0
    %286 = vmatpush1.msra.mxu0 %v255
    %287 = vmatprep.subr.mxu0 0.0
    %288 = vmatpush1.msra.mxu0 %v256
    %289 = vmatprep.subr.mxu0 0.0
    %290 = vmatpush1.msra.mxu0 0.0
    %291 = vmatprep.subr.mxu0 0.0
    %292 = vmatpush1.msra.mxu0 0.0
    %293 = vmatprep.subr.mxu0 0.0
    %294 = vmatpush1.msra.mxu0 0.0
    %295 = vmatprep.subr.mxu0 0.0
    %296 = vmatpush1.msra.mxu0 0.0
    %297 = vmatprep.subr.mxu0 0.0
    %298 = vmatpush1.msra.mxu0 0.0
    %299 = vmatprep.subr.mxu0 0.0
    %300 = vmatpush1.msra.mxu0 0.0
    %301 = vmatprep.subr.mxu0 0.0
    %302 = vmatpush1.msra.mxu0 0.0
    %303 = vmatprep.subr.mxu0 0.0
    %304 = vmatpush1.msra.mxu0 0.0
    %305 = vmatprep.subr.mxu0 0.0
    %306 = vmatpush1.msra.mxu0 0.0
    %307 = vmatprep.subr.mxu0 0.0
    %308 = vmatpush1.msra.mxu0 0.0
    %309 = vmatprep.subr.mxu0 0.0
    %310 = vmatpush1.msra.mxu0 0.0
    %311 = vmatprep.subr.mxu0 0.0
    %312 = vmatpush1.msra.mxu0 0.0
    %313 = vmatprep.subr.mxu0 0.0
    %314 = vmatpush1.msra.mxu0 0.0
    %315 = vmatprep.subr.mxu0 0.0
    %316 = vmatpush1.msra.mxu0 0.0
    %317 = vmatprep.subr.mxu0 0.0
    %318 = vmatpush1.msra.mxu0 0.0
    %319 = vmatprep.subr.mxu0 0.0
    %320 = vmatpush1.msra.mxu0 0.0
    %321 = vmatprep.mubr.f32.mxu0 0.0
    %322 = vmatmul.mubr.f32.gmra.mrb[0].mxu0 %v239
    %v323 = vpop.f32.mrb[0].mxu0
    %v324 = vadd.f32 0.0, %v323
    %v325 = vpop.f32.mrb[0].mxu0
    %326 = vmatprep.mubr.f32.mxu0 0.0
    %327 = vmatmul.mubr.f32.gmra.mrb[0].mxu0 %v240
    %v328 = vpop.f32.mrb[0].mxu0
    %v329 = vadd.f32 0.0, %v328
    %v330 = vpop.f32.mrb[0].mxu0
    %331 = vdwg.mxu0
    %v332 = vadd.f32 %v231, %v324
    %v333 = vadd.f32 %v236, %v329
    %v334 = vlaneseq
    %v335 = vshrl.u32 %v334, 7
    %v336 = vsub.s32 0, %v335
    %v337 = vrot.slane %v43, %v336
    %v338 = vadd.f32 %v332, %v337
    %v339 = vadd.f32 %v333, %v337
    %v340 = vtanh.pop %v338
    %v341 = vtanh.pop %v339
    %vm342 = vcmask 261120
    %v344 = vsel %vm342, %v340, 0
    %v347 = vsel %vm342, %v341, 0
    %v350 = vsel %vm342, %v47, 0
    %v353 = vsel %vm342, %v48, 0
    %355 = vmatprep.subr.mxu0 0.0
    %356 = vmatpush1.xpose.msra.mxu0 %v350
    %357 = vmatprep.subr.mxu0 0.0
    %358 = vmatpush1.xpose.msra.mxu0 %v353
    %359 = vmatprep.subr.mxu0 0.0
    %360 = vmatpush1.xpose.msra.mxu0 0.0
    %361 = vmatprep.subr.mxu0 0.0
    %362 = vmatpush1.xpose.msra.mxu0 0.0
    %363 = vmatprep.subr.mxu0 0.0
    %364 = vmatpush1.xpose.msra.mxu0 0.0
    %365 = vmatprep.subr.mxu0 0.0
    %366 = vmatpush1.xpose.msra.mxu0 0.0
    %367 = vmatprep.subr.mxu0 0.0
    %368 = vmatpush1.xpose.msra.mxu0 0.0
    %369 = vmatprep.subr.mxu0 0.0
    %370 = vmatpush1.xpose.msra.mxu0 0.0
    %371 = vmatprep.subr.mxu0 0.0
    %372 = vmatpush1.xpose.msra.mxu0 0.0
    %373 = vmatprep.subr.mxu0 0.0
    %374 = vmatpush1.xpose.msra.mxu0 0.0
    %375 = vmatprep.subr.mxu0 0.0
    %376 = vmatpush1.xpose.msra.mxu0 0.0
    %377 = vmatprep.subr.mxu0 0.0
    %378 = vmatpush1.xpose.msra.mxu0 0.0
    %379 = vmatprep.subr.mxu0 0.0
    %380 = vmatpush1.xpose.msra.mxu0 0.0
    %381 = vmatprep.subr.mxu0 0.0
    %382 = vmatpush1.xpose.msra.mxu0 0.0
    %383 = vmatprep.subr.mxu0 0.0
    %384 = vmatpush1.xpose.msra.mxu0 0.0
    %385 = vmatprep.subr.mxu0 0.0
    %386 = vmatpush1.xpose.msra.mxu0 0.0
    %387 = vmatprep.subr.mxu0 0.0
    %388 = vmatpush1.xpose.msra.mxu0 0.0
    %389 = vmatprep.subr.mxu0 0.0
    %390 = vmatpush1.xpose.msra.mxu0 0.0
    %391 = vmatprep.subr.mxu0 0.0
    %392 = vmatpush1.xpose.msra.mxu0 0.0
    %393 = vmatprep.subr.mxu0 0.0
    %394 = vmatpush1.xpose.msra.mxu0 0.0
    %395 = vmatprep.subr.mxu0 0.0
    %396 = vmatpush1.xpose.msra.mxu0 0.0
    %397 = vmatprep.subr.mxu0 0.0
    %398 = vmatpush1.xpose.msra.mxu0 0.0
    %399 = vmatprep.subr.mxu0 0.0
    %400 = vmatpush1.xpose.msra.mxu0 0.0
    %401 = vmatprep.subr.mxu0 0.0
    %402 = vmatpush1.xpose.msra.mxu0 0.0
    %403 = vmatprep.subr.mxu0 0.0
    %404 = vmatpush1.xpose.msra.mxu0 0.0
    %405 = vmatprep.subr.mxu0 0.0
    %406 = vmatpush1.xpose.msra.mxu0 0.0
    %407 = vmatprep.subr.mxu0 0.0
    %408 = vmatpush1.xpose.msra.mxu0 0.0
    %409 = vmatprep.subr.mxu0 0.0
    %410 = vmatpush1.xpose.msra.mxu0 0.0
    %411 = vmatprep.subr.mxu0 0.0
    %412 = vmatpush1.xpose.msra.mxu0 0.0
    %413 = vmatprep.subr.mxu0 0.0
    %414 = vmatpush1.xpose.msra.mxu0 0.0
    %415 = vmatprep.subr.mxu0 0.0
    %416 = vmatpush1.xpose.msra.mxu0 0.0
    %417 = vmatprep.subr.mxu0 0.0
    %418 = vmatpush1.xpose.msra.mxu0 0.0
    %419 = vmatprep.mubr.f32.mxu0 0.0
    %420 = vmatmul.mubr.f32.gmra.mrb[0].mxu0 %v344
    %v421 = vpop.f32.mrb[0].mxu0
    %v422 = vadd.f32 0.0, %v421
    %v423 = vpop.f32.mrb[0].mxu0
    %424 = vmatprep.mubr.f32.mxu0 0.0
    %425 = vmatmul.mubr.f32.gmra.mrb[0].mxu0 %v347
    %v426 = vpop.f32.mrb[0].mxu0
    %v427 = vadd.f32 0.0, %v426
    %v428 = vpop.f32.mrb[0].mxu0
    %429 = vdwg.mxu0
    %vm430 = vcmask 64512
    %v431 = vsel %vm430, %v422, -inf
    %v432 = vsel %vm430, %v427, -inf
    %v433 = vmax.f32 %v431, %v432
    %v434 = vrot.slane %v433, 4
    %v435 = vmax.f32 %v433, %v434
    %v436 = vrot.slane %v435, 2
    %v437 = vmax.f32 %v435, %v436
    %v438 = vrot.slane %v437, 1
    %v439 = vmax.f32 %v437, %v438
    %v440 = vsub.f32 %v422, %v439
    %v441 = vsub.f32 %v427, %v439
    %v442 = vmul.f32 %v440, 1.442695
    %v443 = vpow.pop %v442
    %v444 = vmul.f32 %v441, 1.442695
    %v445 = vpow.pop %v444
    %v446 = vsel %vm430, %v443, 0.0
    %v447 = vsel %vm430, %v445, 0.0
    %v448 = vadd.f32 %v446, %v447
    %v449 = vrot.slane %v448, 4
    %v450 = vadd.f32 %v448, %v449
    %v451 = vrot.slane %v450, 2
    %v452 = vadd.f32 %v450, %v451
    %v453 = vrot.slane %v452, 1
    %v454 = vadd.f32 %v452, %v453
    %v455 = vrcp.pop %v454
    %v456 = vmul.f32 %v443, %v455
    %v457 = vmul.f32 %v445, %v455
    %460 = vrot.lane.b32.xlu0 %v422, 120
    %v461 = vpop.permute.xlu0 %460
    %462 = vrot.lane.b32.xlu0 %v427, 120
    %v463 = vpop.permute.xlu0 %462
    %v466 = vmul.f32 %v456, %v461
    %v467 = vmul.f32 %v457, %v463
    %v468 = vsel %vm430, %v466, 0.0
    %v469 = vsel %vm430, %v467, 0.0
    %v470 = vadd.f32 %v468, %v469
    %v471 = vrot.slane %v470, 4
    %v472 = vadd.f32 %v470, %v471
    %v473 = vrot.slane %v472, 2
    %v474 = vadd.f32 %v472, %v473
    %v475 = vrot.slane %v474, 1
    %v476 = vadd.f32 %v474, %v475
    %v477 = vadd.f32 %v476, %v46
    %v478 = vld [vmem:[%s0 + $0x12] sm:$0xff]
    %v479 = vld [vmem:[%s0 + $0x1a] sm:$0xff]
    %v480 = vld [vmem:[%s0 + $0x13] sm:$0xff]
    %v481 = vld [vmem:[%s0 + $0x1b] sm:$0xff]
    %482 = vmatprep.subr.mxu0 0.0
    %483 = vmatpush1.msra.mxu0 %v73
    %484 = vmatprep.subr.mxu0 0.0
    %485 = vmatpush1.msra.mxu0 %v74
    %486 = vmatprep.subr.mxu0 0.0
    %487 = vmatpush1.msra.mxu0 %v75
    %488 = vmatprep.subr.mxu0 0.0
    %489 = vmatpush1.msra.mxu0 %v76
    %490 = vmatprep.subr.mxu0 0.0
    %491 = vmatpush1.msra.mxu0 %v77
    %492 = vmatprep.subr.mxu0 0.0
    %493 = vmatpush1.msra.mxu0 %v78
    %494 = vmatprep.subr.mxu0 0.0
    %495 = vmatpush1.msra.mxu0 %v79
    %496 = vmatprep.subr.mxu0 0.0
    %497 = vmatpush1.msra.mxu0 %v80
    %498 = vmatprep.subr.mxu0 0.0
    %499 = vmatpush1.msra.mxu0 %v81
    %500 = vmatprep.subr.mxu0 0.0
    %501 = vmatpush1.msra.mxu0 %v82
    %502 = vmatprep.subr.mxu0 0.0
    %503 = vmatpush1.msra.mxu0 %v83
    %504 = vmatprep.subr.mxu0 0.0
    %505 = vmatpush1.msra.mxu0 %v84
    %506 = vmatprep.subr.mxu0 0.0
    %507 = vmatpush1.msra.mxu0 %v85
    %508 = vmatprep.subr.mxu0 0.0
    %509 = vmatpush1.msra.mxu0 %v86
    %510 = vmatprep.subr.mxu0 0.0
    %511 = vmatpush1.msra.mxu0 %v87
    %512 = vmatprep.subr.mxu0 0.0
    %513 = vmatpush1.msra.mxu0 %v88
    %514 = vmatprep.subr.mxu0 0.0
    %515 = vmatpush1.msra.mxu0 0.0
    %516 = vmatprep.subr.mxu0 0.0
    %517 = vmatpush1.msra.mxu0 0.0
    %518 = vmatprep.subr.mxu0 0.0
    %519 = vmatpush1.msra.mxu0 0.0
    %520 = vmatprep.subr.mxu0 0.0
    %521 = vmatpush1.msra.mxu0 0.0
    %522 = vmatprep.subr.mxu0 0.0
    %523 = vmatpush1.msra.mxu0 0.0
    %524 = vmatprep.subr.mxu0 0.0
    %525 = vmatpush1.msra.mxu0 0.0
    %526 = vmatprep.subr.mxu0 0.0
    %527 = vmatpush1.msra.mxu0 0.0
    %528 = vmatprep.subr.mxu0 0.0
    %529 = vmatpush1.msra.mxu0 0.0
    %530 = vmatprep.subr.mxu0 0.0
    %531 = vmatpush1.msra.mxu0 0.0
    %532 = vmatprep.subr.mxu0 0.0
    %533 = vmatpush1.msra.mxu0 0.0
    %534 = vmatprep.subr.mxu0 0.0
    %535 = vmatpush1.msra.mxu0 0.0
    %536 = vmatprep.subr.mxu0 0.0
    %537 = vmatpush1.msra.mxu0 0.0
    %538 = vmatprep.subr.mxu0 0.0
    %539 = vmatpush1.msra.mxu0 0.0
    %540 = vmatprep.subr.mxu0 0.0
    %541 = vmatpush1.msra.mxu0 0.0
    %542 = vmatprep.subr.mxu0 0.0
    %543 = vmatpush1.msra.mxu0 0.0
    %544 = vmatprep.subr.mxu0 0.0
    %545 = vmatpush1.msra.mxu0 0.0
    %546 = vmatprep.mubr.f32.mxu0 0.0
    %547 = vmatmul.mubr.f32.gmra.mrb[0].mxu0 %v480
    %v548 = vpop.f32.mrb[0].mxu0
    %v549 = vadd.f32 0.0, %v548
    %v550 = vpop.f32.mrb[0].mxu0
    %551 = vmatprep.mubr.f32.mxu0 0.0
    %552 = vmatmul.mubr.f32.gmra.mrb[0].mxu0 %v481
    %v553 = vpop.f32.mrb[0].mxu0
    %v554 = vadd.f32 0.0, %v553
    %v555 = vpop.f32.mrb[0].mxu0
    %556 = vdwg.mxu0
    %557 = vmatprep.subr.mxu0 0.0
    %558 = vmatpush1.msra.mxu0 %v55
    %559 = vmatprep.subr.mxu0 0.0
    %560 = vmatpush1.msra.mxu0 %v56
    %561 = vmatprep.subr.mxu0 0.0
    %562 = vmatpush1.msra.mxu0 %v57
    %563 = vmatprep.subr.mxu0 0.0
    %564 = vmatpush1.msra.mxu0 %v58
    %565 = vmatprep.subr.mxu0 0.0
    %566 = vmatpush1.msra.mxu0 %v59
    %567 = vmatprep.subr.mxu0 0.0
    %568 = vmatpush1.msra.mxu0 %v60
    %569 = vmatprep.subr.mxu0 0.0
    %570 = vmatpush1.msra.mxu0 %v61
    %571 = vmatprep.subr.mxu0 0.0
    %572 = vmatpush1.msra.mxu0 %v62
    %573 = vmatprep.subr.mxu0 0.0
    %574 = vmatpush1.msra.mxu0 %v63
    %575 = vmatprep.subr.mxu0 0.0
    %576 = vmatpush1.msra.mxu0 %v64
    %577 = vmatprep.subr.mxu0 0.0
    %578 = vmatpush1.msra.mxu0 %v65
    %579 = vmatprep.subr.mxu0 0.0
    %580 = vmatpush1.msra.mxu0 %v66
    %581 = vmatprep.subr.mxu0 0.0
    %582 = vmatpush1.msra.mxu0 %v67
    %583 = vmatprep.subr.mxu0 0.0
    %584 = vmatpush1.msra.mxu0 %v68
    %585 = vmatprep.subr.mxu0 0.0
    %586 = vmatpush1.msra.mxu0 %v69
    %587 = vmatprep.subr.mxu0 0.0
    %588 = vmatpush1.msra.mxu0 %v70
    %589 = vmatprep.subr.mxu0 0.0
    %590 = vmatpush1.msra.mxu0 0.0
    %591 = vmatprep.subr.mxu0 0.0
    %592 = vmatpush1.msra.mxu0 0.0
    %593 = vmatprep.subr.mxu0 0.0
    %594 = vmatpush1.msra.mxu0 0.0
    %595 = vmatprep.subr.mxu0 0.0
    %596 = vmatpush1.msra.mxu0 0.0
    %597 = vmatprep.subr.mxu0 0.0
    %598 = vmatpush1.msra.mxu0 0.0
    %599 = vmatprep.subr.mxu0 0.0
    %600 = vmatpush1.msra.mxu0 0.0
    %601 = vmatprep.subr.mxu0 0.0
    %602 = vmatpush1.msra.mxu0 0.0
    %603 = vmatprep.subr.mxu0 0.0
    %604 = vmatpush1.msra.mxu0 0.0
    %605 = vmatprep.subr.mxu0 0.0
    %606 = vmatpush1.msra.mxu0 0.0
    %607 = vmatprep.subr.mxu0 0.0
    %608 = vmatpush1.msra.mxu0 0.0
    %609 = vmatprep.subr.mxu0 0.0
    %610 = vmatpush1.msra.mxu0 0.0
    %611 = vmatprep.subr.mxu0 0.0
    %612 = vmatpush1.msra.mxu0 0.0
    %613 = vmatprep.subr.mxu0 0.0
    %614 = vmatpush1.msra.mxu0 0.0
    %615 = vmatprep.subr.mxu0 0.0
    %616 = vmatpush1.msra.mxu0 0.0
    %617 = vmatprep.subr.mxu0 0.0
    %618 = vmatpush1.msra.mxu0 0.0
    %619 = vmatprep.subr.mxu0 0.0
    %620 = vmatpush1.msra.mxu0 0.0
    %621 = vmatprep.mubr.f32.mxu0 0.0
    %622 = vmatmul.mubr.f32.gmra.mrb[0].mxu0 %v478
    %v623 = vpop.f32.mrb[0].mxu0
    %v624 = vadd.f32 %v549, %v623
    %v625 = vpop.f32.mrb[0].mxu0
    %626 = vmatprep.mubr.f32.mxu0 0.0
    %627 = vmatmul.mubr.f32.gmra.mrb[0].mxu0 %v479
    %v628 = vpop.f32.mrb[0].mxu0
    %v629 = vadd.f32 %v554, %v628
    %v630 = vpop.f32.mrb[0].mxu0
    %631 = vdwg.mxu0
    %v632 = vld [vmem:[%s0 + $0x14] sm:$0xff]
    %v633 = vld [vmem:[%s0 + $0x1c] sm:$0xff]
    %634 = vmatprep.subr.mxu0 0.0
    %635 = vmatpush1.msra.mxu0 %v241
    %636 = vmatprep.subr.mxu0 0.0
    %637 = vmatpush1.msra.mxu0 %v242
    %638 = vmatprep.subr.mxu0 0.0
    %639 = vmatpush1.msra.mxu0 %v243
    %640 = vmatprep.subr.mxu0 0.0
    %641 = vmatpush1.msra.mxu0 %v244
    %642 = vmatprep.subr.mxu0 0.0
    %643 = vmatpush1.msra.mxu0 %v245
    %644 = vmatprep.subr.mxu0 0.0
    %645 = vmatpush1.msra.mxu0 %v246
    %646 = vmatprep.subr.mxu0 0.0
    %647 = vmatpush1.msra.mxu0 %v247
    %648 = vmatprep.subr.mxu0 0.0
    %649 = vmatpush1.msra.mxu0 %v248
    %650 = vmatprep.subr.mxu0 0.0
    %651 = vmatpush1.msra.mxu0 %v249
    %652 = vmatprep.subr.mxu0 0.0
    %653 = vmatpush1.msra.mxu0 %v250
    %654 = vmatprep.subr.mxu0 0.0
    %655 = vmatpush1.msra.mxu0 %v251
    %656 = vmatprep.subr.mxu0 0.0
    %657 = vmatpush1.msra.mxu0 %v252
    %658 = vmatprep.subr.mxu0 0.0
    %659 = vmatpush1.msra.mxu0 %v253
    %660 = vmatprep.subr.mxu0 0.0
    %661 = vmatpush1.msra.mxu0 %v254
    %662 = vmatprep.subr.mxu0 0.0
    %663 = vmatpush1.msra.mxu0 %v255
    %664 = vmatprep.subr.mxu0 0.0
    %665 = vmatpush1.msra.mxu0 %v256
    %666 = vmatprep.subr.mxu0 0.0
    %667 = vmatpush1.msra.mxu0 0.0
    %668 = vmatprep.subr.mxu0 0.0
    %669 = vmatpush1.msra.mxu0 0.0
    %670 = vmatprep.subr.mxu0 0.0
    %671 = vmatpush1.msra.mxu0 0.0
    %672 = vmatprep.subr.mxu0 0.0
    %673 = vmatpush1.msra.mxu0 0.0
    %674 = vmatprep.subr.mxu0 0.0
    %675 = vmatpush1.msra.mxu0 0.0
    %676 = vmatprep.subr.mxu0 0.0
    %677 = vmatpush1.msra.mxu0 0.0
    %678 = vmatprep.subr.mxu0 0.0
    %679 = vmatpush1.msra.mxu0 0.0
    %680 = vmatprep.subr.mxu0 0.0
    %681 = vmatpush1.msra.mxu0 0.0
    %682 = vmatprep.subr.mxu0 0.0
    %683 = vmatpush1.msra.mxu0 0.0
    %684 = vmatprep.subr.mxu0 0.0
    %685 = vmatpush1.msra.mxu0 0.0
    %686 = vmatprep.subr.mxu0 0.0
    %687 = vmatpush1.msra.mxu0 0.0
    %688 = vmatprep.subr.mxu0 0.0
    %689 = vmatpush1.msra.mxu0 0.0
    %690 = vmatprep.subr.mxu0 0.0
    %691 = vmatpush1.msra.mxu0 0.0
    %692 = vmatprep.subr.mxu0 0.0
    %693 = vmatpush1.msra.mxu0 0.0
    %694 = vmatprep.subr.mxu0 0.0
    %695 = vmatpush1.msra.mxu0 0.0
    %696 = vmatprep.subr.mxu0 0.0
    %697 = vmatpush1.msra.mxu0 0.0
    %698 = vmatprep.mubr.f32.mxu0 0.0
    %699 = vmatmul.mubr.f32.gmra.mrb[0].mxu0 %v632
    %v700 = vpop.f32.mrb[0].mxu0
    %v701 = vadd.f32 0.0, %v700
    %v702 = vpop.f32.mrb[0].mxu0
    %703 = vmatprep.mubr.f32.mxu0 0.0
    %704 = vmatmul.mubr.f32.gmra.mrb[0].mxu0 %v633
    %v705 = vpop.f32.mrb[0].mxu0
    %v706 = vadd.f32 0.0, %v705
    %v707 = vpop.f32.mrb[0].mxu0
    %708 = vdwg.mxu0
    %v709 = vadd.f32 %v624, %v701
    %v710 = vadd.f32 %v629, %v706
    %v711 = vadd.f32 %v709, %v337
    %v712 = vadd.f32 %v710, %v337
    %v713 = vtanh.pop %v711
    %v714 = vtanh.pop %v712
    %v716 = vsel %vm342, %v713, 0
    %v719 = vsel %vm342, %v714, 0
    %721 = vmatprep.subr.mxu0 0.0
    %722 = vmatpush1.xpose.msra.mxu0 %v350
    %723 = vmatprep.subr.mxu0 0.0
    %724 = vmatpush1.xpose.msra.mxu0 %v353
    %725 = vmatprep.subr.mxu0 0.0
    %726 = vmatpush1.xpose.msra.mxu0 0.0
    %727 = vmatprep.subr.mxu0 0.0
    %728 = vmatpush1.xpose.msra.mxu0 0.0
    %729 = vmatprep.subr.mxu0 0.0
    %730 = vmatpush1.xpose.msra.mxu0 0.0
    %731 = vmatprep.subr.mxu0 0.0
    %732 = vmatpush1.xpose.msra.mxu0 0.0
    %733 = vmatprep.subr.mxu0 0.0
    %734 = vmatpush1.xpose.msra.mxu0 0.0
    %735 = vmatprep.subr.mxu0 0.0
    %736 = vmatpush1.xpose.msra.mxu0 0.0
    %737 = vmatprep.subr.mxu0 0.0
    %738 = vmatpush1.xpose.msra.mxu0 0.0
    %739 = vmatprep.subr.mxu0 0.0
    %740 = vmatpush1.xpose.msra.mxu0 0.0
    %741 = vmatprep.subr.mxu0 0.0
    %742 = vmatpush1.xpose.msra.mxu0 0.0
    %743 = vmatprep.subr.mxu0 0.0
    %744 = vmatpush1.xpose.msra.mxu0 0.0
    %745 = vmatprep.subr.mxu0 0.0
    %746 = vmatpush1.xpose.msra.mxu0 0.0
    %747 = vmatprep.subr.mxu0 0.0
    %748 = vmatpush1.xpose.msra.mxu0 0.0
    %749 = vmatprep.subr.mxu0 0.0
    %750 = vmatpush1.xpose.msra.mxu0 0.0
    %751 = vmatprep.subr.mxu0 0.0
    %752 = vmatpush1.xpose.msra.mxu0 0.0
    %753 = vmatprep.subr.mxu0 0.0
    %754 = vmatpush1.xpose.msra.mxu0 0.0
    %755 = vmatprep.subr.mxu0 0.0
    %756 = vmatpush1.xpose.msra.mxu0 0.0
    %757 = vmatprep.subr.mxu0 0.0
    %758 = vmatpush1.xpose.msra.mxu0 0.0
    %759 = vmatprep.subr.mxu0 0.0
    %760 = vmatpush1.xpose.msra.mxu0 0.0
    %761 = vmatprep.subr.mxu0 0.0
    %762 = vmatpush1.xpose.msra.mxu0 0.0
    %763 = vmatprep.subr.mxu0 0.0
    %764 = vmatpush1.xpose.msra.mxu0 0.0
    %765 = vmatprep.subr.mxu0 0.0
    %766 = vmatpush1.xpose.msra.mxu0 0.0
    %767 = vmatprep.subr.mxu0 0.0
    %768 = vmatpush1.xpose.msra.mxu0 0.0
    %769 = vmatprep.subr.mxu0 0.0
    %770 = vmatpush1.xpose.msra.mxu0 0.0
    %771 = vmatprep.subr.mxu0 0.0
    %772 = vmatpush1.xpose.msra.mxu0 0.0
    %773 = vmatprep.subr.mxu0 0.0
    %774 = vmatpush1.xpose.msra.mxu0 0.0
    %775 = vmatprep.subr.mxu0 0.0
    %776 = vmatpush1.xpose.msra.mxu0 0.0
    %777 = vmatprep.subr.mxu0 0.0
    %778 = vmatpush1.xpose.msra.mxu0 0.0
    %779 = vmatprep.subr.mxu0 0.0
    %780 = vmatpush1.xpose.msra.mxu0 0.0
    %781 = vmatprep.subr.mxu0 0.0
    %782 = vmatpush1.xpose.msra.mxu0 0.0
    %783 = vmatprep.subr.mxu0 0.0
    %784 = vmatpush1.xpose.msra.mxu0 0.0
    %785 = vmatprep.mubr.f32.mxu0 0.0
    %786 = vmatmul.mubr.f32.gmra.mrb[0].mxu0 %v716
    %v787 = vpop.f32.mrb[0].mxu0
    %v788 = vadd.f32 0.0, %v787
    %v789 = vpop.f32.mrb[0].mxu0
    %790 = vmatprep.mubr.f32.mxu0 0.0
    %791 = vmatmul.mubr.f32.gmra.mrb[0].mxu0 %v719
    %v792 = vpop.f32.mrb[0].mxu0
    %v793 = vadd.f32 0.0, %v792
    %v794 = vpop.f32.mrb[0].mxu0
    %795 = vdwg.mxu0
    %v796 = vsel %vm430, %v788, -inf
    %v797 = vsel %vm430, %v793, -inf
    %v798 = vmax.f32 %v796, %v797
    %v799 = vrot.slane %v798, 4
    %v800 = vmax.f32 %v798, %v799
    %v801 = vrot.slane %v800, 2
    %v802 = vmax.f32 %v800, %v801
    %v803 = vrot.slane %v802, 1
    %v804 = vmax.f32 %v802, %v803
    %v805 = vsub.f32 %v788, %v804
    %v806 = vsub.f32 %v793, %v804
    %v807 = vmul.f32 %v805, 1.442695
    %v808 = vpow.pop %v807
    %v809 = vmul.f32 %v806, 1.442695
    %v810 = vpow.pop %v809
    %v811 = vsel %vm430, %v808, 0.0
    %v812 = vsel %vm430, %v810, 0.0
    %v813 = vadd.f32 %v811, %v812
    %v814 = vrot.slane %v813, 4
    %v815 = vadd.f32 %v813, %v814
    %v816 = vrot.slane %v815, 2
    %v817 = vadd.f32 %v815, %v816
    %v818 = vrot.slane %v817, 1
    %v819 = vadd.f32 %v817, %v818
    %v820 = vrcp.pop %v819
    %v821 = vmul.f32 %v808, %v820
    %v822 = vmul.f32 %v810, %v820
    %825 = vrot.lane.b32.xlu0 %v788, 120
    %v826 = vpop.permute.xlu0 %825
    %827 = vrot.lane.b32.xlu0 %v793, 120
    %v828 = vpop.permute.xlu0 %827
    %v831 = vmul.f32 %v821, %v826
    %v832 = vmul.f32 %v822, %v828
    %v833 = vsel %vm430, %v831, 0.0
    %v834 = vsel %vm430, %v832, 0.0
    %v835 = vadd.f32 %v833, %v834
    %v836 = vrot.slane %v835, 4
    %v837 = vadd.f32 %v835, %v836
    %v838 = vrot.slane %v837, 2
    %v839 = vadd.f32 %v837, %v838
    %v840 = vrot.slane %v839, 1
    %v841 = vadd.f32 %v839, %v840
    %v842 = vadd.f32 %v841, %v46
    %v844 = vrot.slane %v842, 7
    %vm846 = vcmask 1040384
    %v847 = vsel %vm846, %v477, %v844
    %vm848 = vcmask 58368
    %849 = vst.msk [vmem:[#allocation6] sm:$0x3] %vm848, %v847
    %v850 = vld [vmem:[%s5] sm:$0x3]
    %v851 = vmax.f32 %v847, 0.0
    %v852 = vmul.f32 %v847, %v850
    %v853 = vsub.f32 %v851, %v852
    %v854 = vand.u32 2147483647, %v847
    %v855 = vsub.f32 0.0, %v854
    %v856 = vmul.f32 %v855, 1.442695
    %v857 = vpow.pop %v856
    %v858 = vadd.f32 %v857, 1.0
    %v859 = vlog2.pop %v858
    %v860 = vmul.f32 %v859, 0.6931472
    %v861 = vmul.f32 -0.5, %v857
    %v862 = vadd.f32 %v861, 1.0
    %v863 = vmul.f32 %v862, %v857
    %v864 = vand.u32 2147483647, %v857
    %vm865 = vcmp.lt.f32.partialorder %v864, 0.0004427343
    %v866 = vsel %vm865, %v863, %v860
    %v867 = vadd.f32 %v853, %v866
    %v868 = vsub.f32 0.0, %v867
    %v869 = vmul.f32 %v868, 1.442695
    %v870 = vpow.pop %v869
    %v871 = vsub.f32 1.0, %v870
    %v872 = vmul.f32 %v871, %v871
    %v873 = vmul.f32 %v872, %v867
    %v874 = vsel %vm848, %v873, 0.0
    %875 = vadd.xlane.f32.xlu0 %v874
    %v876 = vpop.xlane.xlu0 %875
    %v877 = vrot.slane %v876, 4
    %v878 = vadd.f32 %v876, %v877
    %v879 = vrot.slane %v878, 2
    %v880 = vadd.f32 %v878, %v879
    %v881 = vrot.slane %v880, 1
    %v882 = vadd.f32 %v880, %v881
    %s883 = vtos %v882
    %v884 = vrcp.pop 16.0
    %s885 = vtos %v884
    %s886 = smul.f32 %s883, %s885
    %v887 = vld [vmem:[%s1] sm:$0xff]
    %v888 = vld [vmem:[%s1 + $0x8] sm:$0xff]
    %v889 = vld [vmem:[%s1 + $0x10] sm:$0xff]
    %v890 = vld [vmem:[%s1 + $0x18] sm:$0xff]
    %v891 = vld [vmem:[%s1 + $0x20] sm:$0xff]
    %v892 = vld [vmem:[%s1 + $0x28] sm:$0xff]
    %v893 = vld [vmem:[%s1 + $0x30] sm:$0xff]
    %v894 = vld [vmem:[%s1 + $0x38] sm:$0xff]
    %v895 = vld [vmem:[%s1 + $0x40] sm:$0xff]
    %v896 = vld [vmem:[%s1 + $0x48] sm:$0xff]
    %v897 = vld [vmem:[%s3] sm:$0xff]
    %v898 = vld [vmem:[%s3 + $0x8] sm:$0xff]
    %v899 = vld [vmem:[%s3 + $0x10] sm:$0xff]
    %v900 = vld [vmem:[%s3 + $0x18] sm:$0xff]
    %v901 = vld [vmem:[%s3 + $0x20] sm:$0xff]
    %v902 = vld [vmem:[%s3 + $0x28] sm:$0xff]
    %v903 = vld [vmem:[%s3 + $0x30] sm:$0xff]
    %v904 = vld [vmem:[%s3 + $0x38] sm:$0xff]
    %v905 = vld [vmem:[%s3 + $0x40] sm:$0xff]
    %v906 = vld [vmem:[%s3 + $0x48] sm:$0xff]
    %v907 = vld [vmem:[%s3 + $0x50] sm:$0xff]
    %v908 = vld [vmem:[%s3 + $0x58] sm:$0xff]
    %v909 = vld [vmem:[%s3 + $0x60] sm:$0xff]
    %v910 = vld [vmem:[%s3 + $0x68] sm:$0xff]
    %v911 = vld [vmem:[%s3 + $0x70] sm:$0xff]
    %v912 = vld [vmem:[%s3 + $0x78] sm:$0xff]
    %v913 = vld [vmem:[%s1 + $0x1] sm:$0xff]
    %v914 = vld [vmem:[%s1 + $0x9] sm:$0xff]
    %v915 = vld [vmem:[%s1 + $0x11] sm:$0xff]
    %v916 = vld [vmem:[%s1 + $0x19] sm:$0xff]
    %v917 = vld [vmem:[%s1 + $0x21] sm:$0xff]
    %v918 = vld [vmem:[%s1 + $0x29] sm:$0xff]
    %v919 = vld [vmem:[%s1 + $0x31] sm:$0xff]
    %v920 = vld [vmem:[%s1 + $0x39] sm:$0xff]
    %v921 = vld [vmem:[%s1 + $0x41] sm:$0xff]
    %v922 = vld [vmem:[%s1 + $0x49] sm:$0xff]
    %v923 = vld [vmem:[%s3 + $0x80] sm:$0xff]
    %v924 = vld [vmem:[%s3 + $0x88] sm:$0xff]
    %v925 = vld [vmem:[%s3 + $0x90] sm:$0xff]
    %v926 = vld [vmem:[%s3 + $0x98] sm:$0xff]
    %v927 = vld [vmem:[%s3 + $0xa0] sm:$0xff]
    %v928 = vld [vmem:[%s3 + $0xa8] sm:$0xff]
    %v929 = vld [vmem:[%s3 + $0xb0] sm:$0xff]
    %v930 = vld [vmem:[%s3 + $0xb8] sm:$0xff]
    %v931 = vld [vmem:[%s3 + $0xc0] sm:$0xff]
    %v932 = vld [vmem:[%s3 + $0xc8] sm:$0xff]
    %v933 = vld [vmem:[%s3 + $0xd0] sm:$0xff]
    %v934 = vld [vmem:[%s3 + $0xd8] sm:$0xff]
    %v935 = vld [vmem:[%s3 + $0xe0] sm:$0xff]
    %v936 = vld [vmem:[%s3 + $0xe8] sm:$0xff]
    %v937 = vld [vmem:[%s3 + $0xf0] sm:$0xff]
    %v938 = vld [vmem:[%s3 + $0xf8] sm:$0xff]
    %939 = vmatprep.subr.mxu0 0.0
    %940 = vmatpush1.msra.mxu0 %v923
    %941 = vmatprep.subr.mxu0 0.0
    %942 = vmatpush1.msra.mxu0 %v924
    %943 = vmatprep.subr.mxu0 0.0
    %944 = vmatpush1.msra.mxu0 %v925
    %945 = vmatprep.subr.mxu0 0.0
    %946 = vmatpush1.msra.mxu0 %v926
    %947 = vmatprep.subr.mxu0 0.0
    %948 = vmatpush1.msra.mxu0 %v927
    %949 = vmatprep.subr.mxu0 0.0
    %950 = vmatpush1.msra.mxu0 %v928
    %951 = vmatprep.subr.mxu0 0.0
    %952 = vmatpush1.msra.mxu0 %v929
    %953 = vmatprep.subr.mxu0 0.0
    %954 = vmatpush1.msra.mxu0 %v930
    %955 = vmatprep.subr.mxu0 0.0
    %956 = vmatpush1.msra.mxu0 %v931
    %957 = vmatprep.subr.mxu0 0.0
    %958 = vmatpush1.msra.mxu0 %v932
    %959 = vmatprep.subr.mxu0 0.0
    %960 = vmatpush1.msra.mxu0 %v933
    %961 = vmatprep.subr.mxu0 0.0
    %962 = vmatpush1.msra.mxu0 %v934
    %963 = vmatprep.subr.mxu0 0.0
    %964 = vmatpush1.msra.mxu0 %v935
    %965 = vmatprep.subr.mxu0 0.0
    %966 = vmatpush1.msra.mxu0 %v936
    %967 = vmatprep.subr.mxu0 0.0
    %968 = vmatpush1.msra.mxu0 %v937
    %969 = vmatprep.subr.mxu0 0.0
    %970 = vmatpush1.msra.mxu0 %v938
    %971 = vmatprep.subr.mxu0 0.0
    %972 = vmatpush1.msra.mxu0 0.0
    %973 = vmatprep.subr.mxu0 0.0
    %974 = vmatpush1.msra.mxu0 0.0
    %975 = vmatprep.subr.mxu0 0.0
    %976 = vmatpush1.msra.mxu0 0.0
    %977 = vmatprep.subr.mxu0 0.0
    %978 = vmatpush1.msra.mxu0 0.0
    %979 = vmatprep.subr.mxu0 0.0
    %980 = vmatpush1.msra.mxu0 0.0
    %981 = vmatprep.subr.mxu0 0.0
    %982 = vmatpush1.msra.mxu0 0.0
    %983 = vmatprep.subr.mxu0 0.0
    %984 = vmatpush1.msra.mxu0 0.0
    %985 = vmatprep.subr.mxu0 0.0
    %986 = vmatpush1.msra.mxu0 0.0
    %987 = vmatprep.subr.mxu0 0.0
    %988 = vmatpush1.msra.mxu0 0.0
    %989 = vmatprep.subr.mxu0 0.0
    %990 = vmatpush1.msra.mxu0 0.0
    %991 = vmatprep.subr.mxu0 0.0
    %992 = vmatpush1.msra.mxu0 0.0
    %993 = vmatprep.subr.mxu0 0.0
    %994 = vmatpush1.msra.mxu0 0.0
    %995 = vmatprep.subr.mxu0 0.0
    %996 = vmatpush1.msra.mxu0 0.0
    %997 = vmatprep.subr.mxu0 0.0
    %998 = vmatpush1.msra.mxu0 0.0
    %999 = vmatprep.subr.mxu0 0.0
    %1000 = vmatpush1.msra.mxu0 0.0
    %1001 = vmatprep.subr.mxu0 0.0
    %1002 = vmatpush1.msra.mxu0 0.0
    %1003 = vmatprep.mubr.f32.mxu0 0.0
    %1004 = vmatmul.mubr.f32.gmra.mrb[0].mxu0 %v913
    %v1005 = vpop.f32.mrb[0].mxu0
    %v1006 = vadd.f32 0.0, %v1005
    %v1007 = vpop.f32.mrb[0].mxu0
    %1008 = vmatprep.mubr.f32.mxu0 0.0
    %1009 = vmatmul.mubr.f32.gmra.mrb[0].mxu0 %v914
    %v1010 = vpop.f32.mrb[0].mxu0
    %v1011 = vadd.f32 0.0, %v1010
    %v1012 = vpop.f32.mrb[0].mxu0
    %1013 = vmatprep.mubr.f32.mxu0 0.0
    %1014 = vmatmul.mubr.f32.gmra.mrb[0].mxu0 %v915
    %v1015 = vpop.f32.mrb[0].mxu0
    %v1016 = vadd.f32 0.0, %v1015
    %v1017 = vpop.f32.mrb[0].mxu0
    %1018 = vmatprep.mubr.f32.mxu0 0.0
    %1019 = vmatmul.mubr.f32.gmra.mrb[0].mxu0 %v916
    %v1020 = vpop.f32.mrb[0].mxu0
    %v1021 = vadd.f32 0.0, %v1020
    %v1022 = vpop.f32.mrb[0].mxu0
    %1023 = vmatprep.mubr.f32.mxu0 0.0
    %1024 = vmatmul.mubr.f32.gmra.mrb[0].mxu0 %v917
    %v1025 = vpop.f32.mrb[0].mxu0
    %v1026 = vadd.f32 0.0, %v1025
    %v1027 = vpop.f32.mrb[0].mxu0
    %1028 = vmatprep.mubr.f32.mxu0 0.0
    %1029 = vmatmul.mubr.f32.gmra.mrb[0].mxu0 %v918
    %v1030 = vpop.f32.mrb[0].mxu0
    %v1031 = vadd.f32 0.0, %v1030
    %v1032 = vpop.f32.mrb[0].mxu0
    %1033 = vmatprep.mubr.f32.mxu0 0.0
    %1034 = vmatmul.mubr.f32.gmra.mrb[0].mxu0 %v919
    %v1035 = vpop.f32.mrb[0].mxu0
    %v1036 = vadd.f32 0.0, %v1035
    %v1037 = vpop.f32.mrb[0].mxu0
    %1038 = vmatprep.mubr.f32.mxu0 0.0
    %1039 = vmatmul.mubr.f32.gmra.mrb[0].mxu0 %v920
    %v1040 = vpop.f32.mrb[0].mxu0
    %v1041 = vadd.f32 0.0, %v1040
    %v1042 = vpop.f32.mrb[0].mxu0
    %1043 = vmatprep.mubr.f32.mxu0 0.0
    %1044 = vmatmul.mubr.f32.gmra.mrb[0].mxu0 %v921
    %v1045 = vpop.f32.mrb[0].mxu0
    %v1046 = vadd.f32 0.0, %v1045
    %v1047 = vpop.f32.mrb[0].mxu0
    %1048 = vmatprep.mubr.f32.mxu0 0.0
    %1049 = vmatmul.mubr.f32.gmra.mrb[0].mxu0 %v922
    %v1050 = vpop.f32.mrb[0].mxu0
    %v1051 = vadd.f32 0.0, %v1050
    %v1052 = vpop.f32.mrb[0].mxu0
    %1053 = vdwg.mxu0
    %1054 = vmatprep.subr.mxu0 0.0
    %1055 = vmatpush1.msra.mxu0 %v897
    %1056 = vmatprep.subr.mxu0 0.0
    %1057 = vmatpush1.msra.mxu0 %v898
    %1058 = vmatprep.subr.mxu0 0.0
    %1059 = vmatpush1.msra.mxu0 %v899
    %1060 = vmatprep.subr.mxu0 0.0
    %1061 = vmatpush1.msra.mxu0 %v900
    %1062 = vmatprep.subr.mxu0 0.0
    %1063 = vmatpush1.msra.mxu0 %v901
    %1064 = vmatprep.subr.mxu0 0.0
    %1065 = vmatpush1.msra.mxu0 %v902
    %1066 = vmatprep.subr.mxu0 0.0
    %1067 = vmatpush1.msra.mxu0 %v903
    %1068 = vmatprep.subr.mxu0 0.0
    %1069 = vmatpush1.msra.mxu0 %v904
    %1070 = vmatprep.subr.mxu0 0.0
    %1071 = vmatpush1.msra.mxu0 %v905
    %1072 = vmatprep.subr.mxu0 0.0
    %1073 = vmatpush1.msra.mxu0 %v906
    %1074 = vmatprep.subr.mxu0 0.0
    %1075 = vmatpush1.msra.mxu0 %v907
    %1076 = vmatprep.subr.mxu0 0.0
    %1077 = vmatpush1.msra.mxu0 %v908
    %1078 = vmatprep.subr.mxu0 0.0
    %1079 = vmatpush1.msra.mxu0 %v909
    %1080 = vmatprep.subr.mxu0 0.0
    %1081 = vmatpush1.msra.mxu0 %v910
    %1082 = vmatprep.subr.mxu0 0.0
    %1083 = vmatpush1.msra.mxu0 %v911
    %1084 = vmatprep.subr.mxu0 0.0
    %1085 = vmatpush1.msra.mxu0 %v912
    %1086 = vmatprep.subr.mxu0 0.0
    %1087 = vmatpush1.msra.mxu0 0.0
    %1088 = vmatprep.subr.mxu0 0.0
    %1089 = vmatpush1.msra.mxu0 0.0
    %1090 = vmatprep.subr.mxu0 0.0
    %1091 = vmatpush1.msra.mxu0 0.0
    %1092 = vmatprep.subr.mxu0 0.0
    %1093 = vmatpush1.msra.mxu0 0.0
    %1094 = vmatprep.subr.mxu0 0.0
    %1095 = vmatpush1.msra.mxu0 0.0
    %1096 = vmatprep.subr.mxu0 0.0
    %1097 = vmatpush1.msra.mxu0 0.0
    %1098 = vmatprep.subr.mxu0 0.0
    %1099 = vmatpush1.msra.mxu0 0.0
    %1100 = vmatprep.subr.mxu0 0.0
    %1101 = vmatpush1.msra.mxu0 0.0
    %1102 = vmatprep.subr.mxu0 0.0
    %1103 = vmatpush1.msra.mxu0 0.0
    %1104 = vmatprep.subr.mxu0 0.0
    %1105 = vmatpush1.msra.mxu0 0.0
    %1106 = vmatprep.subr.mxu0 0.0
    %1107 = vmatpush1.msra.mxu0 0.0
    %1108 = vmatprep.subr.mxu0 0.0
    %1109 = vmatpush1.msra.mxu0 0.0
    %1110 = vmatprep.subr.mxu0 0.0
    %1111 = vmatpush1.msra.mxu0 0.0
    %1112 = vmatprep.subr.mxu0 0.0
    %1113 = vmatpush1.msra.mxu0 0.0
    %1114 = vmatprep.subr.mxu0 0.0
    %1115 = vmatpush1.msra.mxu0 0.0
    %1116 = vmatprep.subr.mxu0 0.0
    %1117 = vmatpush1.msra.mxu0 0.0
    %1118 = vmatprep.mubr.f32.mxu0 0.0
    %1119 = vmatmul.mubr.f32.gmra.mrb[0].mxu0 %v887
    %v1120 = vpop.f32.mrb[0].mxu0
    %v1121 = vadd.f32 %v1006, %v1120
    %v1122 = vpop.f32.mrb[0].mxu0
    %1123 = vmatprep.mubr.f32.mxu0 0.0
    %1124 = vmatmul.mubr.f32.gmra.mrb[0].mxu0 %v888
    %v1125 = vpop.f32.mrb[0].mxu0
    %v1126 = vadd.f32 %v1011, %v1125
    %v1127 = vpop.f32.mrb[0].mxu0
    %1128 = vmatprep.mubr.f32.mxu0 0.0
    %1129 = vmatmul.mubr.f32.gmra.mrb[0].mxu0 %v889
    %v1130 = vpop.f32.mrb[0].mxu0
    %v1131 = vadd.f32 %v1016, %v1130
    %v1132 = vpop.f32.mrb[0].mxu0
    %1133 = vmatprep.mubr.f32.mxu0 0.0
    %1134 = vmatmul.mubr.f32.gmra.mrb[0].mxu0 %v890
    %v1135 = vpop.f32.mrb[0].mxu0
    %v1136 = vadd.f32 %v1021, %v1135
    %v1137 = vpop.f32.mrb[0].mxu0
    %1138 = vmatprep.mubr.f32.mxu0 0.0
    %1139 = vmatmul.mubr.f32.gmra.mrb[0].mxu0 %v891
    %v1140 = vpop.f32.mrb[0].mxu0
    %v1141 = vadd.f32 %v1026, %v1140
    %v1142 = vpop.f32.mrb[0].mxu0
    %1143 = vmatprep.mubr.f32.mxu0 0.0
    %1144 = vmatmul.mubr.f32.gmra.mrb[0].mxu0 %v892
    %v1145 = vpop.f32.mrb[0].mxu0
    %v1146 = vadd.f32 %v1031, %v1145
    %v1147 = vpop.f32.mrb[0].mxu0
    %1148 = vmatprep.mubr.f32.mxu0 0.0
    %1149 = vmatmul.mubr.f32.gmra.mrb[0].mxu0 %v893
    %v1150 = vpop.f32.mrb[0].mxu0
    %v1151 = vadd.f32 %v1036, %v1150
    %v1152 = vpop.f32.mrb[0].mxu0
    %1153 = vmatprep.mubr.f32.mxu0 0.0
    %1154 = vmatmul.mubr.f32.gmra.mrb[0].mxu0 %v894
    %v1155 = vpop.f32.mrb[0].mxu0
    %v1156 = vadd.f32 %v1041, %v1155
    %v1157 = vpop.f32.mrb[0].mxu0
    %1158 = vmatprep.mubr.f32.mxu0 0.0
    %1159 = vmatmul.mubr.f32.gmra.mrb[0].mxu0 %v895
    %v1160 = vpop.f32.mrb[0].mxu0
    %v1161 = vadd.f32 %v1046, %v1160
    %v1162 = vpop.f32.mrb[0].mxu0
    %1163 = vmatprep.mubr.f32.mxu0 0.0
    %1164 = vmatmul.mubr.f32.gmra.mrb[0].mxu0 %v896
    %v1165 = vpop.f32.mrb[0].mxu0
    %v1166 = vadd.f32 %v1051, %v1165
    %v1167 = vpop.f32.mrb[0].mxu0
    %1168 = vdwg.mxu0
    %v1169 = vld [vmem:[%s1 + $0x2] sm:$0xff]
    %v1170 = vld [vmem:[%s1 + $0xa] sm:$0xff]
    %v1171 = vld [vmem:[%s1 + $0x12] sm:$0xff]
    %v1172 = vld [vmem:[%s1 + $0x1a] sm:$0xff]
    %v1173 = vld [vmem:[%s1 + $0x22] sm:$0xff]
    %v1174 = vld [vmem:[%s1 + $0x2a] sm:$0xff]
    %v1175 = vld [vmem:[%s1 + $0x32] sm:$0xff]
    %v1176 = vld [vmem:[%s1 + $0x3a] sm:$0xff]
    %v1177 = vld [vmem:[%s1 + $0x42] sm:$0xff]
    %v1178 = vld [vmem:[%s1 + $0x4a] sm:$0xff]
    %v1179 = vld [vmem:[%s3 + $0x100] sm:$0xff]
    %v1180 = vld [vmem:[%s3 + $0x108] sm:$0xff]
    %v1181 = vld [vmem:[%s3 + $0x110] sm:$0xff]
    %v1182 = vld [vmem:[%s3 + $0x118] sm:$0xff]
    %v1183 = vld [vmem:[%s3 + $0x120] sm:$0xff]
    %v1184 = vld [vmem:[%s3 + $0x128] sm:$0xff]
    %v1185 = vld [vmem:[%s3 + $0x130] sm:$0xff]
    %v1186 = vld [vmem:[%s3 + $0x138] sm:$0xff]
    %v1187 = vld [vmem:[%s3 + $0x140] sm:$0xff]
    %v1188 = vld [vmem:[%s3 + $0x148] sm:$0xff]
    %v1189 = vld [vmem:[%s3 + $0x150] sm:$0xff]
    %v1190 = vld [vmem:[%s3 + $0x158] sm:$0xff]
    %v1191 = vld [vmem:[%s3 + $0x160] sm:$0xff]
    %v1192 = vld [vmem:[%s3 + $0x168] sm:$0xff]
    %v1193 = vld [vmem:[%s3 + $0x170] sm:$0xff]
    %v1194 = vld [vmem:[%s3 + $0x178] sm:$0xff]
    %1195 = vmatprep.subr.mxu0 0.0
    %1196 = vmatpush1.msra.mxu0 %v1179
    %1197 = vmatprep.subr.mxu0 0.0
    %1198 = vmatpush1.msra.mxu0 %v1180
    %1199 = vmatprep.subr.mxu0 0.0
    %1200 = vmatpush1.msra.mxu0 %v1181
    %1201 = vmatprep.subr.mxu0 0.0
    %1202 = vmatpush1.msra.mxu0 %v1182
    %1203 = vmatprep.subr.mxu0 0.0
    %1204 = vmatpush1.msra.mxu0 %v1183
    %1205 = vmatprep.subr.mxu0 0.0
    %1206 = vmatpush1.msra.mxu0 %v1184
    %1207 = vmatprep.subr.mxu0 0.0
    %1208 = vmatpush1.msra.mxu0 %v1185
    %1209 = vmatprep.subr.mxu0 0.0
    %1210 = vmatpush1.msra.mxu0 %v1186
    %1211 = vmatprep.subr.mxu0 0.0
    %1212 = vmatpush1.msra.mxu0 %v1187
    %1213 = vmatprep.subr.mxu0 0.0
    %1214 = vmatpush1.msra.mxu0 %v1188
    %1215 = vmatprep.subr.mxu0 0.0
    %1216 = vmatpush1.msra.mxu0 %v1189
    %1217 = vmatprep.subr.mxu0 0.0
    %1218 = vmatpush1.msra.mxu0 %v1190
    %1219 = vmatprep.subr.mxu0 0.0
    %1220 = vmatpush1.msra.mxu0 %v1191
    %1221 = vmatprep.subr.mxu0 0.0
    %1222 = vmatpush1.msra.mxu0 %v1192
    %1223 = vmatprep.subr.mxu0 0.0
    %1224 = vmatpush1.msra.mxu0 %v1193
    %1225 = vmatprep.subr.mxu0 0.0
    %1226 = vmatpush1.msra.mxu0 %v1194
    %1227 = vmatprep.subr.mxu0 0.0
    %1228 = vmatpush1.msra.mxu0 0.0
    %1229 = vmatprep.subr.mxu0 0.0
    %1230 = vmatpush1.msra.mxu0 0.0
    %1231 = vmatprep.subr.mxu0 0.0
    %1232 = vmatpush1.msra.mxu0 0.0
    %1233 = vmatprep.subr.mxu0 0.0
    %1234 = vmatpush1.msra.mxu0 0.0
    %1235 = vmatprep.subr.mxu0 0.0
    %1236 = vmatpush1.msra.mxu0 0.0
    %1237 = vmatprep.subr.mxu0 0.0
    %1238 = vmatpush1.msra.mxu0 0.0
    %1239 = vmatprep.subr.mxu0 0.0
    %1240 = vmatpush1.msra.mxu0 0.0
    %1241 = vmatprep.subr.mxu0 0.0
    %1242 = vmatpush1.msra.mxu0 0.0
    %1243 = vmatprep.subr.mxu0 0.0
    %1244 = vmatpush1.msra.mxu0 0.0
    %1245 = vmatprep.subr.mxu0 0.0
    %1246 = vmatpush1.msra.mxu0 0.0
    %1247 = vmatprep.subr.mxu0 0.0
    %1248 = vmatpush1.msra.mxu0 0.0
    %1249 = vmatprep.subr.mxu0 0.0
    %1250 = vmatpush1.msra.mxu0 0.0
    %1251 = vmatprep.subr.mxu0 0.0
    %1252 = vmatpush1.msra.mxu0 0.0
    %1253 = vmatprep.subr.mxu0 0.0
    %1254 = vmatpush1.msra.mxu0 0.0
    %1255 = vmatprep.subr.mxu0 0.0
    %1256 = vmatpush1.msra.mxu0 0.0
    %1257 = vmatprep.subr.mxu0 0.0
    %1258 = vmatpush1.msra.mxu0 0.0
    %1259 = vmatprep.mubr.f32.mxu0 0.0
    %1260 = vmatmul.mubr.f32.gmra.mrb[0].mxu0 %v1169
    %v1261 = vpop.f32.mrb[0].mxu0
    %v1262 = vadd.f32 0.0, %v1261
    %v1263 = vpop.f32.mrb[0].mxu0
    %1264 = vmatprep.mubr.f32.mxu0 0.0
    %1265 = vmatmul.mubr.f32.gmra.mrb[0].mxu0 %v1170
    %v1266 = vpop.f32.mrb[0].mxu0
    %v1267 = vadd.f32 0.0, %v1266
    %v1268 = vpop.f32.mrb[0].mxu0
    %1269 = vmatprep.mubr.f32.mxu0 0.0
    %1270 = vmatmul.mubr.f32.gmra.mrb[0].mxu0 %v1171
    %v1271 = vpop.f32.mrb[0].mxu0
    %v1272 = vadd.f32 0.0, %v1271
    %v1273 = vpop.f32.mrb[0].mxu0
    %1274 = vmatprep.mubr.f32.mxu0 0.0
    %1275 = vmatmul.mubr.f32.gmra.mrb[0].mxu0 %v1172
    %v1276 = vpop.f32.mrb[0].mxu0
    %v1277 = vadd.f32 0.0, %v1276
    %v1278 = vpop.f32.mrb[0].mxu0
    %1279 = vmatprep.mubr.f32.mxu0 0.0
    %1280 = vmatmul.mubr.f32.gmra.mrb[0].mxu0 %v1173
    %v1281 = vpop.f32.mrb[0].mxu0
    %v1282 = vadd.f32 0.0, %v1281
    %v1283 = vpop.f32.mrb[0].mxu0
    %1284 = vmatprep.mubr.f32.mxu0 0.0
    %1285 = vmatmul.mubr.f32.gmra.mrb[0].mxu0 %v1174
    %v1286 = vpop.f32.mrb[0].mxu0
    %v1287 = vadd.f32 0.0, %v1286
    %v1288 = vpop.f32.mrb[0].mxu0
    %1289 = vmatprep.mubr.f32.mxu0 0.0
    %1290 = vmatmul.mubr.f32.gmra.mrb[0].mxu0 %v1175
    %v1291 = vpop.f32.mrb[0].mxu0
    %v1292 = vadd.f32 0.0, %v1291
    %v1293 = vpop.f32.mrb[0].mxu0
    %1294 = vmatprep.mubr.f32.mxu0 0.0
    %1295 = vmatmul.mubr.f32.gmra.mrb[0].mxu0 %v1176
    %v1296 = vpop.f32.mrb[0].mxu0
    %v1297 = vadd.f32 0.0, %v1296
    %v1298 = vpop.f32.mrb[0].mxu0
    %1299 = vmatprep.mubr.f32.mxu0 0.0
    %1300 = vmatmul.mubr.f32.gmra.mrb[0].mxu0 %v1177
    %v1301 = vpop.f32.mrb[0].mxu0
    %v1302 = vadd.f32 0.0, %v1301
    %v1303 = vpop.f32.mrb[0].mxu0
    %1304 = vmatprep.mubr.f32.mxu0 0.0
    %1305 = vmatmul.mubr.f32.gmra.mrb[0].mxu0 %v1178
    %v1306 = vpop.f32.mrb[0].mxu0
    %v1307 = vadd.f32 0.0, %v1306
    %v1308 = vpop.f32.mrb[0].mxu0
    %1309 = vdwg.mxu0
    %v1310 = vadd.f32 %v1121, %v1262
    %v1311 = vadd.f32 %v1126, %v1267
    %v1312 = vadd.f32 %v1131, %v1272
    %v1313 = vadd.f32 %v1136, %v1277
    %v1314 = vadd.f32 %v1141, %v1282
    %v1315 = vadd.f32 %v1146, %v1287
    %v1316 = vadd.f32 %v1151, %v1292
    %v1317 = vadd.f32 %v1156, %v1297
    %v1318 = vadd.f32 %v1161, %v1302
    %v1319 = vadd.f32 %v1166, %v1307
    %v1320 = vld [vmem:[%s1 + $0x3] sm:$0xff]
    %v1321 = vld [vmem:[%s1 + $0xb] sm:$0xff]
    %v1322 = vld [vmem:[%s1 + $0x13] sm:$0xff]
    %v1323 = vld [vmem:[%s1 + $0x1b] sm:$0xff]
    %v1324 = vld [vmem:[%s1 + $0x23] sm:$0xff]
    %v1325 = vld [vmem:[%s1 + $0x2b] sm:$0xff]
    %v1326 = vld [vmem:[%s1 + $0x33] sm:$0xff]
    %v1327 = vld [vmem:[%s1 + $0x3b] sm:$0xff]
    %v1328 = vld [vmem:[%s1 + $0x43] sm:$0xff]
    %v1329 = vld [vmem:[%s1 + $0x4b] sm:$0xff]
    %v1330 = vld [vmem:[%s3 + $0x180] sm:$0xff]
    %v1331 = vld [vmem:[%s3 + $0x188] sm:$0xff]
    %v1332 = vld [vmem:[%s3 + $0x190] sm:$0xff]
    %v1333 = vld [vmem:[%s3 + $0x198] sm:$0xff]
    %v1334 = vld [vmem:[%s3 + $0x1a0] sm:$0xff]
    %v1335 = vld [vmem:[%s3 + $0x1a8] sm:$0xff]
    %v1336 = vld [vmem:[%s3 + $0x1b0] sm:$0xff]
    %v1337 = vld [vmem:[%s3 + $0x1b8] sm:$0xff]
    %v1338 = vld [vmem:[%s3 + $0x1c0] sm:$0xff]
    %v1339 = vld [vmem:[%s3 + $0x1c8] sm:$0xff]
    %v1340 = vld [vmem:[%s3 + $0x1d0] sm:$0xff]
    %v1341 = vld [vmem:[%s3 + $0x1d8] sm:$0xff]
    %v1342 = vld [vmem:[%s3 + $0x1e0] sm:$0xff]
    %v1343 = vld [vmem:[%s3 + $0x1e8] sm:$0xff]
    %v1344 = vld [vmem:[%s3 + $0x1f0] sm:$0xff]
    %v1345 = vld [vmem:[%s3 + $0x1f8] sm:$0xff]
    %1346 = vmatprep.subr.mxu0 0.0
    %1347 = vmatpush1.msra.mxu0 %v1330
    %1348 = vmatprep.subr.mxu0 0.0
    %1349 = vmatpush1.msra.mxu0 %v1331
    %1350 = vmatprep.subr.mxu0 0.0
    %1351 = vmatpush1.msra.mxu0 %v1332
    %1352 = vmatprep.subr.mxu0 0.0
    %1353 = vmatpush1.msra.mxu0 %v1333
    %1354 = vmatprep.subr.mxu0 0.0
    %1355 = vmatpush1.msra.mxu0 %v1334
    %1356 = vmatprep.subr.mxu0 0.0
    %1357 = vmatpush1.msra.mxu0 %v1335
    %1358 = vmatprep.subr.mxu0 0.0
    %1359 = vmatpush1.msra.mxu0 %v1336
    %1360 = vmatprep.subr.mxu0 0.0
    %1361 = vmatpush1.msra.mxu0 %v1337
    %1362 = vmatprep.subr.mxu0 0.0
    %1363 = vmatpush1.msra.mxu0 %v1338
    %1364 = vmatprep.subr.mxu0 0.0
    %1365 = vmatpush1.msra.mxu0 %v1339
    %1366 = vmatprep.subr.mxu0 0.0
    %1367 = vmatpush1.msra.mxu0 %v1340
    %1368 = vmatprep.subr.mxu0 0.0
    %1369 = vmatpush1.msra.mxu0 %v1341
    %1370 = vmatprep.subr.mxu0 0.0
    %1371 = vmatpush1.msra.mxu0 %v1342
    %1372 = vmatprep.subr.mxu0 0.0
    %1373 = vmatpush1.msra.mxu0 %v1343
    %1374 = vmatprep.subr.mxu0 0.0
    %1375 = vmatpush1.msra.mxu0 %v1344
    %1376 = vmatprep.subr.mxu0 0.0
    %1377 = vmatpush1.msra.mxu0 %v1345
    %1378 = vmatprep.subr.mxu0 0.0
    %1379 = vmatpush1.msra.mxu0 0.0
    %1380 = vmatprep.subr.mxu0 0.0
    %1381 = vmatpush1.msra.mxu0 0.0
    %1382 = vmatprep.subr.mxu0 0.0
    %1383 = vmatpush1.msra.mxu0 0.0
    %1384 = vmatprep.subr.mxu0 0.0
    %1385 = vmatpush1.msra.mxu0 0.0
    %1386 = vmatprep.subr.mxu0 0.0
    %1387 = vmatpush1.msra.mxu0 0.0
    %1388 = vmatprep.subr.mxu0 0.0
    %1389 = vmatpush1.msra.mxu0 0.0
    %1390 = vmatprep.subr.mxu0 0.0
    %1391 = vmatpush1.msra.mxu0 0.0
    %1392 = vmatprep.subr.mxu0 0.0
    %1393 = vmatpush1.msra.mxu0 0.0
    %1394 = vmatprep.subr.mxu0 0.0
    %1395 = vmatpush1.msra.mxu0 0.0
    %1396 = vmatprep.subr.mxu0 0.0
    %1397 = vmatpush1.msra.mxu0 0.0
    %1398 = vmatprep.subr.mxu0 0.0
    %1399 = vmatpush1.msra.mxu0 0.0
    %1400 = vmatprep.subr.mxu0 0.0
    %1401 = vmatpush1.msra.mxu0 0.0
    %1402 = vmatprep.subr.mxu0 0.0
    %1403 = vmatpush1.msra.mxu0 0.0
    %1404 = vmatprep.subr.mxu0 0.0
    %1405 = vmatpush1.msra.mxu0 0.0
    %1406 = vmatprep.subr.mxu0 0.0
    %1407 = vmatpush1.msra.mxu0 0.0
    %1408 = vmatprep.subr.mxu0 0.0
    %1409 = vmatpush1.msra.mxu0 0.0
    %1410 = vmatprep.mubr.f32.mxu0 0.0
    %1411 = vmatmul.mubr.f32.gmra.mrb[0].mxu0 %v1320
    %v1412 = vpop.f32.mrb[0].mxu0
    %v1413 = vadd.f32 0.0, %v1412
    %v1414 = vpop.f32.mrb[0].mxu0
    %1415 = vmatprep.mubr.f32.mxu0 0.0
    %1416 = vmatmul.mubr.f32.gmra.mrb[0].mxu0 %v1321
    %v1417 = vpop.f32.mrb[0].mxu0
    %v1418 = vadd.f32 0.0, %v1417
    %v1419 = vpop.f32.mrb[0].mxu0
    %1420 = vmatprep.mubr.f32.mxu0 0.0
    %1421 = vmatmul.mubr.f32.gmra.mrb[0].mxu0 %v1322
    %v1422 = vpop.f32.mrb[0].mxu0
    %v1423 = vadd.f32 0.0, %v1422
    %v1424 = vpop.f32.mrb[0].mxu0
    %1425 = vmatprep.mubr.f32.mxu0 0.0
    %1426 = vmatmul.mubr.f32.gmra.mrb[0].mxu0 %v1323
    %v1427 = vpop.f32.mrb[0].mxu0
    %v1428 = vadd.f32 0.0, %v1427
    %v1429 = vpop.f32.mrb[0].mxu0
    %1430 = vmatprep.mubr.f32.mxu0 0.0
    %1431 = vmatmul.mubr.f32.gmra.mrb[0].mxu0 %v1324
    %v1432 = vpop.f32.mrb[0].mxu0
    %v1433 = vadd.f32 0.0, %v1432
    %v1434 = vpop.f32.mrb[0].mxu0
    %1435 = vmatprep.mubr.f32.mxu0 0.0
    %1436 = vmatmul.mubr.f32.gmra.mrb[0].mxu0 %v1325
    %v1437 = vpop.f32.mrb[0].mxu0
    %v1438 = vadd.f32 0.0, %v1437
    %v1439 = vpop.f32.mrb[0].mxu0
    %1440 = vmatprep.mubr.f32.mxu0 0.0
    %1441 = vmatmul.mubr.f32.gmra.mrb[0].mxu0 %v1326
    %v1442 = vpop.f32.mrb[0].mxu0
    %v1443 = vadd.f32 0.0, %v1442
    %v1444 = vpop.f32.mrb[0].mxu0
    %1445 = vmatprep.mubr.f32.mxu0 0.0
    %1446 = vmatmul.mubr.f32.gmra.mrb[0].mxu0 %v1327
    %v1447 = vpop.f32.mrb[0].mxu0
    %v1448 = vadd.f32 0.0, %v1447
    %v1449 = vpop.f32.mrb[0].mxu0
    %1450 = vmatprep.mubr.f32.mxu0 0.0
    %1451 = vmatmul.mubr.f32.gmra.mrb[0].mxu0 %v1328
    %v1452 = vpop.f32.mrb[0].mxu0
    %v1453 = vadd.f32 0.0, %v1452
    %v1454 = vpop.f32.mrb[0].mxu0
    %1455 = vmatprep.mubr.f32.mxu0 0.0
    %1456 = vmatmul.mubr.f32.gmra.mrb[0].mxu0 %v1329
    %v1457 = vpop.f32.mrb[0].mxu0
    %v1458 = vadd.f32 0.0, %v1457
    %v1459 = vpop.f32.mrb[0].mxu0
    %1460 = vdwg.mxu0
    %v1461 = vadd.f32 %v1310, %v1413
    %v1462 = vadd.f32 %v1311, %v1418
    %v1463 = vadd.f32 %v1312, %v1423
    %v1464 = vadd.f32 %v1313, %v1428
    %v1465 = vadd.f32 %v1314, %v1433
    %v1466 = vadd.f32 %v1315, %v1438
    %v1467 = vadd.f32 %v1316, %v1443
    %v1468 = vadd.f32 %v1317, %v1448
    %v1469 = vadd.f32 %v1318, %v1453
    %v1470 = vadd.f32 %v1319, %v1458
    %v1471 = vld [vmem:[%s1 + $0x4] sm:$0xff]
    %v1472 = vld [vmem:[%s1 + $0xc] sm:$0xff]
    %v1473 = vld [vmem:[%s1 + $0x14] sm:$0xff]
    %v1474 = vld [vmem:[%s1 + $0x1c] sm:$0xff]
    %v1475 = vld [vmem:[%s1 + $0x24] sm:$0xff]
    %v1476 = vld [vmem:[%s1 + $0x2c] sm:$0xff]
    %v1477 = vld [vmem:[%s1 + $0x34] sm:$0xff]
    %v1478 = vld [vmem:[%s1 + $0x3c] sm:$0xff]
    %v1479 = vld [vmem:[%s1 + $0x44] sm:$0xff]
    %v1480 = vld [vmem:[%s1 + $0x4c] sm:$0xff]
    %v1481 = vld [vmem:[%s3 + $0x200] sm:$0xff]
    %v1482 = vld [vmem:[%s3 + $0x208] sm:$0xff]
    %v1483 = vld [vmem:[%s3 + $0x210] sm:$0xff]
    %v1484 = vld [vmem:[%s3 + $0x218] sm:$0xff]
    %v1485 = vld [vmem:[%s3 + $0x220] sm:$0xff]
    %v1486 = vld [vmem:[%s3 + $0x228] sm:$0xff]
    %v1487 = vld [vmem:[%s3 + $0x230] sm:$0xff]
    %v1488 = vld [vmem:[%s3 + $0x238] sm:$0xff]
    %v1489 = vld [vmem:[%s3 + $0x240] sm:$0xff]
    %v1490 = vld [vmem:[%s3 + $0x248] sm:$0xff]
    %v1491 = vld [vmem:[%s3 + $0x250] sm:$0xff]
    %v1492 = vld [vmem:[%s3 + $0x258] sm:$0xff]
    %v1493 = vld [vmem:[%s3 + $0x260] sm:$0xff]
    %v1494 = vld [vmem:[%s3 + $0x268] sm:$0xff]
    %v1495 = vld [vmem:[%s3 + $0x270] sm:$0xff]
    %v1496 = vld [vmem:[%s3 + $0x278] sm:$0xff]
    %1497 = vmatprep.subr.mxu0 0.0
    %1498 = vmatpush1.msra.mxu0 %v1481
    %1499 = vmatprep.subr.mxu0 0.0
    %1500 = vmatpush1.msra.mxu0 %v1482
    %1501 = vmatprep.subr.mxu0 0.0
    %1502 = vmatpush1.msra.mxu0 %v1483
    %1503 = vmatprep.subr.mxu0 0.0
    %1504 = vmatpush1.msra.mxu0 %v1484
    %1505 = vmatprep.subr.mxu0 0.0
    %1506 = vmatpush1.msra.mxu0 %v1485
    %1507 = vmatprep.subr.mxu0 0.0
    %1508 = vmatpush1.msra.mxu0 %v1486
    %1509 = vmatprep.subr.mxu0 0.0
    %1510 = vmatpush1.msra.mxu0 %v1487
    %1511 = vmatprep.subr.mxu0 0.0
    %1512 = vmatpush1.msra.mxu0 %v1488
    %1513 = vmatprep.subr.mxu0 0.0
    %1514 = vmatpush1.msra.mxu0 %v1489
    %1515 = vmatprep.subr.mxu0 0.0
    %1516 = vmatpush1.msra.mxu0 %v1490
    %1517 = vmatprep.subr.mxu0 0.0
    %1518 = vmatpush1.msra.mxu0 %v1491
    %1519 = vmatprep.subr.mxu0 0.0
    %1520 = vmatpush1.msra.mxu0 %v1492
    %1521 = vmatprep.subr.mxu0 0.0
    %1522 = vmatpush1.msra.mxu0 %v1493
    %1523 = vmatprep.subr.mxu0 0.0
    %1524 = vmatpush1.msra.mxu0 %v1494
    %1525 = vmatprep.subr.mxu0 0.0
    %1526 = vmatpush1.msra.mxu0 %v1495
    %1527 = vmatprep.subr.mxu0 0.0
    %1528 = vmatpush1.msra.mxu0 %v1496
    %1529 = vmatprep.subr.mxu0 0.0
    %1530 = vmatpush1.msra.mxu0 0.0
    %1531 = vmatprep.subr.mxu0 0.0
    %1532 = vmatpush1.msra.mxu0 0.0
    %1533 = vmatprep.subr.mxu0 0.0
    %1534 = vmatpush1.msra.mxu0 0.0
    %1535 = vmatprep.subr.mxu0 0.0
    %1536 = vmatpush1.msra.mxu0 0.0
    %1537 = vmatprep.subr.mxu0 0.0
    %1538 = vmatpush1.msra.mxu0 0.0
    %1539 = vmatprep.subr.mxu0 0.0
    %1540 = vmatpush1.msra.mxu0 0.0
    %1541 = vmatprep.subr.mxu0 0.0
    %1542 = vmatpush1.msra.mxu0 0.0
    %1543 = vmatprep.subr.mxu0 0.0
    %1544 = vmatpush1.msra.mxu0 0.0
    %1545 = vmatprep.subr.mxu0 0.0
    %1546 = vmatpush1.msra.mxu0 0.0
    %1547 = vmatprep.subr.mxu0 0.0
    %1548 = vmatpush1.msra.mxu0 0.0
    %1549 = vmatprep.subr.mxu0 0.0
    %1550 = vmatpush1.msra.mxu0 0.0
    %1551 = vmatprep.subr.mxu0 0.0
    %1552 = vmatpush1.msra.mxu0 0.0
    %1553 = vmatprep.subr.mxu0 0.0
    %1554 = vmatpush1.msra.mxu0 0.0
    %1555 = vmatprep.subr.mxu0 0.0
    %1556 = vmatpush1.msra.mxu0 0.0
    %1557 = vmatprep.subr.mxu0 0.0
    %1558 = vmatpush1.msra.mxu0 0.0
    %1559 = vmatprep.subr.mxu0 0.0
    %1560 = vmatpush1.msra.mxu0 0.0
    %1561 = vmatprep.mubr.f32.mxu0 0.0
    %1562 = vmatmul.mubr.f32.gmra.mrb[0].mxu0 %v1471
    %v1563 = vpop.f32.mrb[0].mxu0
    %v1564 = vadd.f32 0.0, %v1563
    %v1565 = vpop.f32.mrb[0].mxu0
    %1566 = vmatprep.mubr.f32.mxu0 0.0
    %1567 = vmatmul.mubr.f32.gmra.mrb[0].mxu0 %v1472
    %v1568 = vpop.f32.mrb[0].mxu0
    %v1569 = vadd.f32 0.0, %v1568
    %v1570 = vpop.f32.mrb[0].mxu0
    %1571 = vmatprep.mubr.f32.mxu0 0.0
    %1572 = vmatmul.mubr.f32.gmra.mrb[0].mxu0 %v1473
    %v1573 = vpop.f32.mrb[0].mxu0
    %v1574 = vadd.f32 0.0, %v1573
    %v1575 = vpop.f32.mrb[0].mxu0
    %1576 = vmatprep.mubr.f32.mxu0 0.0
    %1577 = vmatmul.mubr.f32.gmra.mrb[0].mxu0 %v1474
    %v1578 = vpop.f32.mrb[0].mxu0
    %v1579 = vadd.f32 0.0, %v1578
    %v1580 = vpop.f32.mrb[0].mxu0
    %1581 = vmatprep.mubr.f32.mxu0 0.0
    %1582 = vmatmul.mubr.f32.gmra.mrb[0].mxu0 %v1475
    %v1583 = vpop.f32.mrb[0].mxu0
    %v1584 = vadd.f32 0.0, %v1583
    %v1585 = vpop.f32.mrb[0].mxu0
    %1586 = vmatprep.mubr.f32.mxu0 0.0
    %1587 = vmatmul.mubr.f32.gmra.mrb[0].mxu0 %v1476
    %v1588 = vpop.f32.mrb[0].mxu0
    %v1589 = vadd.f32 0.0, %v1588
    %v1590 = vpop.f32.mrb[0].mxu0
    %1591 = vmatprep.mubr.f32.mxu0 0.0
    %1592 = vmatmul.mubr.f32.gmra.mrb[0].mxu0 %v1477
    %v1593 = vpop.f32.mrb[0].mxu0
    %v1594 = vadd.f32 0.0, %v1593
    %v1595 = vpop.f32.mrb[0].mxu0
    %1596 = vmatprep.mubr.f32.mxu0 0.0
    %1597 = vmatmul.mubr.f32.gmra.mrb[0].mxu0 %v1478
    %v1598 = vpop.f32.mrb[0].mxu0
    %v1599 = vadd.f32 0.0, %v1598
    %v1600 = vpop.f32.mrb[0].mxu0
    %1601 = vmatprep.mubr.f32.mxu0 0.0
    %1602 = vmatmul.mubr.f32.gmra.mrb[0].mxu0 %v1479
    %v1603 = vpop.f32.mrb[0].mxu0
    %v1604 = vadd.f32 0.0, %v1603
    %v1605 = vpop.f32.mrb[0].mxu0
    %1606 = vmatprep.mubr.f32.mxu0 0.0
    %1607 = vmatmul.mubr.f32.gmra.mrb[0].mxu0 %v1480
    %v1608 = vpop.f32.mrb[0].mxu0
    %v1609 = vadd.f32 0.0, %v1608
    %v1610 = vpop.f32.mrb[0].mxu0
    %1611 = vdwg.mxu0
    %v1612 = vadd.f32 %v1461, %v1564
    %v1613 = vadd.f32 %v1462, %v1569
    %v1614 = vadd.f32 %v1463, %v1574
    %v1615 = vadd.f32 %v1464, %v1579
    %v1616 = vadd.f32 %v1465, %v1584
    %v1617 = vadd.f32 %v1466, %v1589
    %v1618 = vadd.f32 %v1467, %v1594
    %v1619 = vadd.f32 %v1468, %v1599
    %v1620 = vadd.f32 %v1469, %v1604
    %v1621 = vadd.f32 %v1470, %v1609
    %v1622 = vld [vmem:[%s1 + $0x5] sm:$0xff]
    %v1623 = vld [vmem:[%s1 + $0xd] sm:$0xff]
    %v1624 = vld [vmem:[%s1 + $0x15] sm:$0xff]
    %v1625 = vld [vmem:[%s1 + $0x1d] sm:$0xff]
    %v1626 = vld [vmem:[%s1 + $0x25] sm:$0xff]
    %v1627 = vld [vmem:[%s1 + $0x2d] sm:$0xff]
    %v1628 = vld [vmem:[%s1 + $0x35] sm:$0xff]
    %v1629 = vld [vmem:[%s1 + $0x3d] sm:$0xff]
    %v1630 = vld [vmem:[%s1 + $0x45] sm:$0xff]
    %v1631 = vld [vmem:[%s1 + $0x4d] sm:$0xff]
    %v1632 = vld [vmem:[%s3 + $0x280] sm:$0xff]
    %v1633 = vld [vmem:[%s3 + $0x288] sm:$0xff]
    %v1634 = vld [vmem:[%s3 + $0x290] sm:$0xff]
    %v1635 = vld [vmem:[%s3 + $0x298] sm:$0xff]
    %v1636 = vld [vmem:[%s3 + $0x2a0] sm:$0xff]
    %v1637 = vld [vmem:[%s3 + $0x2a8] sm:$0xff]
    %v1638 = vld [vmem:[%s3 + $0x2b0] sm:$0xff]
    %v1639 = vld [vmem:[%s3 + $0x2b8] sm:$0xff]
    %v1640 = vld [vmem:[%s3 + $0x2c0] sm:$0xff]
    %v1641 = vld [vmem:[%s3 + $0x2c8] sm:$0xff]
    %v1642 = vld [vmem:[%s3 + $0x2d0] sm:$0xff]
    %v1643 = vld [vmem:[%s3 + $0x2d8] sm:$0xff]
    %v1644 = vld [vmem:[%s3 + $0x2e0] sm:$0xff]
    %v1645 = vld [vmem:[%s3 + $0x2e8] sm:$0xff]
    %v1646 = vld [vmem:[%s3 + $0x2f0] sm:$0xff]
    %v1647 = vld [vmem:[%s3 + $0x2f8] sm:$0xff]
    %1648 = vmatprep.subr.mxu0 0.0
    %1649 = vmatpush1.msra.mxu0 %v1632
    %1650 = vmatprep.subr.mxu0 0.0
    %1651 = vmatpush1.msra.mxu0 %v1633
    %1652 = vmatprep.subr.mxu0 0.0
    %1653 = vmatpush1.msra.mxu0 %v1634
    %1654 = vmatprep.subr.mxu0 0.0
    %1655 = vmatpush1.msra.mxu0 %v1635
    %1656 = vmatprep.subr.mxu0 0.0
    %1657 = vmatpush1.msra.mxu0 %v1636
    %1658 = vmatprep.subr.mxu0 0.0
    %1659 = vmatpush1.msra.mxu0 %v1637
    %1660 = vmatprep.subr.mxu0 0.0
    %1661 = vmatpush1.msra.mxu0 %v1638
    %1662 = vmatprep.subr.mxu0 0.0
    %1663 = vmatpush1.msra.mxu0 %v1639
    %1664 = vmatprep.subr.mxu0 0.0
    %1665 = vmatpush1.msra.mxu0 %v1640
    %1666 = vmatprep.subr.mxu0 0.0
    %1667 = vmatpush1.msra.mxu0 %v1641
    %1668 = vmatprep.subr.mxu0 0.0
    %1669 = vmatpush1.msra.mxu0 %v1642
    %1670 = vmatprep.subr.mxu0 0.0
    %1671 = vmatpush1.msra.mxu0 %v1643
    %1672 = vmatprep.subr.mxu0 0.0
    %1673 = vmatpush1.msra.mxu0 %v1644
    %1674 = vmatprep.subr.mxu0 0.0
    %1675 = vmatpush1.msra.mxu0 %v1645
    %1676 = vmatprep.subr.mxu0 0.0
    %1677 = vmatpush1.msra.mxu0 %v1646
    %1678 = vmatprep.subr.mxu0 0.0
    %1679 = vmatpush1.msra.mxu0 %v1647
    %1680 = vmatprep.subr.mxu0 0.0
    %1681 = vmatpush1.msra.mxu0 0.0
    %1682 = vmatprep.subr.mxu0 0.0
    %1683 = vmatpush1.msra.mxu0 0.0
    %1684 = vmatprep.subr.mxu0 0.0
    %1685 = vmatpush1.msra.mxu0 0.0
    %1686 = vmatprep.subr.mxu0 0.0
    %1687 = vmatpush1.msra.mxu0 0.0
    %1688 = vmatprep.subr.mxu0 0.0
    %1689 = vmatpush1.msra.mxu0 0.0
    %1690 = vmatprep.subr.mxu0 0.0
    %1691 = vmatpush1.msra.mxu0 0.0
    %1692 = vmatprep.subr.mxu0 0.0
    %1693 = vmatpush1.msra.mxu0 0.0
    %1694 = vmatprep.subr.mxu0 0.0
    %1695 = vmatpush1.msra.mxu0 0.0
    %1696 = vmatprep.subr.mxu0 0.0
    %1697 = vmatpush1.msra.mxu0 0.0
    %1698 = vmatprep.subr.mxu0 0.0
    %1699 = vmatpush1.msra.mxu0 0.0
    %1700 = vmatprep.subr.mxu0 0.0
    %1701 = vmatpush1.msra.mxu0 0.0
    %1702 = vmatprep.subr.mxu0 0.0
    %1703 = vmatpush1.msra.mxu0 0.0
    %1704 = vmatprep.subr.mxu0 0.0
    %1705 = vmatpush1.msra.mxu0 0.0
    %1706 = vmatprep.subr.mxu0 0.0
    %1707 = vmatpush1.msra.mxu0 0.0
    %1708 = vmatprep.subr.mxu0 0.0
    %1709 = vmatpush1.msra.mxu0 0.0
    %1710 = vmatprep.subr.mxu0 0.0
    %1711 = vmatpush1.msra.mxu0 0.0
    %1712 = vmatprep.mubr.f32.mxu0 0.0
    %1713 = vmatmul.mubr.f32.gmra.mrb[0].mxu0 %v1622
    %v1714 = vpop.f32.mrb[0].mxu0
    %v1715 = vadd.f32 0.0, %v1714
    %v1716 = vpop.f32.mrb[0].mxu0
    %1717 = vmatprep.mubr.f32.mxu0 0.0
    %1718 = vmatmul.mubr.f32.gmra.mrb[0].mxu0 %v1623
    %v1719 = vpop.f32.mrb[0].mxu0
    %v1720 = vadd.f32 0.0, %v1719
    %v1721 = vpop.f32.mrb[0].mxu0
    %1722 = vmatprep.mubr.f32.mxu0 0.0
    %1723 = vmatmul.mubr.f32.gmra.mrb[0].mxu0 %v1624
    %v1724 = vpop.f32.mrb[0].mxu0
    %v1725 = vadd.f32 0.0, %v1724
    %v1726 = vpop.f32.mrb[0].mxu0
    %1727 = vmatprep.mubr.f32.mxu0 0.0
    %1728 = vmatmul.mubr.f32.gmra.mrb[0].mxu0 %v1625
    %v1729 = vpop.f32.mrb[0].mxu0
    %v1730 = vadd.f32 0.0, %v1729
    %v1731 = vpop.f32.mrb[0].mxu0
    %1732 = vmatprep.mubr.f32.mxu0 0.0
    %1733 = vmatmul.mubr.f32.gmra.mrb[0].mxu0 %v1626
    %v1734 = vpop.f32.mrb[0].mxu0
    %v1735 = vadd.f32 0.0, %v1734
    %v1736 = vpop.f32.mrb[0].mxu0
    %1737 = vmatprep.mubr.f32.mxu0 0.0
    %1738 = vmatmul.mubr.f32.gmra.mrb[0].mxu0 %v1627
    %v1739 = vpop.f32.mrb[0].mxu0
    %v1740 = vadd.f32 0.0, %v1739
    %v1741 = vpop.f32.mrb[0].mxu0
    %1742 = vmatprep.mubr.f32.mxu0 0.0
    %1743 = vmatmul.mubr.f32.gmra.mrb[0].mxu0 %v1628
    %v1744 = vpop.f32.mrb[0].mxu0
    %v1745 = vadd.f32 0.0, %v1744
    %v1746 = vpop.f32.mrb[0].mxu0
    %1747 = vmatprep.mubr.f32.mxu0 0.0
    %1748 = vmatmul.mubr.f32.gmra.mrb[0].mxu0 %v1629
    %v1749 = vpop.f32.mrb[0].mxu0
    %v1750 = vadd.f32 0.0, %v1749
    %v1751 = vpop.f32.mrb[0].mxu0
    %1752 = vmatprep.mubr.f32.mxu0 0.0
    %1753 = vmatmul.mubr.f32.gmra.mrb[0].mxu0 %v1630
    %v1754 = vpop.f32.mrb[0].mxu0
    %v1755 = vadd.f32 0.0, %v1754
    %v1756 = vpop.f32.mrb[0].mxu0
    %1757 = vmatprep.mubr.f32.mxu0 0.0
    %1758 = vmatmul.mubr.f32.gmra.mrb[0].mxu0 %v1631
    %v1759 = vpop.f32.mrb[0].mxu0
    %v1760 = vadd.f32 0.0, %v1759
    %v1761 = vpop.f32.mrb[0].mxu0
    %1762 = vdwg.mxu0
    %v1763 = vadd.f32 %v1612, %v1715
    %v1764 = vadd.f32 %v1613, %v1720
    %v1765 = vadd.f32 %v1614, %v1725
    %v1766 = vadd.f32 %v1615, %v1730
    %v1767 = vadd.f32 %v1616, %v1735
    %v1768 = vadd.f32 %v1617, %v1740
    %v1769 = vadd.f32 %v1618, %v1745
    %v1770 = vadd.f32 %v1619, %v1750
    %v1771 = vadd.f32 %v1620, %v1755
    %v1772 = vadd.f32 %v1621, %v1760
    %v1773 = vld [vmem:[%s1 + $0x6] sm:$0xff]
    %v1774 = vld [vmem:[%s1 + $0xe] sm:$0xff]
    %v1775 = vld [vmem:[%s1 + $0x16] sm:$0xff]
    %v1776 = vld [vmem:[%s1 + $0x1e] sm:$0xff]
    %v1777 = vld [vmem:[%s1 + $0x26] sm:$0xff]
    %v1778 = vld [vmem:[%s1 + $0x2e] sm:$0xff]
    %v1779 = vld [vmem:[%s1 + $0x36] sm:$0xff]
    %v1780 = vld [vmem:[%s1 + $0x3e] sm:$0xff]
    %v1781 = vld [vmem:[%s1 + $0x46] sm:$0xff]
    %v1782 = vld [vmem:[%s1 + $0x4e] sm:$0xff]
    %v1783 = vld [vmem:[%s3 + $0x300] sm:$0xff]
    %v1784 = vld [vmem:[%s3 + $0x308] sm:$0xff]
    %v1785 = vld [vmem:[%s3 + $0x310] sm:$0xff]
    %v1786 = vld [vmem:[%s3 + $0x318] sm:$0xff]
    %v1787 = vld [vmem:[%s3 + $0x320] sm:$0xff]
    %v1788 = vld [vmem:[%s3 + $0x328] sm:$0xff]
    %v1789 = vld [vmem:[%s3 + $0x330] sm:$0xff]
    %v1790 = vld [vmem:[%s3 + $0x338] sm:$0xff]
    %v1791 = vld [vmem:[%s3 + $0x340] sm:$0xff]
    %v1792 = vld [vmem:[%s3 + $0x348] sm:$0xff]
    %v1793 = vld [vmem:[%s3 + $0x350] sm:$0xff]
    %v1794 = vld [vmem:[%s3 + $0x358] sm:$0xff]
    %v1795 = vld [vmem:[%s3 + $0x360] sm:$0xff]
    %v1796 = vld [vmem:[%s3 + $0x368] sm:$0xff]
    %v1797 = vld [vmem:[%s3 + $0x370] sm:$0xff]
    %v1798 = vld [vmem:[%s3 + $0x378] sm:$0xff]
    %1799 = vmatprep.subr.mxu0 0.0
    %1800 = vmatpush1.msra.mxu0 %v1783
    %1801 = vmatprep.subr.mxu0 0.0
    %1802 = vmatpush1.msra.mxu0 %v1784
    %1803 = vmatprep.subr.mxu0 0.0
    %1804 = vmatpush1.msra.mxu0 %v1785
    %1805 = vmatprep.subr.mxu0 0.0
    %1806 = vmatpush1.msra.mxu0 %v1786
    %1807 = vmatprep.subr.mxu0 0.0
    %1808 = vmatpush1.msra.mxu0 %v1787
    %1809 = vmatprep.subr.mxu0 0.0
    %1810 = vmatpush1.msra.mxu0 %v1788
    %1811 = vmatprep.subr.mxu0 0.0
    %1812 = vmatpush1.msra.mxu0 %v1789
    %1813 = vmatprep.subr.mxu0 0.0
    %1814 = vmatpush1.msra.mxu0 %v1790
    %1815 = vmatprep.subr.mxu0 0.0
    %1816 = vmatpush1.msra.mxu0 %v1791
    %1817 = vmatprep.subr.mxu0 0.0
    %1818 = vmatpush1.msra.mxu0 %v1792
    %1819 = vmatprep.subr.mxu0 0.0
    %1820 = vmatpush1.msra.mxu0 %v1793
    %1821 = vmatprep.subr.mxu0 0.0
    %1822 = vmatpush1.msra.mxu0 %v1794
    %1823 = vmatprep.subr.mxu0 0.0
    %1824 = vmatpush1.msra.mxu0 %v1795
    %1825 = vmatprep.subr.mxu0 0.0
    %1826 = vmatpush1.msra.mxu0 %v1796
    %1827 = vmatprep.subr.mxu0 0.0
    %1828 = vmatpush1.msra.mxu0 %v1797
    %1829 = vmatprep.subr.mxu0 0.0
    %1830 = vmatpush1.msra.mxu0 %v1798
    %1831 = vmatprep.subr.mxu0 0.0
    %1832 = vmatpush1.msra.mxu0 0.0
    %1833 = vmatprep.subr.mxu0 0.0
    %1834 = vmatpush1.msra.mxu0 0.0
    %1835 = vmatprep.subr.mxu0 0.0
    %1836 = vmatpush1.msra.mxu0 0.0
    %1837 = vmatprep.subr.mxu0 0.0
    %1838 = vmatpush1.msra.mxu0 0.0
    %1839 = vmatprep.subr.mxu0 0.0
    %1840 = vmatpush1.msra.mxu0 0.0
    %1841 = vmatprep.subr.mxu0 0.0
    %1842 = vmatpush1.msra.mxu0 0.0
    %1843 = vmatprep.subr.mxu0 0.0
    %1844 = vmatpush1.msra.mxu0 0.0
    %1845 = vmatprep.subr.mxu0 0.0
    %1846 = vmatpush1.msra.mxu0 0.0
    %1847 = vmatprep.subr.mxu0 0.0
    %1848 = vmatpush1.msra.mxu0 0.0
    %1849 = vmatprep.subr.mxu0 0.0
    %1850 = vmatpush1.msra.mxu0 0.0
    %1851 = vmatprep.subr.mxu0 0.0
    %1852 = vmatpush1.msra.mxu0 0.0
    %1853 = vmatprep.subr.mxu0 0.0
    %1854 = vmatpush1.msra.mxu0 0.0
    %1855 = vmatprep.subr.mxu0 0.0
    %1856 = vmatpush1.msra.mxu0 0.0
    %1857 = vmatprep.subr.mxu0 0.0
    %1858 = vmatpush1.msra.mxu0 0.0
    %1859 = vmatprep.subr.mxu0 0.0
    %1860 = vmatpush1.msra.mxu0 0.0
    %1861 = vmatprep.subr.mxu0 0.0
    %1862 = vmatpush1.msra.mxu0 0.0
    %1863 = vmatprep.mubr.f32.mxu0 0.0
    %1864 = vmatmul.mubr.f32.gmra.mrb[0].mxu0 %v1773
    %v1865 = vpop.f32.mrb[0].mxu0
    %v1866 = vadd.f32 0.0, %v1865
    %v1867 = vpop.f32.mrb[0].mxu0
    %1868 = vmatprep.mubr.f32.mxu0 0.0
    %1869 = vmatmul.mubr.f32.gmra.mrb[0].mxu0 %v1774
    %v1870 = vpop.f32.mrb[0].mxu0
    %v1871 = vadd.f32 0.0, %v1870
    %v1872 = vpop.f32.mrb[0].mxu0
    %1873 = vmatprep.mubr.f32.mxu0 0.0
    %1874 = vmatmul.mubr.f32.gmra.mrb[0].mxu0 %v1775
    %v1875 = vpop.f32.mrb[0].mxu0
    %v1876 = vadd.f32 0.0, %v1875
    %v1877 = vpop.f32.mrb[0].mxu0
    %1878 = vmatprep.mubr.f32.mxu0 0.0
    %1879 = vmatmul.mubr.f32.gmra.mrb[0].mxu0 %v1776
    %v1880 = vpop.f32.mrb[0].mxu0
    %v1881 = vadd.f32 0.0, %v1880
    %v1882 = vpop.f32.mrb[0].mxu0
    %1883 = vmatprep.mubr.f32.mxu0 0.0
    %1884 = vmatmul.mubr.f32.gmra.mrb[0].mxu0 %v1777
    %v1885 = vpop.f32.mrb[0].mxu0
    %v1886 = vadd.f32 0.0, %v1885
    %v1887 = vpop.f32.mrb[0].mxu0
    %1888 = vmatprep.mubr.f32.mxu0 0.0
    %1889 = vmatmul.mubr.f32.gmra.mrb[0].mxu0 %v1778
    %v1890 = vpop.f32.mrb[0].mxu0
    %v1891 = vadd.f32 0.0, %v1890
    %v1892 = vpop.f32.mrb[0].mxu0
    %1893 = vmatprep.mubr.f32.mxu0 0.0
    %1894 = vmatmul.mubr.f32.gmra.mrb[0].mxu0 %v1779
    %v1895 = vpop.f32.mrb[0].mxu0
    %v1896 = vadd.f32 0.0, %v1895
    %v1897 = vpop.f32.mrb[0].mxu0
    %1898 = vmatprep.mubr.f32.mxu0 0.0
    %1899 = vmatmul.mubr.f32.gmra.mrb[0].mxu0 %v1780
    %v1900 = vpop.f32.mrb[0].mxu0
    %v1901 = vadd.f32 0.0, %v1900
    %v1902 = vpop.f32.mrb[0].mxu0
    %1903 = vmatprep.mubr.f32.mxu0 0.0
    %1904 = vmatmul.mubr.f32.gmra.mrb[0].mxu0 %v1781
    %v1905 = vpop.f32.mrb[0].mxu0
    %v1906 = vadd.f32 0.0, %v1905
    %v1907 = vpop.f32.mrb[0].mxu0
    %1908 = vmatprep.mubr.f32.mxu0 0.0
    %1909 = vmatmul.mubr.f32.gmra.mrb[0].mxu0 %v1782
    %v1910 = vpop.f32.mrb[0].mxu0
    %v1911 = vadd.f32 0.0, %v1910
    %v1912 = vpop.f32.mrb[0].mxu0
    %1913 = vdwg.mxu0
    %v1914 = vadd.f32 %v1763, %v1866
    %v1915 = vadd.f32 %v1764, %v1871
    %v1916 = vadd.f32 %v1765, %v1876
    %v1917 = vadd.f32 %v1766, %v1881
    %v1918 = vadd.f32 %v1767, %v1886
    %v1919 = vadd.f32 %v1768, %v1891
    %v1920 = vadd.f32 %v1769, %v1896
    %v1921 = vadd.f32 %v1770, %v1901
    %v1922 = vadd.f32 %v1771, %v1906
    %v1923 = vadd.f32 %v1772, %v1911
    %v1924 = vld [vmem:[%s1 + $0x7] sm:$0xff]
    %v1925 = vld [vmem:[%s1 + $0xf] sm:$0xff]
    %v1926 = vld [vmem:[%s1 + $0x17] sm:$0xff]
    %v1927 = vld [vmem:[%s1 + $0x1f] sm:$0xff]
    %v1928 = vld [vmem:[%s1 + $0x27] sm:$0xff]
    %v1929 = vld [vmem:[%s1 + $0x2f] sm:$0xff]
    %v1930 = vld [vmem:[%s1 + $0x37] sm:$0xff]
    %v1931 = vld [vmem:[%s1 + $0x3f] sm:$0xff]
    %v1932 = vld [vmem:[%s1 + $0x47] sm:$0xff]
    %v1933 = vld [vmem:[%s1 + $0x4f] sm:$0xff]
    %v1934 = vld [vmem:[%s3 + $0x380] sm:$0xff]
    %v1935 = vld [vmem:[%s3 + $0x388] sm:$0xff]
    %v1936 = vld [vmem:[%s3 + $0x390] sm:$0xff]
    %v1937 = vld [vmem:[%s3 + $0x398] sm:$0xff]
    %v1938 = vld [vmem:[%s3 + $0x3a0] sm:$0xff]
    %v1939 = vld [vmem:[%s3 + $0x3a8] sm:$0xff]
    %v1940 = vld [vmem:[%s3 + $0x3b0] sm:$0xff]
    %v1941 = vld [vmem:[%s3 + $0x3b8] sm:$0xff]
    %v1942 = vld [vmem:[%s3 + $0x3c0] sm:$0xff]
    %v1943 = vld [vmem:[%s3 + $0x3c8] sm:$0xff]
    %v1944 = vld [vmem:[%s3 + $0x3d0] sm:$0xff]
    %v1945 = vld [vmem:[%s3 + $0x3d8] sm:$0xff]
    %v1946 = vld [vmem:[%s3 + $0x3e0] sm:$0xff]
    %v1947 = vld [vmem:[%s3 + $0x3e8] sm:$0xff]
    %v1948 = vld [vmem:[%s3 + $0x3f0] sm:$0xff]
    %v1949 = vld [vmem:[%s3 + $0x3f8] sm:$0xff]
    %1950 = vmatprep.subr.mxu0 0.0
    %1951 = vmatpush1.msra.mxu0 %v1934
    %1952 = vmatprep.subr.mxu0 0.0
    %1953 = vmatpush1.msra.mxu0 %v1935
    %1954 = vmatprep.subr.mxu0 0.0
    %1955 = vmatpush1.msra.mxu0 %v1936
    %1956 = vmatprep.subr.mxu0 0.0
    %1957 = vmatpush1.msra.mxu0 %v1937
    %1958 = vmatprep.subr.mxu0 0.0
    %1959 = vmatpush1.msra.mxu0 %v1938
    %1960 = vmatprep.subr.mxu0 0.0
    %1961 = vmatpush1.msra.mxu0 %v1939
    %1962 = vmatprep.subr.mxu0 0.0
    %1963 = vmatpush1.msra.mxu0 %v1940
    %1964 = vmatprep.subr.mxu0 0.0
    %1965 = vmatpush1.msra.mxu0 %v1941
    %1966 = vmatprep.subr.mxu0 0.0
    %1967 = vmatpush1.msra.mxu0 %v1942
    %1968 = vmatprep.subr.mxu0 0.0
    %1969 = vmatpush1.msra.mxu0 %v1943
    %1970 = vmatprep.subr.mxu0 0.0
    %1971 = vmatpush1.msra.mxu0 %v1944
    %1972 = vmatprep.subr.mxu0 0.0
    %1973 = vmatpush1.msra.mxu0 %v1945
    %1974 = vmatprep.subr.mxu0 0.0
    %1975 = vmatpush1.msra.mxu0 %v1946
    %1976 = vmatprep.subr.mxu0 0.0
    %1977 = vmatpush1.msra.mxu0 %v1947
    %1978 = vmatprep.subr.mxu0 0.0
    %1979 = vmatpush1.msra.mxu0 %v1948
    %1980 = vmatprep.subr.mxu0 0.0
    %1981 = vmatpush1.msra.mxu0 %v1949
    %1982 = vmatprep.subr.mxu0 0.0
    %1983 = vmatpush1.msra.mxu0 0.0
    %1984 = vmatprep.subr.mxu0 0.0
    %1985 = vmatpush1.msra.mxu0 0.0
    %1986 = vmatprep.subr.mxu0 0.0
    %1987 = vmatpush1.msra.mxu0 0.0
    %1988 = vmatprep.subr.mxu0 0.0
    %1989 = vmatpush1.msra.mxu0 0.0
    %1990 = vmatprep.subr.mxu0 0.0
    %1991 = vmatpush1.msra.mxu0 0.0
    %1992 = vmatprep.subr.mxu0 0.0
    %1993 = vmatpush1.msra.mxu0 0.0
    %1994 = vmatprep.subr.mxu0 0.0
    %1995 = vmatpush1.msra.mxu0 0.0
    %1996 = vmatprep.subr.mxu0 0.0
    %1997 = vmatpush1.msra.mxu0 0.0
    %1998 = vmatprep.subr.mxu0 0.0
    %1999 = vmatpush1.msra.mxu0 0.0
    %2000 = vmatprep.subr.mxu0 0.0
    %2001 = vmatpush1.msra.mxu0 0.0
    %2002 = vmatprep.subr.mxu0 0.0
    %2003 = vmatpush1.msra.mxu0 0.0
    %2004 = vmatprep.subr.mxu0 0.0
    %2005 = vmatpush1.msra.mxu0 0.0
    %2006 = vmatprep.subr.mxu0 0.0
    %2007 = vmatpush1.msra.mxu0 0.0
    %2008 = vmatprep.subr.mxu0 0.0
    %2009 = vmatpush1.msra.mxu0 0.0
    %2010 = vmatprep.subr.mxu0 0.0
    %2011 = vmatpush1.msra.mxu0 0.0
    %2012 = vmatprep.subr.mxu0 0.0
    %2013 = vmatpush1.msra.mxu0 0.0
    %2014 = vmatprep.mubr.f32.mxu0 0.0
    %2015 = vmatmul.mubr.f32.gmra.mrb[0].mxu0 %v1924
    %v2016 = vpop.f32.mrb[0].mxu0
    %v2017 = vadd.f32 0.0, %v2016
    %v2018 = vpop.f32.mrb[0].mxu0
    %2019 = vmatprep.mubr.f32.mxu0 0.0
    %2020 = vmatmul.mubr.f32.gmra.mrb[0].mxu0 %v1925
    %v2021 = vpop.f32.mrb[0].mxu0
    %v2022 = vadd.f32 0.0, %v2021
    %v2023 = vpop.f32.mrb[0].mxu0
    %2024 = vmatprep.mubr.f32.mxu0 0.0
    %2025 = vmatmul.mubr.f32.gmra.mrb[0].mxu0 %v1926
    %v2026 = vpop.f32.mrb[0].mxu0
    %v2027 = vadd.f32 0.0, %v2026
    %v2028 = vpop.f32.mrb[0].mxu0
    %2029 = vmatprep.mubr.f32.mxu0 0.0
    %2030 = vmatmul.mubr.f32.gmra.mrb[0].mxu0 %v1927
    %v2031 = vpop.f32.mrb[0].mxu0
    %v2032 = vadd.f32 0.0, %v2031
    %v2033 = vpop.f32.mrb[0].mxu0
    %2034 = vmatprep.mubr.f32.mxu0 0.0
    %2035 = vmatmul.mubr.f32.gmra.mrb[0].mxu0 %v1928
    %v2036 = vpop.f32.mrb[0].mxu0
    %v2037 = vadd.f32 0.0, %v2036
    %v2038 = vpop.f32.mrb[0].mxu0
    %2039 = vmatprep.mubr.f32.mxu0 0.0
    %2040 = vmatmul.mubr.f32.gmra.mrb[0].mxu0 %v1929
    %v2041 = vpop.f32.mrb[0].mxu0
    %v2042 = vadd.f32 0.0, %v2041
    %v2043 = vpop.f32.mrb[0].mxu0
    %2044 = vmatprep.mubr.f32.mxu0 0.0
    %2045 = vmatmul.mubr.f32.gmra.mrb[0].mxu0 %v1930
    %v2046 = vpop.f32.mrb[0].mxu0
    %v2047 = vadd.f32 0.0, %v2046
    %v2048 = vpop.f32.mrb[0].mxu0
    %2049 = vmatprep.mubr.f32.mxu0 0.0
    %2050 = vmatmul.mubr.f32.gmra.mrb[0].mxu0 %v1931
    %v2051 = vpop.f32.mrb[0].mxu0
    %v2052 = vadd.f32 0.0, %v2051
    %v2053 = vpop.f32.mrb[0].mxu0
    %2054 = vmatprep.mubr.f32.mxu0 0.0
    %2055 = vmatmul.mubr.f32.gmra.mrb[0].mxu0 %v1932
    %v2056 = vpop.f32.mrb[0].mxu0
    %v2057 = vadd.f32 0.0, %v2056
    %v2058 = vpop.f32.mrb[0].mxu0
    %2059 = vmatprep.mubr.f32.mxu0 0.0
    %2060 = vmatmul.mubr.f32.gmra.mrb[0].mxu0 %v1933
    %v2061 = vpop.f32.mrb[0].mxu0
    %v2062 = vadd.f32 0.0, %v2061
    %v2063 = vpop.f32.mrb[0].mxu0
    %2064 = vdwg.mxu0
    %v2065 = vadd.f32 %v1914, %v2017
    %v2066 = vadd.f32 %v1915, %v2022
    %v2067 = vadd.f32 %v1916, %v2027
    %v2068 = vadd.f32 %v1917, %v2032
    %v2069 = vadd.f32 %v1918, %v2037
    %v2070 = vadd.f32 %v1919, %v2042
    %v2071 = vadd.f32 %v1920, %v2047
    %v2072 = vadd.f32 %v1921, %v2052
    %v2073 = vadd.f32 %v1922, %v2057
    %v2074 = vadd.f32 %v1923, %v2062
    %v2075 = vld [vmem:[%s1 + $0x8] sm:$0xff]
    %v2076 = vld [vmem:[%s1 + $0x10] sm:$0xff]
    %v2077 = vld [vmem:[%s1 + $0x18] sm:$0xff]
    %v2078 = vld [vmem:[%s1 + $0x20] sm:$0xff]
    %v2079 = vld [vmem:[%s1 + $0x28] sm:$0xff]
    %v2080 = vld [vmem:[%s1 + $0x30] sm:$0xff]
    %v2081 = vld [vmem:[%s1 + $0x38] sm:$0xff]
    %v2082 = vld [vmem:[%s1 + $0x40] sm:$0xff]
    %v2083 = vld [vmem:[%s1 + $0x48] sm:$0xff]
    %v2084 = vld [vmem:[%s1 + $0x50] sm:$0xff]
    %v2085 = vld [vmem:[%s3 + $0x400] sm:$0xff]
    %v2086 = vld [vmem:[%s3 + $0x408] sm:$0xff]
    %v2087 = vld [vmem:[%s3 + $0x410] sm:$0xff]
    %v2088 = vld [vmem:[%s3 + $0x418] sm:$0xff]
    %v2089 = vld [vmem:[%s3 + $0x420] sm:$0xff]
    %v2090 = vld [vmem:[%s3 + $0x428] sm:$0xff]
    %v2091 = vld [vmem:[%s3 + $0x430] sm:$0xff]
    %v2092 = vld [vmem:[%s3 + $0x438] sm:$0xff]
    %v2093 = vld [vmem:[%s3 + $0x440] sm:$0xff]
    %v2094 = vld [vmem:[%s3 + $0x448] sm:$0xff]
    %v2095 = vld [vmem:[%s3 + $0x450] sm:$0xff]
    %v2096 = vld [vmem:[%s3 + $0x458] sm:$0xff]
    %v2097 = vld [vmem:[%s3 + $0x460] sm:$0xff]
    %v2098 = vld [vmem:[%s3 + $0x468] sm:$0xff]
    %v2099 = vld [vmem:[%s3 + $0x470] sm:$0xff]
    %v2100 = vld [vmem:[%s3 + $0x478] sm:$0xff]
    %2101 = vmatprep.subr.mxu0 0.0
    %2102 = vmatpush1.msra.mxu0 %v2085
    %2103 = vmatprep.subr.mxu0 0.0
    %2104 = vmatpush1.msra.mxu0 %v2086
    %2105 = vmatprep.subr.mxu0 0.0
    %2106 = vmatpush1.msra.mxu0 %v2087
    %2107 = vmatprep.subr.mxu0 0.0
    %2108 = vmatpush1.msra.mxu0 %v2088
    %2109 = vmatprep.subr.mxu0 0.0
    %2110 = vmatpush1.msra.mxu0 %v2089
    %2111 = vmatprep.subr.mxu0 0.0
    %2112 = vmatpush1.msra.mxu0 %v2090
    %2113 = vmatprep.subr.mxu0 0.0
    %2114 = vmatpush1.msra.mxu0 %v2091
    %2115 = vmatprep.subr.mxu0 0.0
    %2116 = vmatpush1.msra.mxu0 %v2092
    %2117 = vmatprep.subr.mxu0 0.0
    %2118 = vmatpush1.msra.mxu0 %v2093
    %2119 = vmatprep.subr.mxu0 0.0
    %2120 = vmatpush1.msra.mxu0 %v2094
    %2121 = vmatprep.subr.mxu0 0.0
    %2122 = vmatpush1.msra.mxu0 %v2095
    %2123 = vmatprep.subr.mxu0 0.0
    %2124 = vmatpush1.msra.mxu0 %v2096
    %2125 = vmatprep.subr.mxu0 0.0
    %2126 = vmatpush1.msra.mxu0 %v2097
    %2127 = vmatprep.subr.mxu0 0.0
    %2128 = vmatpush1.msra.mxu0 %v2098
    %2129 = vmatprep.subr.mxu0 0.0
    %2130 = vmatpush1.msra.mxu0 %v2099
    %2131 = vmatprep.subr.mxu0 0.0
    %2132 = vmatpush1.msra.mxu0 %v2100
    %2133 = vmatprep.subr.mxu0 0.0
    %2134 = vmatpush1.msra.mxu0 0.0
    %2135 = vmatprep.subr.mxu0 0.0
    %2136 = vmatpush1.msra.mxu0 0.0
    %2137 = vmatprep.subr.mxu0 0.0
    %2138 = vmatpush1.msra.mxu0 0.0
    %2139 = vmatprep.subr.mxu0 0.0
    %2140 = vmatpush1.msra.mxu0 0.0
    %2141 = vmatprep.subr.mxu0 0.0
    %2142 = vmatpush1.msra.mxu0 0.0
    %2143 = vmatprep.subr.mxu0 0.0
    %2144 = vmatpush1.msra.mxu0 0.0
    %2145 = vmatprep.subr.mxu0 0.0
    %2146 = vmatpush1.msra.mxu0 0.0
    %2147 = vmatprep.subr.mxu0 0.0
    %2148 = vmatpush1.msra.mxu0 0.0
    %2149 = vmatprep.subr.mxu0 0.0
    %2150 = vmatpush1.msra.mxu0 0.0
    %2151 = vmatprep.subr.mxu0 0.0
    %2152 = vmatpush1.msra.mxu0 0.0
    %2153 = vmatprep.subr.mxu0 0.0
    %2154 = vmatpush1.msra.mxu0 0.0
    %2155 = vmatprep.subr.mxu0 0.0
    %2156 = vmatpush1.msra.mxu0 0.0
    %2157 = vmatprep.subr.mxu0 0.0
    %2158 = vmatpush1.msra.mxu0 0.0
    %2159 = vmatprep.subr.mxu0 0.0
    %2160 = vmatpush1.msra.mxu0 0.0
    %2161 = vmatprep.subr.mxu0 0.0
    %2162 = vmatpush1.msra.mxu0 0.0
    %2163 = vmatprep.subr.mxu0 0.0
    %2164 = vmatpush1.msra.mxu0 0.0
    %2165 = vmatprep.mubr.f32.mxu0 0.0
    %2166 = vmatmul.mubr.f32.gmra.mrb[0].mxu0 %v2075
    %v2167 = vpop.f32.mrb[0].mxu0
    %v2168 = vadd.f32 0.0, %v2167
    %v2169 = vpop.f32.mrb[0].mxu0
    %2170 = vmatprep.mubr.f32.mxu0 0.0
    %2171 = vmatmul.mubr.f32.gmra.mrb[0].mxu0 %v2076
    %v2172 = vpop.f32.mrb[0].mxu0
    %v2173 = vadd.f32 0.0, %v2172
    %v2174 = vpop.f32.mrb[0].mxu0
    %2175 = vmatprep.mubr.f32.mxu0 0.0
    %2176 = vmatmul.mubr.f32.gmra.mrb[0].mxu0 %v2077
    %v2177 = vpop.f32.mrb[0].mxu0
    %v2178 = vadd.f32 0.0, %v2177
    %v2179 = vpop.f32.mrb[0].mxu0
    %2180 = vmatprep.mubr.f32.mxu0 0.0
    %2181 = vmatmul.mubr.f32.gmra.mrb[0].mxu0 %v2078
    %v2182 = vpop.f32.mrb[0].mxu0
    %v2183 = vadd.f32 0.0, %v2182
    %v2184 = vpop.f32.mrb[0].mxu0
    %2185 = vmatprep.mubr.f32.mxu0 0.0
    %2186 = vmatmul.mubr.f32.gmra.mrb[0].mxu0 %v2079
    %v2187 = vpop.f32.mrb[0].mxu0
    %v2188 = vadd.f32 0.0, %v2187
    %v2189 = vpop.f32.mrb[0].mxu0
    %2190 = vmatprep.mubr.f32.mxu0 0.0
    %2191 = vmatmul.mubr.f32.gmra.mrb[0].mxu0 %v2080
    %v2192 = vpop.f32.mrb[0].mxu0
    %v2193 = vadd.f32 0.0, %v2192
    %v2194 = vpop.f32.mrb[0].mxu0
    %2195 = vmatprep.mubr.f32.mxu0 0.0
    %2196 = vmatmul.mubr.f32.gmra.mrb[0].mxu0 %v2081
    %v2197 = vpop.f32.mrb[0].mxu0
    %v2198 = vadd.f32 0.0, %v2197
    %v2199 = vpop.f32.mrb[0].mxu0
    %2200 = vmatprep.mubr.f32.mxu0 0.0
    %2201 = vmatmul.mubr.f32.gmra.mrb[0].mxu0 %v2082
    %v2202 = vpop.f32.mrb[0].mxu0
    %v2203 = vadd.f32 0.0, %v2202
    %v2204 = vpop.f32.mrb[0].mxu0
    %2205 = vmatprep.mubr.f32.mxu0 0.0
    %2206 = vmatmul.mubr.f32.gmra.mrb[0].mxu0 %v2083
    %v2207 = vpop.f32.mrb[0].mxu0
    %v2208 = vadd.f32 0.0, %v2207
    %v2209 = vpop.f32.mrb[0].mxu0
    %2210 = vmatprep.mubr.f32.mxu0 0.0
    %2211 = vmatmul.mubr.f32.gmra.mrb[0].mxu0 %v2084
    %v2212 = vpop.f32.mrb[0].mxu0
    %v2213 = vadd.f32 0.0, %v2212
    %v2214 = vpop.f32.mrb[0].mxu0
    %2215 = vdwg.mxu0
    %v2216 = vadd.f32 %v2065, %v2168
    %v2217 = vadd.f32 %v2066, %v2173
    %v2218 = vadd.f32 %v2067, %v2178
    %v2219 = vadd.f32 %v2068, %v2183
    %v2220 = vadd.f32 %v2069, %v2188
    %v2221 = vadd.f32 %v2070, %v2193
    %v2222 = vadd.f32 %v2071, %v2198
    %v2223 = vadd.f32 %v2072, %v2203
    %v2224 = vadd.f32 %v2073, %v2208
    %v2225 = vadd.f32 %v2074, %v2213
    %v2226 = vld [vmem:[%s1 + $0x9] sm:$0xff]
    %v2227 = vld [vmem:[%s1 + $0x11] sm:$0xff]
    %v2228 = vld [vmem:[%s1 + $0x19] sm:$0xff]
    %v2229 = vld [vmem:[%s1 + $0x21] sm:$0xff]
    %v2230 = vld [vmem:[%s1 + $0x29] sm:$0xff]
    %v2231 = vld [vmem:[%s1 + $0x31] sm:$0xff]
    %v2232 = vld [vmem:[%s1 + $0x39] sm:$0xff]
    %v2233 = vld [vmem:[%s1 + $0x41] sm:$0xff]
    %v2234 = vld [vmem:[%s1 + $0x49] sm:$0xff]
    %v2235 = vld [vmem:[%s1 + $0x51] sm:$0xff]
    %v2236 = vld [vmem:[%s3 + $0x480] sm:$0xff]
    %v2237 = vld [vmem:[%s3 + $0x488] sm:$0xff]
    %v2238 = vld [vmem:[%s3 + $0x490] sm:$0xff]
    %v2239 = vld [vmem:[%s3 + $0x498] sm:$0xff]
    %v2240 = vld [vmem:[%s3 + $0x4a0] sm:$0xff]
    %v2241 = vld [vmem:[%s3 + $0x4a8] sm:$0xff]
    %v2242 = vld [vmem:[%s3 + $0x4b0] sm:$0xff]
    %v2243 = vld [vmem:[%s3 + $0x4b8] sm:$0xff]
    %v2244 = vld [vmem:[%s3 + $0x4c0] sm:$0xff]
    %v2245 = vld [vmem:[%s3 + $0x4c8] sm:$0xff]
    %v2246 = vld [vmem:[%s3 + $0x4d0] sm:$0xff]
    %v2247 = vld [vmem:[%s3 + $0x4d8] sm:$0xff]
    %v2248 = vld [vmem:[%s3 + $0x4e0] sm:$0xff]
    %v2249 = vld [vmem:[%s3 + $0x4e8] sm:$0xff]
    %v2250 = vld [vmem:[%s3 + $0x4f0] sm:$0xff]
    %v2251 = vld [vmem:[%s3 + $0x4f8] sm:$0xff]
    %2252 = vmatprep.subr.mxu0 0.0
    %2253 = vmatpush1.msra.mxu0 %v2236
    %2254 = vmatprep.subr.mxu0 0.0
    %2255 = vmatpush1.msra.mxu0 %v2237
    %2256 = vmatprep.subr.mxu0 0.0
    %2257 = vmatpush1.msra.mxu0 %v2238
    %2258 = vmatprep.subr.mxu0 0.0
    %2259 = vmatpush1.msra.mxu0 %v2239
    %2260 = vmatprep.subr.mxu0 0.0
    %2261 = vmatpush1.msra.mxu0 %v2240
    %2262 = vmatprep.subr.mxu0 0.0
    %2263 = vmatpush1.msra.mxu0 %v2241
    %2264 = vmatprep.subr.mxu0 0.0
    %2265 = vmatpush1.msra.mxu0 %v2242
    %2266 = vmatprep.subr.mxu0 0.0
    %2267 = vmatpush1.msra.mxu0 %v2243
    %2268 = vmatprep.subr.mxu0 0.0
    %2269 = vmatpush1.msra.mxu0 %v2244
    %2270 = vmatprep.subr.mxu0 0.0
    %2271 = vmatpush1.msra.mxu0 %v2245
    %2272 = vmatprep.subr.mxu0 0.0
    %2273 = vmatpush1.msra.mxu0 %v2246
    %2274 = vmatprep.subr.mxu0 0.0
    %2275 = vmatpush1.msra.mxu0 %v2247
    %2276 = vmatprep.subr.mxu0 0.0
    %2277 = vmatpush1.msra.mxu0 %v2248
    %2278 = vmatprep.subr.mxu0 0.0
    %2279 = vmatpush1.msra.mxu0 %v2249
    %2280 = vmatprep.subr.mxu0 0.0
    %2281 = vmatpush1.msra.mxu0 %v2250
    %2282 = vmatprep.subr.mxu0 0.0
    %2283 = vmatpush1.msra.mxu0 %v2251
    %2284 = vmatprep.subr.mxu0 0.0
    %2285 = vmatpush1.msra.mxu0 0.0
    %2286 = vmatprep.subr.mxu0 0.0
    %2287 = vmatpush1.msra.mxu0 0.0
    %2288 = vmatprep.subr.mxu0 0.0
    %2289 = vmatpush1.msra.mxu0 0.0
    %2290 = vmatprep.subr.mxu0 0.0
    %2291 = vmatpush1.msra.mxu0 0.0
    %2292 = vmatprep.subr.mxu0 0.0
    %2293 = vmatpush1.msra.mxu0 0.0
    %2294 = vmatprep.subr.mxu0 0.0
    %2295 = vmatpush1.msra.mxu0 0.0
    %2296 = vmatprep.subr.mxu0 0.0
    %2297 = vmatpush1.msra.mxu0 0.0
    %2298 = vmatprep.subr.mxu0 0.0
    %2299 = vmatpush1.msra.mxu0 0.0
    %2300 = vmatprep.subr.mxu0 0.0
    %2301 = vmatpush1.msra.mxu0 0.0
    %2302 = vmatprep.subr.mxu0 0.0
    %2303 = vmatpush1.msra.mxu0 0.0
    %2304 = vmatprep.subr.mxu0 0.0
    %2305 = vmatpush1.msra.mxu0 0.0
    %2306 = vmatprep.subr.mxu0 0.0
    %2307 = vmatpush1.msra.mxu0 0.0
    %2308 = vmatprep.subr.mxu0 0.0
    %2309 = vmatpush1.msra.mxu0 0.0
    %2310 = vmatprep.subr.mxu0 0.0
    %2311 = vmatpush1.msra.mxu0 0.0
    %2312 = vmatprep.subr.mxu0 0.0
    %2313 = vmatpush1.msra.mxu0 0.0
    %2314 = vmatprep.subr.mxu0 0.0
    %2315 = vmatpush1.msra.mxu0 0.0
    %2316 = vmatprep.mubr.f32.mxu0 0.0
    %2317 = vmatmul.mubr.f32.gmra.mrb[0].mxu0 %v2226
    %v2318 = vpop.f32.mrb[0].mxu0
    %v2319 = vadd.f32 0.0, %v2318
    %v2320 = vpop.f32.mrb[0].mxu0
    %2321 = vmatprep.mubr.f32.mxu0 0.0
    %2322 = vmatmul.mubr.f32.gmra.mrb[0].mxu0 %v2227
    %v2323 = vpop.f32.mrb[0].mxu0
    %v2324 = vadd.f32 0.0, %v2323
    %v2325 = vpop.f32.mrb[0].mxu0
    %2326 = vmatprep.mubr.f32.mxu0 0.0
    %2327 = vmatmul.mubr.f32.gmra.mrb[0].mxu0 %v2228
    %v2328 = vpop.f32.mrb[0].mxu0
    %v2329 = vadd.f32 0.0, %v2328
    %v2330 = vpop.f32.mrb[0].mxu0
    %2331 = vmatprep.mubr.f32.mxu0 0.0
    %2332 = vmatmul.mubr.f32.gmra.mrb[0].mxu0 %v2229
    %v2333 = vpop.f32.mrb[0].mxu0
    %v2334 = vadd.f32 0.0, %v2333
    %v2335 = vpop.f32.mrb[0].mxu0
    %2336 = vmatprep.mubr.f32.mxu0 0.0
    %2337 = vmatmul.mubr.f32.gmra.mrb[0].mxu0 %v2230
    %v2338 = vpop.f32.mrb[0].mxu0
    %v2339 = vadd.f32 0.0, %v2338
    %v2340 = vpop.f32.mrb[0].mxu0
    %2341 = vmatprep.mubr.f32.mxu0 0.0
    %2342 = vmatmul.mubr.f32.gmra.mrb[0].mxu0 %v2231
    %v2343 = vpop.f32.mrb[0].mxu0
    %v2344 = vadd.f32 0.0, %v2343
    %v2345 = vpop.f32.mrb[0].mxu0
    %2346 = vmatprep.mubr.f32.mxu0 0.0
    %2347 = vmatmul.mubr.f32.gmra.mrb[0].mxu0 %v2232
    %v2348 = vpop.f32.mrb[0].mxu0
    %v2349 = vadd.f32 0.0, %v2348
    %v2350 = vpop.f32.mrb[0].mxu0
    %2351 = vmatprep.mubr.f32.mxu0 0.0
    %2352 = vmatmul.mubr.f32.gmra.mrb[0].mxu0 %v2233
    %v2353 = vpop.f32.mrb[0].mxu0
    %v2354 = vadd.f32 0.0, %v2353
    %v2355 = vpop.f32.mrb[0].mxu0
    %2356 = vmatprep.mubr.f32.mxu0 0.0
    %2357 = vmatmul.mubr.f32.gmra.mrb[0].mxu0 %v2234
    %v2358 = vpop.f32.mrb[0].mxu0
    %v2359 = vadd.f32 0.0, %v2358
    %v2360 = vpop.f32.mrb[0].mxu0
    %2361 = vmatprep.mubr.f32.mxu0 0.0
    %2362 = vmatmul.mubr.f32.gmra.mrb[0].mxu0 %v2235
    %v2363 = vpop.f32.mrb[0].mxu0
    %v2364 = vadd.f32 0.0, %v2363
    %v2365 = vpop.f32.mrb[0].mxu0
    %2366 = vdwg.mxu0
    %v2367 = vadd.f32 %v2216, %v2319
    %v2368 = vadd.f32 %v2217, %v2324
    %v2369 = vadd.f32 %v2218, %v2329
    %v2370 = vadd.f32 %v2219, %v2334
    %v2371 = vadd.f32 %v2220, %v2339
    %v2372 = vadd.f32 %v2221, %v2344
    %v2373 = vadd.f32 %v2222, %v2349
    %v2374 = vadd.f32 %v2223, %v2354
    %v2375 = vadd.f32 %v2224, %v2359
    %v2376 = vadd.f32 %v2225, %v2364
    %v2377 = vlaneseq
    %v2378 = vshrl.u32 %v2377, 7
    %v2379 = vsub.s32 0, %v2378
    %v2380 = vrot.slane %v44, %v2379
    %v2381 = vadd.f32 %v2367, %v2380
    %v2382 = vadd.f32 %v2368, %v2380
    %v2383 = vadd.f32 %v2369, %v2380
    %v2384 = vadd.f32 %v2370, %v2380
    %v2385 = vadd.f32 %v2371, %v2380
    %v2386 = vadd.f32 %v2372, %v2380
    %v2387 = vadd.f32 %v2373, %v2380
    %v2388 = vadd.f32 %v2374, %v2380
    %v2389 = vadd.f32 %v2375, %v2380
    %v2390 = vadd.f32 %v2376, %v2380
    %v2391 = vtanh.pop %v2381
    %v2392 = vtanh.pop %v2382
    %v2393 = vtanh.pop %v2383
    %v2394 = vtanh.pop %v2384
    %v2395 = vtanh.pop %v2385
    %v2396 = vtanh.pop %v2386
    %v2397 = vtanh.pop %v2387
    %v2398 = vtanh.pop %v2388
    %v2399 = vtanh.pop %v2389
    %v2400 = vtanh.pop %v2390
    %v2401 = vlaneseq
    %v2402 = vshrl.u32 %v2401, 7
    %v2403 = vadd.s32 %v2402, 8
    %v2404 = vadd.s32 %v2402, 16
    %v2405 = vadd.s32 %v2402, 24
    %v2406 = vadd.s32 %v2402, 32
    %v2407 = vadd.s32 %v2402, 40
    %v2408 = vadd.s32 %v2402, 48
    %v2409 = vadd.s32 %v2402, 56
    %v2410 = vadd.s32 %v2402, 64
    %v2411 = vadd.s32 %v2402, 72
    %vm2412 = vcmp.ge.s32.totalorder %v2402, 0
    %vm2413 = vcmp.ge.s32.totalorder %v2403, 0
    %vm2414 = vcmp.ge.s32.totalorder %v2404, 0
    %vm2415 = vcmp.ge.s32.totalorder %v2405, 0
    %vm2416 = vcmp.ge.s32.totalorder %v2406, 0
    %vm2417 = vcmp.ge.s32.totalorder %v2407, 0
    %vm2418 = vcmp.ge.s32.totalorder %v2408, 0
    %vm2419 = vcmp.ge.s32.totalorder %v2409, 0
    %vm2420 = vcmp.ge.s32.totalorder %v2410, 0
    %vm2421 = vcmp.ge.s32.totalorder %v2411, 0
    %vm2422 = vcmp.lt.s32.totalorder %v2402, 13
    %vm2423 = vcmp.lt.s32.totalorder %v2403, 13
    %vm2424 = vcmp.lt.s32.totalorder %v2404, 13
    %vm2425 = vcmp.lt.s32.totalorder %v2405, 13
    %vm2426 = vcmp.lt.s32.totalorder %v2406, 13
    %vm2427 = vcmp.lt.s32.totalorder %v2407, 13
    %vm2428 = vcmp.lt.s32.totalorder %v2408, 13
    %vm2429 = vcmp.lt.s32.totalorder %v2409, 13
    %vm2430 = vcmp.lt.s32.totalorder %v2410, 13
    %vm2431 = vcmp.lt.s32.totalorder %v2411, 13
    %vm2432 = vmand %vm2412, %vm2422
    %vm2433 = vmand %vm2413, %vm2423
    %vm2434 = vmand %vm2414, %vm2424
    %vm2435 = vmand %vm2415, %vm2425
    %vm2436 = vmand %vm2416, %vm2426
    %vm2437 = vmand %vm2417, %vm2427
    %vm2438 = vmand %vm2418, %vm2428
    %vm2439 = vmand %vm2419, %vm2429
    %vm2440 = vmand %vm2420, %vm2430
    %vm2441 = vmand %vm2421, %vm2431
    %v2442 = vsel %vm2432, %v2391, -1e+30
    %v2443 = vsel %vm2433, %v2392, -1e+30
    %v2444 = vsel %vm2434, %v2393, -1e+30
    %v2445 = vsel %vm2435, %v2394, -1e+30
    %v2446 = vsel %vm2436, %v2395, -1e+30
    %v2447 = vsel %vm2437, %v2396, -1e+30
    %v2448 = vsel %vm2438, %v2397, -1e+30
    %v2449 = vsel %vm2439, %v2398, -1e+30
    %v2450 = vsel %vm2440, %v2399, -1e+30
    %v2451 = vsel %vm2441, %v2400, -1e+30
    %v2452 = vsel %vm342, %v2442, -inf
    %v2453 = vsel %vm342, %v2443, -inf
    %v2454 = vsel %vm342, %v2444, -inf
    %v2455 = vsel %vm342, %v2445, -inf
    %v2456 = vsel %vm342, %v2446, -inf
    %v2457 = vmax.f32 %v2452, %v2456
    %v2458 = vsel %vm342, %v2447, -inf
    %v2459 = vmax.f32 %v2453, %v2458
    %v2460 = vsel %vm342, %v2448, -inf
    %v2461 = vmax.f32 %v2454, %v2460
    %v2462 = vsel %vm342, %v2449, -inf
    %v2463 = vmax.f32 %v2455, %v2462
    %v2464 = vsel %vm342, %v2450, -inf
    %v2465 = vmax.f32 %v2457, %v2464
    %v2466 = vsel %vm342, %v2451, -inf
    %v2467 = vmax.f32 %v2459, %v2466
    %v2468 = vmax.f32 %v2465, %v2467
    %v2469 = vmax.f32 %v2461, %v2463
    %v2470 = vmax.f32 %v2468, %v2469
    %v2471 = vrot.slane %v2470, 4
    %v2472 = vmax.f32 %v2470, %v2471
    %v2473 = vrot.slane %v2472, 2
    %v2474 = vmax.f32 %v2472, %v2473
    %v2475 = vrot.slane %v2474, 1
    %v2476 = vmax.f32 %v2474, %v2475
    %s2477 = sld [smem:[#allocation2]]
    %v2478 = vstv %s2477
    %vm2479 = vcmp.eq.s32.totalorder %v2402, %v2478
    %v2480 = vsel %vm2479, 1, 0
    %v2481 = vcvt.s32.f32 %v2480
    %v2482 = vmul.f32 %v2481, %v48
    %v2483 = vsel %vm342, %v2482, 0.0
    %v2484 = vrot.slane %v2483, 4
    %v2485 = vadd.f32 %v2483, %v2484
    %v2486 = vrot.slane %v2485, 2
    %v2487 = vadd.f32 %v2485, %v2486
    %v2488 = vrot.slane %v2487, 1
    %v2489 = vadd.f32 %v2487, %v2488
    %vm2490 = vcmp.ge.s32.totalorder %v2402, 22
    %vm2491 = vcmp.ge.s32.totalorder %v2403, 22
    %vm2492 = vcmp.ge.s32.totalorder %v2404, 22
    %vm2493 = vcmp.ge.s32.totalorder %v2405, 22
    %vm2494 = vcmp.ge.s32.totalorder %v2406, 22
    %vm2495 = vcmp.ge.s32.totalorder %v2407, 22
    %vm2496 = vcmp.ge.s32.totalorder %v2408, 22
    %vm2497 = vcmp.ge.s32.totalorder %v2409, 22
    %vm2498 = vcmp.ge.s32.totalorder %v2410, 22
    %vm2499 = vcmp.ge.s32.totalorder %v2411, 22
    %vm2500 = vcmp.lt.s32.totalorder %v2402, 35
    %vm2501 = vcmp.lt.s32.totalorder %v2403, 35
    %vm2502 = vcmp.lt.s32.totalorder %v2404, 35
    %vm2503 = vcmp.lt.s32.totalorder %v2405, 35
    %vm2504 = vcmp.lt.s32.totalorder %v2406, 35
    %vm2505 = vcmp.lt.s32.totalorder %v2407, 35
    %vm2506 = vcmp.lt.s32.totalorder %v2408, 35
    %vm2507 = vcmp.lt.s32.totalorder %v2409, 35
    %vm2508 = vcmp.lt.s32.totalorder %v2410, 35
    %vm2509 = vcmp.lt.s32.totalorder %v2411, 35
    %vm2510 = vmand %vm2490, %vm2500
    %vm2511 = vmand %vm2491, %vm2501
    %vm2512 = vmand %vm2492, %vm2502
    %vm2513 = vmand %vm2493, %vm2503
    %vm2514 = vmand %vm2494, %vm2504
    %vm2515 = vmand %vm2495, %vm2505
    %vm2516 = vmand %vm2496, %vm2506
    %vm2517 = vmand %vm2497, %vm2507
    %vm2518 = vmand %vm2498, %vm2508
    %vm2519 = vmand %vm2499, %vm2509
    %v2520 = vsel %vm2510, %v2391, -1e+30
    %v2521 = vsel %vm2511, %v2392, -1e+30
    %v2522 = vsel %vm2512, %v2393, -1e+30
    %v2523 = vsel %vm2513, %v2394, -1e+30
    %v2524 = vsel %vm2514, %v2395, -1e+30
    %v2525 = vsel %vm2515, %v2396, -1e+30
    %v2526 = vsel %vm2516, %v2397, -1e+30
    %v2527 = vsel %vm2517, %v2398, -1e+30
    %v2528 = vsel %vm2518, %v2399, -1e+30
    %v2529 = vsel %vm2519, %v2400, -1e+30
    %v2530 = vsel %vm342, %v2520, -inf
    %v2531 = vsel %vm342, %v2521, -inf
    %v2532 = vsel %vm342, %v2522, -inf
    %v2533 = vsel %vm342, %v2523, -inf
    %v2534 = vsel %vm342, %v2524, -inf
    %v2535 = vmax.f32 %v2530, %v2534
    %v2536 = vsel %vm342, %v2525, -inf
    %v2537 = vmax.f32 %v2531, %v2536
    %v2538 = vsel %vm342, %v2526, -inf
    %v2539 = vmax.f32 %v2532, %v2538
    %v2540 = vsel %vm342, %v2527, -inf
    %v2541 = vmax.f32 %v2533, %v2540
    %v2542 = vsel %vm342, %v2528, -inf
    %v2543 = vmax.f32 %v2535, %v2542
    %v2544 = vsel %vm342, %v2529, -inf
    %v2545 = vmax.f32 %v2537, %v2544
    %v2546 = vmax.f32 %v2543, %v2545
    %v2547 = vmax.f32 %v2539, %v2541
    %v2548 = vmax.f32 %v2546, %v2547
    %v2549 = vrot.slane %v2548, 4
    %v2550 = vmax.f32 %v2548, %v2549
    %v2551 = vrot.slane %v2550, 2
    %v2552 = vmax.f32 %v2550, %v2551
    %v2553 = vrot.slane %v2552, 1
    %v2554 = vmax.f32 %v2552, %v2553
    %s2555 = sld [smem:[#allocation2 + $0x1]]
    %v2556 = vstv %s2555
    %vm2557 = vcmp.eq.s32.totalorder %v2402, %v2556
    %v2558 = vsel %vm2557, 1, 0
    %v2559 = vcvt.s32.f32 %v2558
    %v2560 = vmul.f32 %v2559, %v48
    %v2561 = vsel %vm342, %v2560, 0.0
    %v2562 = vrot.slane %v2561, 4
    %v2563 = vadd.f32 %v2561, %v2562
    %v2564 = vrot.slane %v2563, 2
    %v2565 = vadd.f32 %v2563, %v2564
    %v2566 = vrot.slane %v2565, 1
    %v2567 = vadd.f32 %v2565, %v2566
    %vm2568 = vcmp.ge.s32.totalorder %v2402, 44
    %vm2569 = vcmp.ge.s32.totalorder %v2403, 44
    %vm2570 = vcmp.ge.s32.totalorder %v2404, 44
    %vm2571 = vcmp.ge.s32.totalorder %v2405, 44
    %vm2572 = vcmp.ge.s32.totalorder %v2406, 44
    %vm2573 = vcmp.ge.s32.totalorder %v2407, 44
    %vm2574 = vcmp.ge.s32.totalorder %v2408, 44
    %vm2575 = vcmp.ge.s32.totalorder %v2409, 44
    %vm2576 = vcmp.ge.s32.totalorder %v2410, 44
    %vm2577 = vcmp.ge.s32.totalorder %v2411, 44
    %vm2578 = vcmp.lt.s32.totalorder %v2402, 57
    %vm2579 = vcmp.lt.s32.totalorder %v2403, 57
    %vm2580 = vcmp.lt.s32.totalorder %v2404, 57
    %vm2581 = vcmp.lt.s32.totalorder %v2405, 57
    %vm2582 = vcmp.lt.s32.totalorder %v2406, 57
    %vm2583 = vcmp.lt.s32.totalorder %v2407, 57
    %vm2584 = vcmp.lt.s32.totalorder %v2408, 57
    %vm2585 = vcmp.lt.s32.totalorder %v2409, 57
    %vm2586 = vcmp.lt.s32.totalorder %v2410, 57
    %vm2587 = vcmp.lt.s32.totalorder %v2411, 57
    %vm2588 = vmand %vm2568, %vm2578
    %vm2589 = vmand %vm2569, %vm2579
    %vm2590 = vmand %vm2570, %vm2580
    %vm2591 = vmand %vm2571, %vm2581
    %vm2592 = vmand %vm2572, %vm2582
    %vm2593 = vmand %vm2573, %vm2583
    %vm2594 = vmand %vm2574, %vm2584
    %vm2595 = vmand %vm2575, %vm2585
    %vm2596 = vmand %vm2576, %vm2586
    %vm2597 = vmand %vm2577, %vm2587
    %v2598 = vsel %vm2588, %v2391, -1e+30
    %v2599 = vsel %vm2589, %v2392, -1e+30
    %v2600 = vsel %vm2590, %v2393, -1e+30
    %v2601 = vsel %vm2591, %v2394, -1e+30
    %v2602 = vsel %vm2592, %v2395, -1e+30
    %v2603 = vsel %vm2593, %v2396, -1e+30
    %v2604 = vsel %vm2594, %v2397, -1e+30
    %v2605 = vsel %vm2595, %v2398, -1e+30
    %v2606 = vsel %vm2596, %v2399, -1e+30
    %v2607 = vsel %vm2597, %v2400, -1e+30
    %v2608 = vsel %vm342, %v2598, -inf
    %v2609 = vsel %vm342, %v2599, -inf
    %v2610 = vsel %vm342, %v2600, -inf
    %v2611 = vsel %vm342, %v2601, -inf
    %v2612 = vsel %vm342, %v2602, -inf
    %v2613 = vmax.f32 %v2608, %v2612
    %v2614 = vsel %vm342, %v2603, -inf
    %v2615 = vmax.f32 %v2609, %v2614
    %v2616 = vsel %vm342, %v2604, -inf
    %v2617 = vmax.f32 %v2610, %v2616
    %v2618 = vsel %vm342, %v2605, -inf
    %v2619 = vmax.f32 %v2611, %v2618
    %v2620 = vsel %vm342, %v2606, -inf
    %v2621 = vmax.f32 %v2613, %v2620
    %v2622 = vsel %vm342, %v2607, -inf
    %v2623 = vmax.f32 %v2615, %v2622
    %v2624 = vmax.f32 %v2621, %v2623
    %v2625 = vmax.f32 %v2617, %v2619
    %v2626 = vmax.f32 %v2624, %v2625
    %v2627 = vrot.slane %v2626, 4
    %v2628 = vmax.f32 %v2626, %v2627
    %v2629 = vrot.slane %v2628, 2
    %v2630 = vmax.f32 %v2628, %v2629
    %v2631 = vrot.slane %v2630, 1
    %v2632 = vmax.f32 %v2630, %v2631
    %s2633 = sld [smem:[#allocation2 + $0x2]]
    %v2634 = vstv %s2633
    %vm2635 = vcmp.eq.s32.totalorder %v2402, %v2634
    %v2636 = vsel %vm2635, 1, 0
    %v2637 = vcvt.s32.f32 %v2636
    %v2638 = vmul.f32 %v2637, %v48
    %v2639 = vsel %vm342, %v2638, 0.0
    %v2640 = vrot.slane %v2639, 4
    %v2641 = vadd.f32 %v2639, %v2640
    %v2642 = vrot.slane %v2641, 2
    %v2643 = vadd.f32 %v2641, %v2642
    %v2644 = vrot.slane %v2643, 1
    %v2645 = vadd.f32 %v2643, %v2644
    %vm2646 = vcmp.ge.s32.totalorder %v2402, 66
    %vm2647 = vcmp.ge.s32.totalorder %v2403, 66
    %vm2648 = vcmp.ge.s32.totalorder %v2404, 66
    %vm2649 = vcmp.ge.s32.totalorder %v2405, 66
    %vm2650 = vcmp.ge.s32.totalorder %v2406, 66
    %vm2651 = vcmp.ge.s32.totalorder %v2407, 66
    %vm2652 = vcmp.ge.s32.totalorder %v2408, 66
    %vm2653 = vcmp.ge.s32.totalorder %v2409, 66
    %vm2654 = vcmp.ge.s32.totalorder %v2410, 66
    %vm2655 = vcmp.ge.s32.totalorder %v2411, 66
    %vm2656 = vcmp.lt.s32.totalorder %v2402, 79
    %vm2657 = vcmp.lt.s32.totalorder %v2403, 79
    %vm2658 = vcmp.lt.s32.totalorder %v2404, 79
    %vm2659 = vcmp.lt.s32.totalorder %v2405, 79
    %vm2660 = vcmp.lt.s32.totalorder %v2406, 79
    %vm2661 = vcmp.lt.s32.totalorder %v2407, 79
    %vm2662 = vcmp.lt.s32.totalorder %v2408, 79
    %vm2663 = vcmp.lt.s32.totalorder %v2409, 79
    %vm2664 = vcmp.lt.s32.totalorder %v2410, 79
    %vm2665 = vcmp.lt.s32.totalorder %v2411, 79
    %vm2666 = vmand %vm2646, %vm2656
    %vm2667 = vmand %vm2647, %vm2657
    %vm2668 = vmand %vm2648, %vm2658
    %vm2669 = vmand %vm2649, %vm2659
    %vm2670 = vmand %vm2650, %vm2660
    %vm2671 = vmand %vm2651, %vm2661
    %vm2672 = vmand %vm2652, %vm2662
    %vm2673 = vmand %vm2653, %vm2663
    %vm2674 = vmand %vm2654, %vm2664
    %vm2675 = vmand %vm2655, %vm2665
    %v2676 = vsel %vm2666, %v2391, -1e+30
    %v2677 = vsel %vm2667, %v2392, -1e+30
    %v2678 = vsel %vm2668, %v2393, -1e+30
    %v2679 = vsel %vm2669, %v2394, -1e+30
    %v2680 = vsel %vm2670, %v2395, -1e+30
    %v2681 = vsel %vm2671, %v2396, -1e+30
    %v2682 = vsel %vm2672, %v2397, -1e+30
    %v2683 = vsel %vm2673, %v2398, -1e+30
    %v2684 = vsel %vm2674, %v2399, -1e+30
    %v2685 = vsel %vm2675, %v2400, -1e+30
    %v2686 = vsel %vm342, %v2676, -inf
    %v2687 = vsel %vm342, %v2677, -inf
    %v2688 = vsel %vm342, %v2678, -inf
    %v2689 = vsel %vm342, %v2679, -inf
    %v2690 = vsel %vm342, %v2680, -inf
    %v2691 = vmax.f32 %v2686, %v2690
    %v2692 = vsel %vm342, %v2681, -inf
    %v2693 = vmax.f32 %v2687, %v2692
    %v2694 = vsel %vm342, %v2682, -inf
    %v2695 = vmax.f32 %v2688, %v2694
    %v2696 = vsel %vm342, %v2683, -inf
    %v2697 = vmax.f32 %v2689, %v2696
    %v2698 = vsel %vm342, %v2684, -inf
    %v2699 = vmax.f32 %v2691, %v2698
    %v2700 = vsel %vm342, %v2685, -inf
    %v2701 = vmax.f32 %v2693, %v2700
    %v2702 = vmax.f32 %v2699, %v2701
    %v2703 = vmax.f32 %v2695, %v2697
    %v2704 = vmax.f32 %v2702, %v2703
    %v2705 = vrot.slane %v2704, 4
    %v2706 = vmax.f32 %v2704, %v2705
    %v2707 = vrot.slane %v2706, 2
    %v2708 = vmax.f32 %v2706, %v2707
    %v2709 = vrot.slane %v2708, 1
    %v2710 = vmax.f32 %v2708, %v2709
    %s2711 = sld [smem:[#allocation2 + $0x3]]
    %v2712 = vstv %s2711
    %vm2713 = vcmp.eq.s32.totalorder %v2402, %v2712
    %v2714 = vsel %vm2713, 1, 0
    %v2715 = vcvt.s32.f32 %v2714
    %v2716 = vmul.f32 %v2715, %v48
    %v2717 = vsel %vm342, %v2716, 0.0
    %v2718 = vrot.slane %v2717, 4
    %v2719 = vadd.f32 %v2717, %v2718
    %v2720 = vrot.slane %v2719, 2
    %v2721 = vadd.f32 %v2719, %v2720
    %v2722 = vrot.slane %v2721, 1
    %v2723 = vadd.f32 %v2721, %v2722
    %v2724 = vsel %vm846, %v2476, %v2554
    %vm2725 = vcmask 1041408
    %v2726 = vsel %vm2725, %v2724, %v2632
    %vm2727 = vcmask 1042432
    %v2728 = vsel %vm2727, %v2726, %v2710
    %v2729 = vsel %vm846, %v2489, %v2567
    %v2730 = vsel %vm2725, %v2729, %v2645
    %v2731 = vsel %vm2727, %v2730, %v2723
    %v2732 = vlaneseq
    %v2733 = vshrl.u32 %v2732, 7
    %v2734 = vsub.s32 0, %v2733
    %v2735 = vrot.slane %v45, %v2734
    %v2737 = vsel %vm342, %v2728, 0
    %v2740 = vsel %vm342, %v49, 0
    %v2743 = vsel %vm342, %v50, 0
    %v2746 = vsel %vm342, %v51, 0
    %v2749 = vsel %vm342, %v52, 0
    %2751 = vmatprep.subr.mxu0 0.0
    %2752 = vmatpush1.xpose.msra.mxu0 %v2740
    %2753 = vmatprep.subr.mxu0 0.0
    %2754 = vmatpush1.xpose.msra.mxu0 %v2743
    %2755 = vmatprep.subr.mxu0 0.0
    %2756 = vmatpush1.xpose.msra.mxu0 %v2746
    %2757 = vmatprep.subr.mxu0 0.0
    %2758 = vmatpush1.xpose.msra.mxu0 %v2749
    %2759 = vmatprep.subr.mxu0 0.0
    %2760 = vmatpush1.xpose.msra.mxu0 0.0
    %2761 = vmatprep.subr.mxu0 0.0
    %2762 = vmatpush1.xpose.msra.mxu0 0.0
    %2763 = vmatprep.subr.mxu0 0.0
    %2764 = vmatpush1.xpose.msra.mxu0 0.0
    %2765 = vmatprep.subr.mxu0 0.0
    %2766 = vmatpush1.xpose.msra.mxu0 0.0
    %2767 = vmatprep.subr.mxu0 0.0
    %2768 = vmatpush1.xpose.msra.mxu0 0.0
    %2769 = vmatprep.subr.mxu0 0.0
    %2770 = vmatpush1.xpose.msra.mxu0 0.0
    %2771 = vmatprep.subr.mxu0 0.0
    %2772 = vmatpush1.xpose.msra.mxu0 0.0
    %2773 = vmatprep.subr.mxu0 0.0
    %2774 = vmatpush1.xpose.msra.mxu0 0.0
    %2775 = vmatprep.subr.mxu0 0.0
    %2776 = vmatpush1.xpose.msra.mxu0 0.0
    %2777 = vmatprep.subr.mxu0 0.0
    %2778 = vmatpush1.xpose.msra.mxu0 0.0
    %2779 = vmatprep.subr.mxu0 0.0
    %2780 = vmatpush1.xpose.msra.mxu0 0.0
    %2781 = vmatprep.subr.mxu0 0.0
    %2782 = vmatpush1.xpose.msra.mxu0 0.0
    %2783 = vmatprep.subr.mxu0 0.0
    %2784 = vmatpush1.xpose.msra.mxu0 0.0
    %2785 = vmatprep.subr.mxu0 0.0
    %2786 = vmatpush1.xpose.msra.mxu0 0.0
    %2787 = vmatprep.subr.mxu0 0.0
    %2788 = vmatpush1.xpose.msra.mxu0 0.0
    %2789 = vmatprep.subr.mxu0 0.0
    %2790 = vmatpush1.xpose.msra.mxu0 0.0
    %2791 = vmatprep.subr.mxu0 0.0
    %2792 = vmatpush1.xpose.msra.mxu0 0.0
    %2793 = vmatprep.subr.mxu0 0.0
    %2794 = vmatpush1.xpose.msra.mxu0 0.0
    %2795 = vmatprep.subr.mxu0 0.0
    %2796 = vmatpush1.xpose.msra.mxu0 0.0
    %2797 = vmatprep.subr.mxu0 0.0
    %2798 = vmatpush1.xpose.msra.mxu0 0.0
    %2799 = vmatprep.subr.mxu0 0.0
    %2800 = vmatpush1.xpose.msra.mxu0 0.0
    %2801 = vmatprep.subr.mxu0 0.0
    %2802 = vmatpush1.xpose.msra.mxu0 0.0
    %2803 = vmatprep.subr.mxu0 0.0
    %2804 = vmatpush1.xpose.msra.mxu0 0.0
    %2805 = vmatprep.subr.mxu0 0.0
    %2806 = vmatpush1.xpose.msra.mxu0 0.0
    %2807 = vmatprep.subr.mxu0 0.0
    %2808 = vmatpush1.xpose.msra.mxu0 0.0
    %2809 = vmatprep.subr.mxu0 0.0
    %2810 = vmatpush1.xpose.msra.mxu0 0.0
    %2811 = vmatprep.subr.mxu0 0.0
    %2812 = vmatpush1.xpose.msra.mxu0 0.0
    %2813 = vmatprep.subr.mxu0 0.0
    %2814 = vmatpush1.xpose.msra.mxu0 0.0
    %2815 = vmatprep.mubr.f32.mxu0 0.0
    %2816 = vmatmul.mubr.f32.gmra.mrb[0].mxu0 %v2737
    %v2817 = vpop.f32.mrb[0].mxu0
    %v2818 = vadd.f32 %v2735, %v2817
    %v2819 = vpop.f32.mrb[0].mxu0
    %2820 = vdwg.mxu0
    %v2821 = vsub.f32 %v2731, %v2818
    %v2822 = vmul.f32 %v2821, %v2821
    %vm2823 = vcmask 257024
    %v2824 = vsel %vm2823, %v2822, 0.0
    %2825 = vadd.xlane.f32.xlu0 %v2824
    %v2826 = vpop.xlane.xlu0 %2825
    %v2827 = vrot.slane %v2826, 4
    %v2828 = vadd.f32 %v2826, %v2827
    %v2829 = vrot.slane %v2828, 2
    %v2830 = vadd.f32 %v2828, %v2829
    %v2831 = vrot.slane %v2830, 1
    %v2832 = vadd.f32 %v2830, %v2831
    %s2833 = vtos %v2832
    %s2834 = smul.f32 %s2833, 0.5
    %v2835 = vrcp.pop 64.0
    %s2836 = vtos %v2835
    %s2837 = smul.f32 %s2834, %s2836
    %s2838 = sadd.f32 %s886, %s2837
    %s2839 = scalar_lea.smem [#allocation7], 0
    %2840 = sst [smem:[%s2839]] %s2838
    // Predicated region
    $region34: #{dr_cnn_forward.1} parent=1 // pred_check
      _
    $region35: #{dr_cnn_forward.1} parent=1 // pred_check_branch
      %2842 = sbr.rel (0) target = $region37
    $region36: #{dr_cnn_forward.1} parent=1 // pred_region
      %s2844 = ssub.s32 32, 32
      %2845 = vsyncadd [#allocation3], %s2844
      %s2847 = sshll.u32 [#allocation6], 4
      %s2848 = int_to_ptr.vmem [resolvable:$true] %s2847
      %2850 = dma.vmem_to_hbm [thread:$0]  %s2848, 32, %s7, [#allocation3]
    $region37: #{dr_cnn_forward.1} parent=1 // pred_fallthru
      _
    // Predicated region
    $region38: #{dr_cnn_forward.1} parent=1 // pred_check
      _
    $region39: #{dr_cnn_forward.1} parent=1 // pred_check_branch
      %2852 = sbr.rel (0) target = $region41
    $region40: #{dr_cnn_forward.1} parent=1 // pred_region
      %s2854 = ssub.s32 16, 16
      %2855 = vsyncadd [#allocation4], %s2854
      %2858 = dma.smem_to_hbm [#allocation7], 16, %s8, [#allocation4]
    $region41: #{dr_cnn_forward.1} parent=1 // pred_fallthru
      _
    // Predicated region
    $region42: #{dr_cnn_forward.1} parent=1 // pred_check
      _
    $region43: #{dr_cnn_forward.1} parent=1 // pred_check_branch
      %2860 = sbr.rel (0) target = $region45
    $region44: #{dr_cnn_forward.1} parent=1 // pred_region
      %2861 = dma.done [#allocation3], 32
    $region45: #{dr_cnn_forward.1} parent=1 // pred_fallthru
      _
    // Predicated region
    $region46: #{dr_cnn_forward.1} parent=1 // pred_check
      _
    $region47: #{dr_cnn_forward.1} parent=1 // pred_check_branch
      %2863 = sbr.rel (0) target = $region49
    $region48: #{dr_cnn_forward.1} parent=1 // pred_region
      %2864 = dma.done [#allocation4], 16
    $region49: #{dr_cnn_forward.1} parent=1 // pred_fallthru
      _
    %2865 = sfence
    %2866 = vsyncpa [#allocation3], 1
    %2867 = vsyncpa [#allocation4], 1
    %2868 = vsyncpa [#allocation5], 1

</llo_original>
